<compile_context>
chip_gen: v6e
topology: v6e:2x2x1
jax: 0.10.0
libtpu: 0.0.40
codegen_flags: <defaults>
</compile_context>

<pallas_src>
import jax
import jax.numpy as jnp
from jax import lax
from jax.experimental import pallas as pl
from jax.experimental.pallas import tpu as pltpu

EMB_DIM    = 64      # emb_dim == input_size (d_model)
QUES       = 32      # C.QUES (small synthetic vocabulary)
D_STATE    = 16
NUM_LAYERS = 1
BATCH, SEQ = 2, 8
LN_EPS     = 1e-12


# ----------------------------- in-kernel helpers -----------------------------

def _layernorm(x, g, b):
    mu = jnp.mean(x, axis=-1, keepdims=True)
    var = jnp.mean(jnp.square(x - mu), axis=-1, keepdims=True)
    return (x - mu) * lax.rsqrt(var + LN_EPS) * g + b


def _gelu(x):
    # TODO(synk): torch nn.GELU() is exact erf-GELU; tanh approximation used here.
    return jax.nn.gelu(x, approximate=True)


# ------------------------------- fused kernel --------------------------------

def mamba_cont_kernel(
    a_mix_ref,                                   # SMEM (3,)  mixing scalars a1,a2,a3
    x2_ref,                                      # (L, 2B, D) stacked [qa_emb ; q_diff_emb], time-major
    gwx_ref, gwh_ref, gb_ref,                    # GRU fused weights (D,3D),(D,3D),(1,3D)
    bin_ref, cout_ref, a_ref, dskip_ref,         # SSM (D,S),(S,D),(1,S),(1,D)
    ln1_g_ref, ln1_b_ref,                        # MambaLayer LayerNorm (1,D)
    w1_ref, b1_ref, w2_ref, b2_ref,              # FFN (D,4D),(1,4D),(4D,D),(1,D)
    fln_g_ref, fln_b_ref,                        # FFN LayerNorm (1,D)
    wmf_ref, bmf_ref,                            # folded mix.linear @ fc  (D,Q),(1,Q)
    o_ref,                                       # out (L*B, Q)
    sfwd_ref, sbwd_ref, gout_ref,                # VMEM scratch
):
    L, B2, D = x2_ref.shape
    B = B2 // 2
    S = bin_ref.shape[1]
    T2 = L * B2          # tokens across both streams
    T = L * B            # tokens in one stream

    x2 = x2_ref[...].astype(jnp.float32)                       # (L, 2B, D)
    x2f = x2.reshape(T2, D)

    # ======== ExBimamba stand-in: bidirectional diagonal SSM ========
    # Hoisted input projection (one batched matmul) + skip term (one VPU mul).
    u = jnp.dot(x2f, bin_ref[...],
                preferred_element_type=jnp.float32).reshape(L, B2, S)
    skip = dskip_ref[...] * x2                                  # (L, 2B, D)
    a_diag = a_ref[...]                                         # (1, S)

    # Forward scan: pure VPU, fully unrolled (L is a static compile-time constant).
    s = jnp.zeros((B2, S), jnp.float32)
    for t in range(L):
        s = a_diag * s + u[t]
        sfwd_ref[t] = s
    # Backward scan.
    s = jnp.zeros((B2, S), jnp.float32)
    for i in range(L):
        t = L - 1 - i
        s = a_diag * s + u[t]
        sbwd_ref[t] = s

    # Hoisted output projection: (fwd + bwd states) @ C in one batched matmul.
    states = (sfwd_ref[...] + sbwd_ref[...]).reshape(T2, S)
    y = (jnp.dot(states, cout_ref[...],
                 preferred_element_type=jnp.float32).reshape(L, B2, D) + skip)

    # ======== MambaLayer tail (num_layers == 1 branch): LN(dropout(out)) ========
    h = _layernorm(y.reshape(T2, D), ln1_g_ref[...], ln1_b_ref[...])

    # Shared FeedForward applied to both streams in one slab.
    hh = jnp.dot(h, w1_ref[...], preferred_element_type=jnp.float32) + b1_ref[...]
    hh = _gelu(hh)
    hh = jnp.dot(hh, w2_ref[...], preferred_element_type=jnp.float32) + b2_ref[...]
    ff = _layernorm(hh + h, fln_g_ref[...], fln_b_ref[...])     # (T2, D)

    ff3 = ff.reshape(L, B2, D)
    hidd = ff3[:, :B, :]                                        # qa-stream  (L, B, D)
    diff = ff3[:, B:, :]                                        # diff-stream (L, B, D)

    # ======== AdptiveGRU stand-in (standard GRU) on qa_emb ========
    xq = x2[:, :B, :]                                           # (L, B, D)
    xproj = (jnp.dot(xq.reshape(T, D), gwx_ref[...],
                     preferred_element_type=jnp.float32).reshape(L, B, 3 * D)
             + gb_ref[...])                                     # hoisted x-projections + biases

    h_state = jnp.zeros((B, D), jnp.float32)
    for t in range(L):                                          # fully unrolled, 1 matmul/step
        hproj = jnp.dot(h_state, gwh_ref[...], preferred_element_type=jnp.float32)  # (B, 3D)
        xp = xproj[t]                                           # (B, 3D)
        r = jax.nn.sigmoid(xp[:, :D] + hproj[:, :D])
        z = jax.nn.sigmoid(xp[:, D:2 * D] + hproj[:, D:2 * D])
        n = jnp.tanh(xp[:, 2 * D:] + r * hproj[:, 2 * D:])
        h_state = (1.0 - z) * n + z * h_state
        gout_ref[t] = h_state

    gru = gout_ref[...]                                         # (L, B, D)

    # ======== MixingLayer + fc (folded linear) ========
    a1 = a_mix_ref[0]
    a2 = a_mix_ref[1]
    a3 = a_mix_ref[2]
    z0 = a1 * hidd + a2 * diff + a3 * gru                       # (L, B, D)
    res = (jnp.dot(z0.reshape(T, D), wmf_ref[...],
                   preferred_element_type=jnp.float32) + bmf_ref[...])
    o_ref[...] = res.astype(o_ref.dtype)                        # (L*B, Q)


# ------------------------------ parameter setup ------------------------------

def init_params(key):
    D, S, I = EMB_DIM, D_STATE, 4 * EMB_DIM
    ks = iter(jax.random.split(key, 16))

    def dense(fan_in, shape):
        return jax.random.normal(next(ks), shape, jnp.float32) / jnp.sqrt(float(fan_in))

    return {
        'q_emb':      dense(D, (QUES + 1, D)),
        'qa_emb':     dense(D, (2 * QUES + 1, D)),
        # TODO(synk): deterministic stand-in for the question-difficulty JSON table.
        'diff_table': jax.random.uniform(next(ks), (QUES + 1,), jnp.float32),
        'ln1_g': jnp.ones((1, D), jnp.float32), 'ln1_b': jnp.zeros((1, D), jnp.float32),
        'ffn_w1': dense(D, (D, I)), 'ffn_b1': jnp.zeros((1, I), jnp.float32),
        'ffn_w2': dense(I, (I, D)), 'ffn_b2': jnp.zeros((1, D), jnp.float32),
        'ffn_ln_g': jnp.ones((1, D), jnp.float32), 'ffn_ln_b': jnp.zeros((1, D), jnp.float32),
        'a_mix': jnp.array([0.33, 0.33, 0.33], jnp.float32),
        'mix_w': dense(D, (D, D)), 'mix_b': jnp.zeros((1, D), jnp.float32),
        'fc_w': dense(D, (D, QUES)), 'fc_b': jnp.zeros((1, QUES), jnp.float32),
        'gru': {   # fused [r|z|n] weight layout
            'wx': dense(D, (D, 3 * D)),
            'wh': dense(D, (D, 3 * D)),
            'b':  jnp.zeros((1, 3 * D), jnp.float32),
        },
        'ssm': {
            'bin': dense(D, (D, S)), 'cout': dense(S, (S, D)),
            'a': jnp.linspace(0.5, 0.95, S, dtype=jnp.float32).reshape(1, S),
            'dskip': jnp.ones((1, D), jnp.float32),
        },
    }


# ---------------------------------- forward ----------------------------------

def mamba_cont_forward(p, qa, q):
    Bq, Lq = q.shape
    D = EMB_DIM

    # Embedding / difficulty gathers stay in XLA (tiny data-dependent gathers).
    q_emb = p['q_emb'][q]                                 # (B, L, D)
    qa_emb = p['qa_emb'][qa]                              # (B, L, D)

    # NOTE: the torch forward also computes fusion_fc -> dropout -> LayerNorm into
    # `item_emb`, which is never used downstream; that dead branch is removed here.

    # Rasch difficulty modulation: (1 - diff) * q_emb
    q_diff = p['diff_table'][q][..., None]                # (B, L, 1)
    q_diff_emb = (1.0 - q_diff) * q_emb

    # Stack both streams on the batch axis, time-major: (L, 2B, D)
    qa_tm = jnp.transpose(qa_emb, (1, 0, 2))
    diff_tm = jnp.transpose(q_diff_emb, (1, 0, 2))
    x2_tm = jnp.concatenate([qa_tm, diff_tm], axis=1)

    # MixingLayer.linear and fc are adjacent Linears with no nonlinearity between
    # them in the reference module -> fold into one weight/bias.
    wmf = jnp.dot(p['mix_w'], p['fc_w'])                  # (D, Q)
    bmf = jnp.dot(p['mix_b'], p['fc_w']) + p['fc_b']      # (1, Q)

    gp, sp = p['gru'], p['ssm']

    vmem = pl.BlockSpec(memory_space=pltpu.MemorySpace.VMEM)
    smem = pl.BlockSpec(memory_space=pltpu.MemorySpace.SMEM)

    # NUM_LAYERS == 1 in this configuration; the single fused call covers the
    # whole post-embedding forward (GRU + both SSM streams + LN/FFN + mix + fc).
    res = pl.pallas_call(
        mamba_cont_kernel,
        out_shape=jax.ShapeDtypeStruct((Lq * Bq, QUES), jnp.float32),
        in_specs=[smem] + [vmem] * 18,
        out_specs=vmem,
        scratch_shapes=[
            pltpu.VMEM((Lq, 2 * Bq, D_STATE), jnp.float32),   # fwd SSM states
            pltpu.VMEM((Lq, 2 * Bq, D_STATE), jnp.float32),   # bwd SSM states
            pltpu.VMEM((Lq, Bq, D), jnp.float32),             # GRU outputs
        ],
    )(p['a_mix'], x2_tm,
      gp['wx'], gp['wh'], gp['b'],
      sp['bin'], sp['cout'], sp['a'], sp['dskip'],
      p['ln1_g'], p['ln1_b'],
      p['ffn_w1'], p['ffn_b1'], p['ffn_w2'], p['ffn_b2'],
      p['ffn_ln_g'], p['ffn_ln_b'],
      wmf, bmf)

    return jnp.transpose(res.reshape(Lq, Bq, QUES), (1, 0, 2))   # (B, L, Q)


if __name__ == "__main__":
    key = jax.random.PRNGKey(0)
    kp, kq, kqa = jax.random.split(key, 3)
    params = init_params(kp)
    q = jax.random.randint(kq, (BATCH, SEQ), 0, QUES + 1)
    qa = jax.random.randint(kqa, (BATCH, SEQ), 0, 2 * QUES + 1)

    res = mamba_cont_forward(params, qa, q)
    res = jax.block_until_ready(res)
    assert res.shape == (BATCH, SEQ, QUES)
    assert bool(jnp.all(jnp.isfinite(res)))
    print("KERNEL_OK")
</pallas_src>

<mosaic_0001>
module attributes {stable_mosaic.version = 11 : i64} {
  func.func @mamba_cont_kernel(%arg0: memref<3xf32, #tpu.memory_space<smem>>, %arg1: memref<8x4x64xf32, #tpu.memory_space<vmem>>, %arg2: memref<64x192xf32, #tpu.memory_space<vmem>>, %arg3: memref<64x192xf32, #tpu.memory_space<vmem>>, %arg4: memref<1x192xf32, #tpu.memory_space<vmem>>, %arg5: memref<64x16xf32, #tpu.memory_space<vmem>>, %arg6: memref<16x64xf32, #tpu.memory_space<vmem>>, %arg7: memref<1x16xf32, #tpu.memory_space<vmem>>, %arg8: memref<1x64xf32, #tpu.memory_space<vmem>>, %arg9: memref<1x64xf32, #tpu.memory_space<vmem>>, %arg10: memref<1x64xf32, #tpu.memory_space<vmem>>, %arg11: memref<64x256xf32, #tpu.memory_space<vmem>>, %arg12: memref<1x256xf32, #tpu.memory_space<vmem>>, %arg13: memref<256x64xf32, #tpu.memory_space<vmem>>, %arg14: memref<1x64xf32, #tpu.memory_space<vmem>>, %arg15: memref<1x64xf32, #tpu.memory_space<vmem>>, %arg16: memref<1x64xf32, #tpu.memory_space<vmem>>, %arg17: memref<64x32xf32, #tpu.memory_space<vmem>>, %arg18: memref<1x32xf32, #tpu.memory_space<vmem>>, %arg19: memref<16x32xf32, #tpu.memory_space<vmem>>, %arg20: memref<8x4x16xf32, #tpu.memory_space<vmem>>, %arg21: memref<8x4x16xf32, #tpu.memory_space<vmem>>, %arg22: memref<8x2x64xf32, #tpu.memory_space<vmem>>) attributes {dimension_semantics = [], scalar_prefetch = 0 : i64, scratch_operands = 3 : i64, tpu.core_type = #tpu.core_type<tc>} {
    %c0 = arith.constant 0 : index
    %c0_0 = arith.constant 0 : index
    %c0_1 = arith.constant 0 : index
    %0 = vector.load %arg1[%c0, %c0_0, %c0_1] : memref<8x4x64xf32, #tpu.memory_space<vmem>>, vector<8x4x64xf32>
    %1 = vector.shape_cast %0 : vector<8x4x64xf32> to vector<32x64xf32>
    %c0_2 = arith.constant 0 : index
    %c0_3 = arith.constant 0 : index
    %2 = vector.load %arg5[%c0_2, %c0_3] : memref<64x16xf32, #tpu.memory_space<vmem>>, vector<64x16xf32>
    %cst = arith.constant dense<0.000000e+00> : vector<32x16xf32>
    %3 = tpu.matmul %1, %2, %cst {dimension_numbers = #tpu.dot_dimension_numbers<[1], [0], [0], [1], [0, 0, 1, 1], [], []>} : vector<32x64xf32>, vector<64x16xf32>, vector<32x16xf32> -> vector<32x16xf32>
    %4 = vector.shape_cast %3 : vector<32x16xf32> to vector<8x4x16xf32>
    %c0_4 = arith.constant 0 : index
    %c0_5 = arith.constant 0 : index
    %5 = vector.load %arg8[%c0_4, %c0_5] : memref<1x64xf32, #tpu.memory_space<vmem>>, vector<1x64xf32>
    %6 = vector.shape_cast %5 : vector<1x64xf32> to vector<1x1x64xf32>
    %7 = vector.broadcast %6 : vector<1x1x64xf32> to vector<8x4x64xf32>
    %8 = arith.mulf %7, %0 : vector<8x4x64xf32>
    %c0_6 = arith.constant 0 : index
    %c0_7 = arith.constant 0 : index
    %9 = vector.load %arg7[%c0_6, %c0_7] : memref<1x16xf32, #tpu.memory_space<vmem>>, vector<1x16xf32>
    %cst_8 = arith.constant 0.000000e+00 : f32
    %10 = vector.broadcast %cst_8 : f32 to vector<4x16xf32>
    %11 = vector.broadcast %9 : vector<1x16xf32> to vector<4x16xf32>
    %12 = arith.mulf %11, %10 : vector<4x16xf32>
    %13 = vector.extract_strided_slice %4 {offsets = [0, 0, 0], sizes = [1, 4, 16], strides = [1, 1, 1]} : vector<8x4x16xf32> to vector<1x4x16xf32>
    %14 = vector.shape_cast %13 : vector<1x4x16xf32> to vector<4x16xf32>
    %15 = arith.addf %12, %14 : vector<4x16xf32>
    %c0_9 = arith.constant 0 : index
    %c0_10 = arith.constant 0 : index
    %c0_11 = arith.constant 0 : index
    %16 = vector.load %arg20[%c0_9, %c0_10, %c0_11] : memref<8x4x16xf32, #tpu.memory_space<vmem>>, vector<1x4x16xf32>
    %17 = vector.shape_cast %16 : vector<1x4x16xf32> to vector<4x16xf32>
    %18 = vector.shape_cast %15 : vector<4x16xf32> to vector<1x4x16xf32>
    tpu.vector_store %arg20[%c0_9, %c0_10, %c0_11], %18 {strides = array<i32>} : memref<8x4x16xf32, #tpu.memory_space<vmem>>, vector<1x4x16xf32>,
    %19 = vector.broadcast %9 : vector<1x16xf32> to vector<4x16xf32>
    %20 = arith.mulf %19, %15 : vector<4x16xf32>
    %21 = vector.extract_strided_slice %4 {offsets = [1, 0, 0], sizes = [1, 4, 16], strides = [1, 1, 1]} : vector<8x4x16xf32> to vector<1x4x16xf32>
    %22 = vector.shape_cast %21 : vector<1x4x16xf32> to vector<4x16xf32>
    %23 = arith.addf %20, %22 : vector<4x16xf32>
    %c1 = arith.constant 1 : index
    %c0_12 = arith.constant 0 : index
    %c0_13 = arith.constant 0 : index
    %24 = vector.load %arg20[%c1, %c0_12, %c0_13] : memref<8x4x16xf32, #tpu.memory_space<vmem>>, vector<1x4x16xf32>
    %25 = vector.shape_cast %24 : vector<1x4x16xf32> to vector<4x16xf32>
    %26 = vector.shape_cast %23 : vector<4x16xf32> to vector<1x4x16xf32>
    tpu.vector_store %arg20[%c1, %c0_12, %c0_13], %26 {strides = array<i32>} : memref<8x4x16xf32, #tpu.memory_space<vmem>>, vector<1x4x16xf32>,
    %27 = vector.broadcast %9 : vector<1x16xf32> to vector<4x16xf32>
    %28 = arith.mulf %27, %23 : vector<4x16xf32>
    %29 = vector.extract_strided_slice %4 {offsets = [2, 0, 0], sizes = [1, 4, 16], strides = [1, 1, 1]} : vector<8x4x16xf32> to vector<1x4x16xf32>
    %30 = vector.shape_cast %29 : vector<1x4x16xf32> to vector<4x16xf32>
    %31 = arith.addf %28, %30 : vector<4x16xf32>
    %c2 = arith.constant 2 : index
    %c0_14 = arith.constant 0 : index
    %c0_15 = arith.constant 0 : index
    %32 = vector.load %arg20[%c2, %c0_14, %c0_15] : memref<8x4x16xf32, #tpu.memory_space<vmem>>, vector<1x4x16xf32>
    %33 = vector.shape_cast %32 : vector<1x4x16xf32> to vector<4x16xf32>
    %34 = vector.shape_cast %31 : vector<4x16xf32> to vector<1x4x16xf32>
    tpu.vector_store %arg20[%c2, %c0_14, %c0_15], %34 {strides = array<i32>} : memref<8x4x16xf32, #tpu.memory_space<vmem>>, vector<1x4x16xf32>,
    %35 = vector.broadcast %9 : vector<1x16xf32> to vector<4x16xf32>
    %36 = arith.mulf %35, %31 : vector<4x16xf32>
    %37 = vector.extract_strided_slice %4 {offsets = [3, 0, 0], sizes = [1, 4, 16], strides = [1, 1, 1]} : vector<8x4x16xf32> to vector<1x4x16xf32>
    %38 = vector.shape_cast %37 : vector<1x4x16xf32> to vector<4x16xf32>
    %39 = arith.addf %36, %38 : vector<4x16xf32>
    %c3 = arith.constant 3 : index
    %c0_16 = arith.constant 0 : index
    %c0_17 = arith.constant 0 : index
    %40 = vector.load %arg20[%c3, %c0_16, %c0_17] : memref<8x4x16xf32, #tpu.memory_space<vmem>>, vector<1x4x16xf32>
    %41 = vector.shape_cast %40 : vector<1x4x16xf32> to vector<4x16xf32>
    %42 = vector.shape_cast %39 : vector<4x16xf32> to vector<1x4x16xf32>
    tpu.vector_store %arg20[%c3, %c0_16, %c0_17], %42 {strides = array<i32>} : memref<8x4x16xf32, #tpu.memory_space<vmem>>, vector<1x4x16xf32>,
    %43 = vector.broadcast %9 : vector<1x16xf32> to vector<4x16xf32>
    %44 = arith.mulf %43, %39 : vector<4x16xf32>
    %45 = vector.extract_strided_slice %4 {offsets = [4, 0, 0], sizes = [1, 4, 16], strides = [1, 1, 1]} : vector<8x4x16xf32> to vector<1x4x16xf32>
    %46 = vector.shape_cast %45 : vector<1x4x16xf32> to vector<4x16xf32>
    %47 = arith.addf %44, %46 : vector<4x16xf32>
    %c4 = arith.constant 4 : index
    %c0_18 = arith.constant 0 : index
    %c0_19 = arith.constant 0 : index
    %48 = vector.load %arg20[%c4, %c0_18, %c0_19] : memref<8x4x16xf32, #tpu.memory_space<vmem>>, vector<1x4x16xf32>
    %49 = vector.shape_cast %48 : vector<1x4x16xf32> to vector<4x16xf32>
    %50 = vector.shape_cast %47 : vector<4x16xf32> to vector<1x4x16xf32>
    tpu.vector_store %arg20[%c4, %c0_18, %c0_19], %50 {strides = array<i32>} : memref<8x4x16xf32, #tpu.memory_space<vmem>>, vector<1x4x16xf32>,
    %51 = vector.broadcast %9 : vector<1x16xf32> to vector<4x16xf32>
    %52 = arith.mulf %51, %47 : vector<4x16xf32>
    %53 = vector.extract_strided_slice %4 {offsets = [5, 0, 0], sizes = [1, 4, 16], strides = [1, 1, 1]} : vector<8x4x16xf32> to vector<1x4x16xf32>
    %54 = vector.shape_cast %53 : vector<1x4x16xf32> to vector<4x16xf32>
    %55 = arith.addf %52, %54 : vector<4x16xf32>
    %c5 = arith.constant 5 : index
    %c0_20 = arith.constant 0 : index
    %c0_21 = arith.constant 0 : index
    %56 = vector.load %arg20[%c5, %c0_20, %c0_21] : memref<8x4x16xf32, #tpu.memory_space<vmem>>, vector<1x4x16xf32>
    %57 = vector.shape_cast %56 : vector<1x4x16xf32> to vector<4x16xf32>
    %58 = vector.shape_cast %55 : vector<4x16xf32> to vector<1x4x16xf32>
    tpu.vector_store %arg20[%c5, %c0_20, %c0_21], %58 {strides = array<i32>} : memref<8x4x16xf32, #tpu.memory_space<vmem>>, vector<1x4x16xf32>,
    %59 = vector.broadcast %9 : vector<1x16xf32> to vector<4x16xf32>
    %60 = arith.mulf %59, %55 : vector<4x16xf32>
    %61 = vector.extract_strided_slice %4 {offsets = [6, 0, 0], sizes = [1, 4, 16], strides = [1, 1, 1]} : vector<8x4x16xf32> to vector<1x4x16xf32>
    %62 = vector.shape_cast %61 : vector<1x4x16xf32> to vector<4x16xf32>
    %63 = arith.addf %60, %62 : vector<4x16xf32>
    %c6 = arith.constant 6 : index
    %c0_22 = arith.constant 0 : index
    %c0_23 = arith.constant 0 : index
    %64 = vector.load %arg20[%c6, %c0_22, %c0_23] : memref<8x4x16xf32, #tpu.memory_space<vmem>>, vector<1x4x16xf32>
    %65 = vector.shape_cast %64 : vector<1x4x16xf32> to vector<4x16xf32>
    %66 = vector.shape_cast %63 : vector<4x16xf32> to vector<1x4x16xf32>
    tpu.vector_store %arg20[%c6, %c0_22, %c0_23], %66 {strides = array<i32>} : memref<8x4x16xf32, #tpu.memory_space<vmem>>, vector<1x4x16xf32>,
    %67 = vector.broadcast %9 : vector<1x16xf32> to vector<4x16xf32>
    %68 = arith.mulf %67, %63 : vector<4x16xf32>
    %69 = vector.extract_strided_slice %4 {offsets = [7, 0, 0], sizes = [1, 4, 16], strides = [1, 1, 1]} : vector<8x4x16xf32> to vector<1x4x16xf32>
    %70 = vector.shape_cast %69 : vector<1x4x16xf32> to vector<4x16xf32>
    %71 = arith.addf %68, %70 : vector<4x16xf32>
    %c7 = arith.constant 7 : index
    %c0_24 = arith.constant 0 : index
    %c0_25 = arith.constant 0 : index
    %72 = vector.load %arg20[%c7, %c0_24, %c0_25] : memref<8x4x16xf32, #tpu.memory_space<vmem>>, vector<1x4x16xf32>
    %73 = vector.shape_cast %72 : vector<1x4x16xf32> to vector<4x16xf32>
    %74 = vector.shape_cast %71 : vector<4x16xf32> to vector<1x4x16xf32>
    tpu.vector_store %arg20[%c7, %c0_24, %c0_25], %74 {strides = array<i32>} : memref<8x4x16xf32, #tpu.memory_space<vmem>>, vector<1x4x16xf32>,
    %cst_26 = arith.constant 0.000000e+00 : f32
    %75 = vector.broadcast %cst_26 : f32 to vector<4x16xf32>
    %76 = vector.broadcast %9 : vector<1x16xf32> to vector<4x16xf32>
    %77 = arith.mulf %76, %75 : vector<4x16xf32>
    %78 = vector.extract_strided_slice %4 {offsets = [7, 0, 0], sizes = [1, 4, 16], strides = [1, 1, 1]} : vector<8x4x16xf32> to vector<1x4x16xf32>
    %79 = vector.shape_cast %78 : vector<1x4x16xf32> to vector<4x16xf32>
    %80 = arith.addf %77, %79 : vector<4x16xf32>
    %c7_27 = arith.constant 7 : index
    %c0_28 = arith.constant 0 : index
    %c0_29 = arith.constant 0 : index
    %81 = vector.load %arg21[%c7_27, %c0_28, %c0_29] : memref<8x4x16xf32, #tpu.memory_space<vmem>>, vector<1x4x16xf32>
    %82 = vector.shape_cast %81 : vector<1x4x16xf32> to vector<4x16xf32>
    %83 = vector.shape_cast %80 : vector<4x16xf32> to vector<1x4x16xf32>
    tpu.vector_store %arg21[%c7_27, %c0_28, %c0_29], %83 {strides = array<i32>} : memref<8x4x16xf32, #tpu.memory_space<vmem>>, vector<1x4x16xf32>,
    %84 = vector.broadcast %9 : vector<1x16xf32> to vector<4x16xf32>
    %85 = arith.mulf %84, %80 : vector<4x16xf32>
    %86 = vector.extract_strided_slice %4 {offsets = [6, 0, 0], sizes = [1, 4, 16], strides = [1, 1, 1]} : vector<8x4x16xf32> to vector<1x4x16xf32>
    %87 = vector.shape_cast %86 : vector<1x4x16xf32> to vector<4x16xf32>
    %88 = arith.addf %85, %87 : vector<4x16xf32>
    %c6_30 = arith.constant 6 : index
    %c0_31 = arith.constant 0 : index
    %c0_32 = arith.constant 0 : index
    %89 = vector.load %arg21[%c6_30, %c0_31, %c0_32] : memref<8x4x16xf32, #tpu.memory_space<vmem>>, vector<1x4x16xf32>
    %90 = vector.shape_cast %89 : vector<1x4x16xf32> to vector<4x16xf32>
    %91 = vector.shape_cast %88 : vector<4x16xf32> to vector<1x4x16xf32>
    tpu.vector_store %arg21[%c6_30, %c0_31, %c0_32], %91 {strides = array<i32>} : memref<8x4x16xf32, #tpu.memory_space<vmem>>, vector<1x4x16xf32>,
    %92 = vector.broadcast %9 : vector<1x16xf32> to vector<4x16xf32>
    %93 = arith.mulf %92, %88 : vector<4x16xf32>
    %94 = vector.extract_strided_slice %4 {offsets = [5, 0, 0], sizes = [1, 4, 16], strides = [1, 1, 1]} : vector<8x4x16xf32> to vector<1x4x16xf32>
    %95 = vector.shape_cast %94 : vector<1x4x16xf32> to vector<4x16xf32>
    %96 = arith.addf %93, %95 : vector<4x16xf32>
    %c5_33 = arith.constant 5 : index
    %c0_34 = arith.constant 0 : index
    %c0_35 = arith.constant 0 : index
    %97 = vector.load %arg21[%c5_33, %c0_34, %c0_35] : memref<8x4x16xf32, #tpu.memory_space<vmem>>, vector<1x4x16xf32>
    %98 = vector.shape_cast %97 : vector<1x4x16xf32> to vector<4x16xf32>
    %99 = vector.shape_cast %96 : vector<4x16xf32> to vector<1x4x16xf32>
    tpu.vector_store %arg21[%c5_33, %c0_34, %c0_35], %99 {strides = array<i32>} : memref<8x4x16xf32, #tpu.memory_space<vmem>>, vector<1x4x16xf32>,
    %100 = vector.broadcast %9 : vector<1x16xf32> to vector<4x16xf32>
    %101 = arith.mulf %100, %96 : vector<4x16xf32>
    %102 = vector.extract_strided_slice %4 {offsets = [4, 0, 0], sizes = [1, 4, 16], strides = [1, 1, 1]} : vector<8x4x16xf32> to vector<1x4x16xf32>
    %103 = vector.shape_cast %102 : vector<1x4x16xf32> to vector<4x16xf32>
    %104 = arith.addf %101, %103 : vector<4x16xf32>
    %c4_36 = arith.constant 4 : index
    %c0_37 = arith.constant 0 : index
    %c0_38 = arith.constant 0 : index
    %105 = vector.load %arg21[%c4_36, %c0_37, %c0_38] : memref<8x4x16xf32, #tpu.memory_space<vmem>>, vector<1x4x16xf32>
    %106 = vector.shape_cast %105 : vector<1x4x16xf32> to vector<4x16xf32>
    %107 = vector.shape_cast %104 : vector<4x16xf32> to vector<1x4x16xf32>
    tpu.vector_store %arg21[%c4_36, %c0_37, %c0_38], %107 {strides = array<i32>} : memref<8x4x16xf32, #tpu.memory_space<vmem>>, vector<1x4x16xf32>,
    %108 = vector.broadcast %9 : vector<1x16xf32> to vector<4x16xf32>
    %109 = arith.mulf %108, %104 : vector<4x16xf32>
    %110 = vector.extract_strided_slice %4 {offsets = [3, 0, 0], sizes = [1, 4, 16], strides = [1, 1, 1]} : vector<8x4x16xf32> to vector<1x4x16xf32>
    %111 = vector.shape_cast %110 : vector<1x4x16xf32> to vector<4x16xf32>
    %112 = arith.addf %109, %111 : vector<4x16xf32>
    %c3_39 = arith.constant 3 : index
    %c0_40 = arith.constant 0 : index
    %c0_41 = arith.constant 0 : index
    %113 = vector.load %arg21[%c3_39, %c0_40, %c0_41] : memref<8x4x16xf32, #tpu.memory_space<vmem>>, vector<1x4x16xf32>
    %114 = vector.shape_cast %113 : vector<1x4x16xf32> to vector<4x16xf32>
    %115 = vector.shape_cast %112 : vector<4x16xf32> to vector<1x4x16xf32>
    tpu.vector_store %arg21[%c3_39, %c0_40, %c0_41], %115 {strides = array<i32>} : memref<8x4x16xf32, #tpu.memory_space<vmem>>, vector<1x4x16xf32>,
    %116 = vector.broadcast %9 : vector<1x16xf32> to vector<4x16xf32>
    %117 = arith.mulf %116, %112 : vector<4x16xf32>
    %118 = vector.extract_strided_slice %4 {offsets = [2, 0, 0], sizes = [1, 4, 16], strides = [1, 1, 1]} : vector<8x4x16xf32> to vector<1x4x16xf32>
    %119 = vector.shape_cast %118 : vector<1x4x16xf32> to vector<4x16xf32>
    %120 = arith.addf %117, %119 : vector<4x16xf32>
    %c2_42 = arith.constant 2 : index
    %c0_43 = arith.constant 0 : index
    %c0_44 = arith.constant 0 : index
    %121 = vector.load %arg21[%c2_42, %c0_43, %c0_44] : memref<8x4x16xf32, #tpu.memory_space<vmem>>, vector<1x4x16xf32>
    %122 = vector.shape_cast %121 : vector<1x4x16xf32> to vector<4x16xf32>
    %123 = vector.shape_cast %120 : vector<4x16xf32> to vector<1x4x16xf32>
    tpu.vector_store %arg21[%c2_42, %c0_43, %c0_44], %123 {strides = array<i32>} : memref<8x4x16xf32, #tpu.memory_space<vmem>>, vector<1x4x16xf32>,
    %124 = vector.broadcast %9 : vector<1x16xf32> to vector<4x16xf32>
    %125 = arith.mulf %124, %120 : vector<4x16xf32>
    %126 = vector.extract_strided_slice %4 {offsets = [1, 0, 0], sizes = [1, 4, 16], strides = [1, 1, 1]} : vector<8x4x16xf32> to vector<1x4x16xf32>
    %127 = vector.shape_cast %126 : vector<1x4x16xf32> to vector<4x16xf32>
    %128 = arith.addf %125, %127 : vector<4x16xf32>
    %c1_45 = arith.constant 1 : index
    %c0_46 = arith.constant 0 : index
    %c0_47 = arith.constant 0 : index
    %129 = vector.load %arg21[%c1_45, %c0_46, %c0_47] : memref<8x4x16xf32, #tpu.memory_space<vmem>>, vector<1x4x16xf32>
    %130 = vector.shape_cast %129 : vector<1x4x16xf32> to vector<4x16xf32>
    %131 = vector.shape_cast %128 : vector<4x16xf32> to vector<1x4x16xf32>
    tpu.vector_store %arg21[%c1_45, %c0_46, %c0_47], %131 {strides = array<i32>} : memref<8x4x16xf32, #tpu.memory_space<vmem>>, vector<1x4x16xf32>,
    %132 = vector.broadcast %9 : vector<1x16xf32> to vector<4x16xf32>
    %133 = arith.mulf %132, %128 : vector<4x16xf32>
    %134 = vector.extract_strided_slice %4 {offsets = [0, 0, 0], sizes = [1, 4, 16], strides = [1, 1, 1]} : vector<8x4x16xf32> to vector<1x4x16xf32>
    %135 = vector.shape_cast %134 : vector<1x4x16xf32> to vector<4x16xf32>
    %136 = arith.addf %133, %135 : vector<4x16xf32>
    %c0_48 = arith.constant 0 : index
    %c0_49 = arith.constant 0 : index
    %c0_50 = arith.constant 0 : index
    %137 = vector.load %arg21[%c0_48, %c0_49, %c0_50] : memref<8x4x16xf32, #tpu.memory_space<vmem>>, vector<1x4x16xf32>
    %138 = vector.shape_cast %137 : vector<1x4x16xf32> to vector<4x16xf32>
    %139 = vector.shape_cast %136 : vector<4x16xf32> to vector<1x4x16xf32>
    tpu.vector_store %arg21[%c0_48, %c0_49, %c0_50], %139 {strides = array<i32>} : memref<8x4x16xf32, #tpu.memory_space<vmem>>, vector<1x4x16xf32>,
    %c0_51 = arith.constant 0 : index
    %c0_52 = arith.constant 0 : index
    %c0_53 = arith.constant 0 : index
    %140 = vector.load %arg20[%c0_51, %c0_52, %c0_53] : memref<8x4x16xf32, #tpu.memory_space<vmem>>, vector<8x4x16xf32>
    %c0_54 = arith.constant 0 : index
    %c0_55 = arith.constant 0 : index
    %c0_56 = arith.constant 0 : index
    %141 = vector.load %arg21[%c0_54, %c0_55, %c0_56] : memref<8x4x16xf32, #tpu.memory_space<vmem>>, vector<8x4x16xf32>
    %142 = arith.addf %140, %141 : vector<8x4x16xf32>
    %143 = vector.shape_cast %142 : vector<8x4x16xf32> to vector<32x16xf32>
    %c0_57 = arith.constant 0 : index
    %c0_58 = arith.constant 0 : index
    %144 = vector.load %arg6[%c0_57, %c0_58] : memref<16x64xf32, #tpu.memory_space<vmem>>, vector<16x64xf32>
    %cst_59 = arith.constant dense<0.000000e+00> : vector<32x64xf32>
    %145 = tpu.matmul %143, %144, %cst_59 {dimension_numbers = #tpu.dot_dimension_numbers<[1], [0], [0], [1], [0, 0, 1, 1], [], []>} : vector<32x16xf32>, vector<16x64xf32>, vector<32x64xf32> -> vector<32x64xf32>
    %146 = vector.shape_cast %145 : vector<32x64xf32> to vector<8x4x64xf32>
    %147 = arith.addf %146, %8 : vector<8x4x64xf32>
    %148 = vector.shape_cast %147 : vector<8x4x64xf32> to vector<32x64xf32>
    %c0_60 = arith.constant 0 : index
    %c0_61 = arith.constant 0 : index
    %149 = vector.load %arg9[%c0_60, %c0_61] : memref<1x64xf32, #tpu.memory_space<vmem>>, vector<1x64xf32>
    %c0_62 = arith.constant 0 : index
    %c0_63 = arith.constant 0 : index
    %150 = vector.load %arg10[%c0_62, %c0_63] : memref<1x64xf32, #tpu.memory_space<vmem>>, vector<1x64xf32>
    %cst_64 = arith.constant dense<0.000000e+00> : vector<32xf32>
    %151 = vector.multi_reduction <add>, %148, %cst_64 [1] : vector<32x64xf32> to vector<32xf32>
    %152 = vector.shape_cast %151 : vector<32xf32> to vector<32x1xf32>
    %cst_65 = arith.constant 6.400000e+01 : f32
    %153 = vector.broadcast %cst_65 : f32 to vector<32x1xf32>
    %154 = arith.divf %152, %153 : vector<32x1xf32>
    %155 = vector.broadcast %154 : vector<32x1xf32> to vector<32x64xf32>
    %156 = arith.subf %148, %155 : vector<32x64xf32>
    %157 = arith.mulf %156, %156 : vector<32x64xf32>
    %cst_66 = arith.constant dense<0.000000e+00> : vector<32xf32>
    %158 = vector.multi_reduction <add>, %157, %cst_66 [1] : vector<32x64xf32> to vector<32xf32>
    %159 = vector.shape_cast %158 : vector<32xf32> to vector<32x1xf32>
    %cst_67 = arith.constant 6.400000e+01 : f32
    %160 = vector.broadcast %cst_67 : f32 to vector<32x1xf32>
    %161 = arith.divf %159, %160 : vector<32x1xf32>
    %162 = vector.broadcast %154 : vector<32x1xf32> to vector<32x64xf32>
    %163 = arith.subf %148, %162 : vector<32x64xf32>
    %cst_68 = arith.constant 9.99999996E-13 : f32
    %164 = vector.broadcast %cst_68 : f32 to vector<32x1xf32>
    %165 = arith.addf %161, %164 : vector<32x1xf32>
    %166 = math.rsqrt %165 : vector<32x1xf32>
    %167 = vector.broadcast %166 : vector<32x1xf32> to vector<32x64xf32>
    %168 = arith.mulf %163, %167 : vector<32x64xf32>
    %169 = vector.broadcast %149 : vector<1x64xf32> to vector<32x64xf32>
    %170 = arith.mulf %168, %169 : vector<32x64xf32>
    %171 = vector.broadcast %150 : vector<1x64xf32> to vector<32x64xf32>
    %172 = arith.addf %170, %171 : vector<32x64xf32>
    %c0_69 = arith.constant 0 : index
    %c0_70 = arith.constant 0 : index
    %173 = vector.load %arg11[%c0_69, %c0_70] : memref<64x256xf32, #tpu.memory_space<vmem>>, vector<64x256xf32>
    %cst_71 = arith.constant dense<0.000000e+00> : vector<32x256xf32>
    %174 = tpu.matmul %172, %173, %cst_71 {dimension_numbers = #tpu.dot_dimension_numbers<[1], [0], [0], [1], [0, 0, 1, 1], [], []>} : vector<32x64xf32>, vector<64x256xf32>, vector<32x256xf32> -> vector<32x256xf32>
    %c0_72 = arith.constant 0 : index
    %c0_73 = arith.constant 0 : index
    %175 = vector.load %arg12[%c0_72, %c0_73] : memref<1x256xf32, #tpu.memory_space<vmem>>, vector<1x256xf32>
    %176 = vector.broadcast %175 : vector<1x256xf32> to vector<32x256xf32>
    %177 = arith.addf %174, %176 : vector<32x256xf32>
    %178 = arith.mulf %177, %177 : vector<32x256xf32>
    %179 = arith.mulf %177, %178 : vector<32x256xf32>
    %cst_74 = arith.constant 4.471500e-02 : f32
    %180 = vector.broadcast %cst_74 : f32 to vector<32x256xf32>
    %181 = arith.mulf %180, %179 : vector<32x256xf32>
    %182 = arith.addf %177, %181 : vector<32x256xf32>
    %cst_75 = arith.constant 0.797884583 : f32
    %183 = vector.broadcast %cst_75 : f32 to vector<32x256xf32>
    %184 = arith.mulf %183, %182 : vector<32x256xf32>
    %185 = math.tanh %184 : vector<32x256xf32>
    %cst_76 = arith.constant 1.000000e+00 : f32
    %186 = vector.broadcast %cst_76 : f32 to vector<32x256xf32>
    %187 = arith.addf %186, %185 : vector<32x256xf32>
    %cst_77 = arith.constant 5.000000e-01 : f32
    %188 = vector.broadcast %cst_77 : f32 to vector<32x256xf32>
    %189 = arith.mulf %188, %187 : vector<32x256xf32>
    %190 = arith.mulf %177, %189 : vector<32x256xf32>
    %c0_78 = arith.constant 0 : index
    %c0_79 = arith.constant 0 : index
    %191 = vector.load %arg13[%c0_78, %c0_79] : memref<256x64xf32, #tpu.memory_space<vmem>>, vector<256x64xf32>
    %cst_80 = arith.constant dense<0.000000e+00> : vector<32x64xf32>
    %192 = tpu.matmul %190, %191, %cst_80 {dimension_numbers = #tpu.dot_dimension_numbers<[1], [0], [0], [1], [0, 0, 1, 1], [], []>} : vector<32x256xf32>, vector<256x64xf32>, vector<32x64xf32> -> vector<32x64xf32>
    %c0_81 = arith.constant 0 : index
    %c0_82 = arith.constant 0 : index
    %193 = vector.load %arg14[%c0_81, %c0_82] : memref<1x64xf32, #tpu.memory_space<vmem>>, vector<1x64xf32>
    %194 = vector.broadcast %193 : vector<1x64xf32> to vector<32x64xf32>
    %195 = arith.addf %192, %194 : vector<32x64xf32>
    %196 = arith.addf %195, %172 : vector<32x64xf32>
    %c0_83 = arith.constant 0 : index
    %c0_84 = arith.constant 0 : index
    %197 = vector.load %arg15[%c0_83, %c0_84] : memref<1x64xf32, #tpu.memory_space<vmem>>, vector<1x64xf32>
    %c0_85 = arith.constant 0 : index
    %c0_86 = arith.constant 0 : index
    %198 = vector.load %arg16[%c0_85, %c0_86] : memref<1x64xf32, #tpu.memory_space<vmem>>, vector<1x64xf32>
    %cst_87 = arith.constant dense<0.000000e+00> : vector<32xf32>
    %199 = vector.multi_reduction <add>, %196, %cst_87 [1] : vector<32x64xf32> to vector<32xf32>
    %200 = vector.shape_cast %199 : vector<32xf32> to vector<32x1xf32>
    %cst_88 = arith.constant 6.400000e+01 : f32
    %201 = vector.broadcast %cst_88 : f32 to vector<32x1xf32>
    %202 = arith.divf %200, %201 : vector<32x1xf32>
    %203 = vector.broadcast %202 : vector<32x1xf32> to vector<32x64xf32>
    %204 = arith.subf %196, %203 : vector<32x64xf32>
    %205 = arith.mulf %204, %204 : vector<32x64xf32>
    %cst_89 = arith.constant dense<0.000000e+00> : vector<32xf32>
    %206 = vector.multi_reduction <add>, %205, %cst_89 [1] : vector<32x64xf32> to vector<32xf32>
    %207 = vector.shape_cast %206 : vector<32xf32> to vector<32x1xf32>
    %cst_90 = arith.constant 6.400000e+01 : f32
    %208 = vector.broadcast %cst_90 : f32 to vector<32x1xf32>
    %209 = arith.divf %207, %208 : vector<32x1xf32>
    %210 = vector.broadcast %202 : vector<32x1xf32> to vector<32x64xf32>
    %211 = arith.subf %196, %210 : vector<32x64xf32>
    %cst_91 = arith.constant 9.99999996E-13 : f32
    %212 = vector.broadcast %cst_91 : f32 to vector<32x1xf32>
    %213 = arith.addf %209, %212 : vector<32x1xf32>
    %214 = math.rsqrt %213 : vector<32x1xf32>
    %215 = vector.broadcast %214 : vector<32x1xf32> to vector<32x64xf32>
    %216 = arith.mulf %211, %215 : vector<32x64xf32>
    %217 = vector.broadcast %197 : vector<1x64xf32> to vector<32x64xf32>
    %218 = arith.mulf %216, %217 : vector<32x64xf32>
    %219 = vector.broadcast %198 : vector<1x64xf32> to vector<32x64xf32>
    %220 = arith.addf %218, %219 : vector<32x64xf32>
    %221 = vector.shape_cast %220 : vector<32x64xf32> to vector<8x4x64xf32>
    %222 = vector.extract_strided_slice %221 {offsets = [0, 0, 0], sizes = [8, 2, 64], strides = [1, 1, 1]} : vector<8x4x64xf32> to vector<8x2x64xf32>
    %223 = vector.extract_strided_slice %221 {offsets = [0, 2, 0], sizes = [8, 2, 64], strides = [1, 1, 1]} : vector<8x4x64xf32> to vector<8x2x64xf32>
    %224 = vector.extract_strided_slice %0 {offsets = [0, 0, 0], sizes = [8, 2, 64], strides = [1, 1, 1]} : vector<8x4x64xf32> to vector<8x2x64xf32>
    %225 = vector.shape_cast %224 : vector<8x2x64xf32> to vector<16x64xf32>
    %c0_92 = arith.constant 0 : index
    %c0_93 = arith.constant 0 : index
    %226 = vector.load %arg2[%c0_92, %c0_93] : memref<64x192xf32, #tpu.memory_space<vmem>>, vector<64x192xf32>
    %cst_94 = arith.constant dense<0.000000e+00> : vector<16x192xf32>
    %227 = tpu.matmul %225, %226, %cst_94 {dimension_numbers = #tpu.dot_dimension_numbers<[1], [0], [0], [1], [0, 0, 1, 1], [], []>} : vector<16x64xf32>, vector<64x192xf32>, vector<16x192xf32> -> vector<16x192xf32>
    %228 = vector.shape_cast %227 : vector<16x192xf32> to vector<8x2x192xf32>
    %c0_95 = arith.constant 0 : index
    %c0_96 = arith.constant 0 : index
    %229 = vector.load %arg4[%c0_95, %c0_96] : memref<1x192xf32, #tpu.memory_space<vmem>>, vector<1x192xf32>
    %230 = vector.shape_cast %229 : vector<1x192xf32> to vector<1x1x192xf32>
    %231 = vector.broadcast %230 : vector<1x1x192xf32> to vector<8x2x192xf32>
    %232 = arith.addf %228, %231 : vector<8x2x192xf32>
    %cst_97 = arith.constant 0.000000e+00 : f32
    %233 = vector.broadcast %cst_97 : f32 to vector<2x64xf32>
    %c0_98 = arith.constant 0 : index
    %c0_99 = arith.constant 0 : index
    %234 = vector.load %arg3[%c0_98, %c0_99] : memref<64x192xf32, #tpu.memory_space<vmem>>, vector<64x192xf32>
    %cst_100 = arith.constant dense<0.000000e+00> : vector<2x192xf32>
    %235 = tpu.matmul %233, %234, %cst_100 {dimension_numbers = #tpu.dot_dimension_numbers<[1], [0], [0], [1], [0, 0, 1, 1], [], []>} : vector<2x64xf32>, vector<64x192xf32>, vector<2x192xf32> -> vector<2x192xf32>
    %236 = vector.extract_strided_slice %232 {offsets = [0, 0, 0], sizes = [1, 2, 192], strides = [1, 1, 1]} : vector<8x2x192xf32> to vector<1x2x192xf32>
    %237 = vector.shape_cast %236 : vector<1x2x192xf32> to vector<2x192xf32>
    %238 = vector.extract_strided_slice %237 {offsets = [0, 0], sizes = [2, 64], strides = [1, 1]} : vector<2x192xf32> to vector<2x64xf32>
    %239 = vector.extract_strided_slice %235 {offsets = [0, 0], sizes = [2, 64], strides = [1, 1]} : vector<2x192xf32> to vector<2x64xf32>
    %240 = arith.addf %238, %239 : vector<2x64xf32>
    %241 = arith.negf %240 : vector<2x64xf32>
    %242 = math.exp %241 : vector<2x64xf32>
    %cst_101 = arith.constant 1.000000e+00 : f32
    %243 = vector.broadcast %cst_101 : f32 to vector<2x64xf32>
    %244 = arith.addf %243, %242 : vector<2x64xf32>
    %245 = arith.divf %243, %244 : vector<2x64xf32>
    %246 = vector.extract_strided_slice %237 {offsets = [0, 64], sizes = [2, 64], strides = [1, 1]} : vector<2x192xf32> to vector<2x64xf32>
    %247 = vector.extract_strided_slice %235 {offsets = [0, 64], sizes = [2, 64], strides = [1, 1]} : vector<2x192xf32> to vector<2x64xf32>
    %248 = arith.addf %246, %247 : vector<2x64xf32>
    %249 = arith.negf %248 : vector<2x64xf32>
    %250 = math.exp %249 : vector<2x64xf32>
    %cst_102 = arith.constant 1.000000e+00 : f32
    %251 = vector.broadcast %cst_102 : f32 to vector<2x64xf32>
    %252 = arith.addf %251, %250 : vector<2x64xf32>
    %253 = arith.divf %251, %252 : vector<2x64xf32>
    %254 = vector.extract_strided_slice %237 {offsets = [0, 128], sizes = [2, 64], strides = [1, 1]} : vector<2x192xf32> to vector<2x64xf32>
    %255 = vector.extract_strided_slice %235 {offsets = [0, 128], sizes = [2, 64], strides = [1, 1]} : vector<2x192xf32> to vector<2x64xf32>
    %256 = arith.mulf %245, %255 : vector<2x64xf32>
    %257 = arith.addf %254, %256 : vector<2x64xf32>
    %258 = math.tanh %257 : vector<2x64xf32>
    %cst_103 = arith.constant 1.000000e+00 : f32
    %259 = vector.broadcast %cst_103 : f32 to vector<2x64xf32>
    %260 = arith.subf %259, %253 : vector<2x64xf32>
    %261 = arith.mulf %260, %258 : vector<2x64xf32>
    %262 = arith.mulf %253, %233 : vector<2x64xf32>
    %263 = arith.addf %261, %262 : vector<2x64xf32>
    %c0_104 = arith.constant 0 : index
    %c0_105 = arith.constant 0 : index
    %c0_106 = arith.constant 0 : index
    %264 = vector.load %arg22[%c0_104, %c0_105, %c0_106] : memref<8x2x64xf32, #tpu.memory_space<vmem>>, vector<1x2x64xf32>
    %265 = vector.shape_cast %264 : vector<1x2x64xf32> to vector<2x64xf32>
    %266 = vector.shape_cast %263 : vector<2x64xf32> to vector<1x2x64xf32>
    tpu.vector_store %arg22[%c0_104, %c0_105, %c0_106], %266 {strides = array<i32>} : memref<8x2x64xf32, #tpu.memory_space<vmem>>, vector<1x2x64xf32>,
    %c0_107 = arith.constant 0 : index
    %c0_108 = arith.constant 0 : index
    %267 = vector.load %arg3[%c0_107, %c0_108] : memref<64x192xf32, #tpu.memory_space<vmem>>, vector<64x192xf32>
    %cst_109 = arith.constant dense<0.000000e+00> : vector<2x192xf32>
    %268 = tpu.matmul %263, %267, %cst_109 {dimension_numbers = #tpu.dot_dimension_numbers<[1], [0], [0], [1], [0, 0, 1, 1], [], []>} : vector<2x64xf32>, vector<64x192xf32>, vector<2x192xf32> -> vector<2x192xf32>
    %269 = vector.extract_strided_slice %232 {offsets = [1, 0, 0], sizes = [1, 2, 192], strides = [1, 1, 1]} : vector<8x2x192xf32> to vector<1x2x192xf32>
    %270 = vector.shape_cast %269 : vector<1x2x192xf32> to vector<2x192xf32>
    %271 = vector.extract_strided_slice %270 {offsets = [0, 0], sizes = [2, 64], strides = [1, 1]} : vector<2x192xf32> to vector<2x64xf32>
    %272 = vector.extract_strided_slice %268 {offsets = [0, 0], sizes = [2, 64], strides = [1, 1]} : vector<2x192xf32> to vector<2x64xf32>
    %273 = arith.addf %271, %272 : vector<2x64xf32>
    %274 = arith.negf %273 : vector<2x64xf32>
    %275 = math.exp %274 : vector<2x64xf32>
    %cst_110 = arith.constant 1.000000e+00 : f32
    %276 = vector.broadcast %cst_110 : f32 to vector<2x64xf32>
    %277 = arith.addf %276, %275 : vector<2x64xf32>
    %278 = arith.divf %276, %277 : vector<2x64xf32>
    %279 = vector.extract_strided_slice %270 {offsets = [0, 64], sizes = [2, 64], strides = [1, 1]} : vector<2x192xf32> to vector<2x64xf32>
    %280 = vector.extract_strided_slice %268 {offsets = [0, 64], sizes = [2, 64], strides = [1, 1]} : vector<2x192xf32> to vector<2x64xf32>
    %281 = arith.addf %279, %280 : vector<2x64xf32>
    %282 = arith.negf %281 : vector<2x64xf32>
    %283 = math.exp %282 : vector<2x64xf32>
    %cst_111 = arith.constant 1.000000e+00 : f32
    %284 = vector.broadcast %cst_111 : f32 to vector<2x64xf32>
    %285 = arith.addf %284, %283 : vector<2x64xf32>
    %286 = arith.divf %284, %285 : vector<2x64xf32>
    %287 = vector.extract_strided_slice %270 {offsets = [0, 128], sizes = [2, 64], strides = [1, 1]} : vector<2x192xf32> to vector<2x64xf32>
    %288 = vector.extract_strided_slice %268 {offsets = [0, 128], sizes = [2, 64], strides = [1, 1]} : vector<2x192xf32> to vector<2x64xf32>
    %289 = arith.mulf %278, %288 : vector<2x64xf32>
    %290 = arith.addf %287, %289 : vector<2x64xf32>
    %291 = math.tanh %290 : vector<2x64xf32>
    %cst_112 = arith.constant 1.000000e+00 : f32
    %292 = vector.broadcast %cst_112 : f32 to vector<2x64xf32>
    %293 = arith.subf %292, %286 : vector<2x64xf32>
    %294 = arith.mulf %293, %291 : vector<2x64xf32>
    %295 = arith.mulf %286, %263 : vector<2x64xf32>
    %296 = arith.addf %294, %295 : vector<2x64xf32>
    %c1_113 = arith.constant 1 : index
    %c0_114 = arith.constant 0 : index
    %c0_115 = arith.constant 0 : index
    %297 = vector.load %arg22[%c1_113, %c0_114, %c0_115] : memref<8x2x64xf32, #tpu.memory_space<vmem>>, vector<1x2x64xf32>
    %298 = vector.shape_cast %297 : vector<1x2x64xf32> to vector<2x64xf32>
    %299 = vector.shape_cast %296 : vector<2x64xf32> to vector<1x2x64xf32>
    tpu.vector_store %arg22[%c1_113, %c0_114, %c0_115], %299 {strides = array<i32>} : memref<8x2x64xf32, #tpu.memory_space<vmem>>, vector<1x2x64xf32>,
    %c0_116 = arith.constant 0 : index
    %c0_117 = arith.constant 0 : index
    %300 = vector.load %arg3[%c0_116, %c0_117] : memref<64x192xf32, #tpu.memory_space<vmem>>, vector<64x192xf32>
    %cst_118 = arith.constant dense<0.000000e+00> : vector<2x192xf32>
    %301 = tpu.matmul %296, %300, %cst_118 {dimension_numbers = #tpu.dot_dimension_numbers<[1], [0], [0], [1], [0, 0, 1, 1], [], []>} : vector<2x64xf32>, vector<64x192xf32>, vector<2x192xf32> -> vector<2x192xf32>
    %302 = vector.extract_strided_slice %232 {offsets = [2, 0, 0], sizes = [1, 2, 192], strides = [1, 1, 1]} : vector<8x2x192xf32> to vector<1x2x192xf32>
    %303 = vector.shape_cast %302 : vector<1x2x192xf32> to vector<2x192xf32>
    %304 = vector.extract_strided_slice %303 {offsets = [0, 0], sizes = [2, 64], strides = [1, 1]} : vector<2x192xf32> to vector<2x64xf32>
    %305 = vector.extract_strided_slice %301 {offsets = [0, 0], sizes = [2, 64], strides = [1, 1]} : vector<2x192xf32> to vector<2x64xf32>
    %306 = arith.addf %304, %305 : vector<2x64xf32>
    %307 = arith.negf %306 : vector<2x64xf32>
    %308 = math.exp %307 : vector<2x64xf32>
    %cst_119 = arith.constant 1.000000e+00 : f32
    %309 = vector.broadcast %cst_119 : f32 to vector<2x64xf32>
    %310 = arith.addf %309, %308 : vector<2x64xf32>
    %311 = arith.divf %309, %310 : vector<2x64xf32>
    %312 = vector.extract_strided_slice %303 {offsets = [0, 64], sizes = [2, 64], strides = [1, 1]} : vector<2x192xf32> to vector<2x64xf32>
    %313 = vector.extract_strided_slice %301 {offsets = [0, 64], sizes = [2, 64], strides = [1, 1]} : vector<2x192xf32> to vector<2x64xf32>
    %314 = arith.addf %312, %313 : vector<2x64xf32>
    %315 = arith.negf %314 : vector<2x64xf32>
    %316 = math.exp %315 : vector<2x64xf32>
    %cst_120 = arith.constant 1.000000e+00 : f32
    %317 = vector.broadcast %cst_120 : f32 to vector<2x64xf32>
    %318 = arith.addf %317, %316 : vector<2x64xf32>
    %319 = arith.divf %317, %318 : vector<2x64xf32>
    %320 = vector.extract_strided_slice %303 {offsets = [0, 128], sizes = [2, 64], strides = [1, 1]} : vector<2x192xf32> to vector<2x64xf32>
    %321 = vector.extract_strided_slice %301 {offsets = [0, 128], sizes = [2, 64], strides = [1, 1]} : vector<2x192xf32> to vector<2x64xf32>
    %322 = arith.mulf %311, %321 : vector<2x64xf32>
    %323 = arith.addf %320, %322 : vector<2x64xf32>
    %324 = math.tanh %323 : vector<2x64xf32>
    %cst_121 = arith.constant 1.000000e+00 : f32
    %325 = vector.broadcast %cst_121 : f32 to vector<2x64xf32>
    %326 = arith.subf %325, %319 : vector<2x64xf32>
    %327 = arith.mulf %326, %324 : vector<2x64xf32>
    %328 = arith.mulf %319, %296 : vector<2x64xf32>
    %329 = arith.addf %327, %328 : vector<2x64xf32>
    %c2_122 = arith.constant 2 : index
    %c0_123 = arith.constant 0 : index
    %c0_124 = arith.constant 0 : index
    %330 = vector.load %arg22[%c2_122, %c0_123, %c0_124] : memref<8x2x64xf32, #tpu.memory_space<vmem>>, vector<1x2x64xf32>
    %331 = vector.shape_cast %330 : vector<1x2x64xf32> to vector<2x64xf32>
    %332 = vector.shape_cast %329 : vector<2x64xf32> to vector<1x2x64xf32>
    tpu.vector_store %arg22[%c2_122, %c0_123, %c0_124], %332 {strides = array<i32>} : memref<8x2x64xf32, #tpu.memory_space<vmem>>, vector<1x2x64xf32>,
    %c0_125 = arith.constant 0 : index
    %c0_126 = arith.constant 0 : index
    %333 = vector.load %arg3[%c0_125, %c0_126] : memref<64x192xf32, #tpu.memory_space<vmem>>, vector<64x192xf32>
    %cst_127 = arith.constant dense<0.000000e+00> : vector<2x192xf32>
    %334 = tpu.matmul %329, %333, %cst_127 {dimension_numbers = #tpu.dot_dimension_numbers<[1], [0], [0], [1], [0, 0, 1, 1], [], []>} : vector<2x64xf32>, vector<64x192xf32>, vector<2x192xf32> -> vector<2x192xf32>
    %335 = vector.extract_strided_slice %232 {offsets = [3, 0, 0], sizes = [1, 2, 192], strides = [1, 1, 1]} : vector<8x2x192xf32> to vector<1x2x192xf32>
    %336 = vector.shape_cast %335 : vector<1x2x192xf32> to vector<2x192xf32>
    %337 = vector.extract_strided_slice %336 {offsets = [0, 0], sizes = [2, 64], strides = [1, 1]} : vector<2x192xf32> to vector<2x64xf32>
    %338 = vector.extract_strided_slice %334 {offsets = [0, 0], sizes = [2, 64], strides = [1, 1]} : vector<2x192xf32> to vector<2x64xf32>
    %339 = arith.addf %337, %338 : vector<2x64xf32>
    %340 = arith.negf %339 : vector<2x64xf32>
    %341 = math.exp %340 : vector<2x64xf32>
    %cst_128 = arith.constant 1.000000e+00 : f32
    %342 = vector.broadcast %cst_128 : f32 to vector<2x64xf32>
    %343 = arith.addf %342, %341 : vector<2x64xf32>
    %344 = arith.divf %342, %343 : vector<2x64xf32>
    %345 = vector.extract_strided_slice %336 {offsets = [0, 64], sizes = [2, 64], strides = [1, 1]} : vector<2x192xf32> to vector<2x64xf32>
    %346 = vector.extract_strided_slice %334 {offsets = [0, 64], sizes = [2, 64], strides = [1, 1]} : vector<2x192xf32> to vector<2x64xf32>
    %347 = arith.addf %345, %346 : vector<2x64xf32>
    %348 = arith.negf %347 : vector<2x64xf32>
    %349 = math.exp %348 : vector<2x64xf32>
    %cst_129 = arith.constant 1.000000e+00 : f32
    %350 = vector.broadcast %cst_129 : f32 to vector<2x64xf32>
    %351 = arith.addf %350, %349 : vector<2x64xf32>
    %352 = arith.divf %350, %351 : vector<2x64xf32>
    %353 = vector.extract_strided_slice %336 {offsets = [0, 128], sizes = [2, 64], strides = [1, 1]} : vector<2x192xf32> to vector<2x64xf32>
    %354 = vector.extract_strided_slice %334 {offsets = [0, 128], sizes = [2, 64], strides = [1, 1]} : vector<2x192xf32> to vector<2x64xf32>
    %355 = arith.mulf %344, %354 : vector<2x64xf32>
    %356 = arith.addf %353, %355 : vector<2x64xf32>
    %357 = math.tanh %356 : vector<2x64xf32>
    %cst_130 = arith.constant 1.000000e+00 : f32
    %358 = vector.broadcast %cst_130 : f32 to vector<2x64xf32>
    %359 = arith.subf %358, %352 : vector<2x64xf32>
    %360 = arith.mulf %359, %357 : vector<2x64xf32>
    %361 = arith.mulf %352, %329 : vector<2x64xf32>
    %362 = arith.addf %360, %361 : vector<2x64xf32>
    %c3_131 = arith.constant 3 : index
    %c0_132 = arith.constant 0 : index
    %c0_133 = arith.constant 0 : index
    %363 = vector.load %arg22[%c3_131, %c0_132, %c0_133] : memref<8x2x64xf32, #tpu.memory_space<vmem>>, vector<1x2x64xf32>
    %364 = vector.shape_cast %363 : vector<1x2x64xf32> to vector<2x64xf32>
    %365 = vector.shape_cast %362 : vector<2x64xf32> to vector<1x2x64xf32>
    tpu.vector_store %arg22[%c3_131, %c0_132, %c0_133], %365 {strides = array<i32>} : memref<8x2x64xf32, #tpu.memory_space<vmem>>, vector<1x2x64xf32>,
    %c0_134 = arith.constant 0 : index
    %c0_135 = arith.constant 0 : index
    %366 = vector.load %arg3[%c0_134, %c0_135] : memref<64x192xf32, #tpu.memory_space<vmem>>, vector<64x192xf32>
    %cst_136 = arith.constant dense<0.000000e+00> : vector<2x192xf32>
    %367 = tpu.matmul %362, %366, %cst_136 {dimension_numbers = #tpu.dot_dimension_numbers<[1], [0], [0], [1], [0, 0, 1, 1], [], []>} : vector<2x64xf32>, vector<64x192xf32>, vector<2x192xf32> -> vector<2x192xf32>
    %368 = vector.extract_strided_slice %232 {offsets = [4, 0, 0], sizes = [1, 2, 192], strides = [1, 1, 1]} : vector<8x2x192xf32> to vector<1x2x192xf32>
    %369 = vector.shape_cast %368 : vector<1x2x192xf32> to vector<2x192xf32>
    %370 = vector.extract_strided_slice %369 {offsets = [0, 0], sizes = [2, 64], strides = [1, 1]} : vector<2x192xf32> to vector<2x64xf32>
    %371 = vector.extract_strided_slice %367 {offsets = [0, 0], sizes = [2, 64], strides = [1, 1]} : vector<2x192xf32> to vector<2x64xf32>
    %372 = arith.addf %370, %371 : vector<2x64xf32>
    %373 = arith.negf %372 : vector<2x64xf32>
    %374 = math.exp %373 : vector<2x64xf32>
    %cst_137 = arith.constant 1.000000e+00 : f32
    %375 = vector.broadcast %cst_137 : f32 to vector<2x64xf32>
    %376 = arith.addf %375, %374 : vector<2x64xf32>
    %377 = arith.divf %375, %376 : vector<2x64xf32>
    %378 = vector.extract_strided_slice %369 {offsets = [0, 64], sizes = [2, 64], strides = [1, 1]} : vector<2x192xf32> to vector<2x64xf32>
    %379 = vector.extract_strided_slice %367 {offsets = [0, 64], sizes = [2, 64], strides = [1, 1]} : vector<2x192xf32> to vector<2x64xf32>
    %380 = arith.addf %378, %379 : vector<2x64xf32>
    %381 = arith.negf %380 : vector<2x64xf32>
    %382 = math.exp %381 : vector<2x64xf32>
    %cst_138 = arith.constant 1.000000e+00 : f32
    %383 = vector.broadcast %cst_138 : f32 to vector<2x64xf32>
    %384 = arith.addf %383, %382 : vector<2x64xf32>
    %385 = arith.divf %383, %384 : vector<2x64xf32>
    %386 = vector.extract_strided_slice %369 {offsets = [0, 128], sizes = [2, 64], strides = [1, 1]} : vector<2x192xf32> to vector<2x64xf32>
    %387 = vector.extract_strided_slice %367 {offsets = [0, 128], sizes = [2, 64], strides = [1, 1]} : vector<2x192xf32> to vector<2x64xf32>
    %388 = arith.mulf %377, %387 : vector<2x64xf32>
    %389 = arith.addf %386, %388 : vector<2x64xf32>
    %390 = math.tanh %389 : vector<2x64xf32>
    %cst_139 = arith.constant 1.000000e+00 : f32
    %391 = vector.broadcast %cst_139 : f32 to vector<2x64xf32>
    %392 = arith.subf %391, %385 : vector<2x64xf32>
    %393 = arith.mulf %392, %390 : vector<2x64xf32>
    %394 = arith.mulf %385, %362 : vector<2x64xf32>
    %395 = arith.addf %393, %394 : vector<2x64xf32>
    %c4_140 = arith.constant 4 : index
    %c0_141 = arith.constant 0 : index
    %c0_142 = arith.constant 0 : index
    %396 = vector.load %arg22[%c4_140, %c0_141, %c0_142] : memref<8x2x64xf32, #tpu.memory_space<vmem>>, vector<1x2x64xf32>
    %397 = vector.shape_cast %396 : vector<1x2x64xf32> to vector<2x64xf32>
    %398 = vector.shape_cast %395 : vector<2x64xf32> to vector<1x2x64xf32>
    tpu.vector_store %arg22[%c4_140, %c0_141, %c0_142], %398 {strides = array<i32>} : memref<8x2x64xf32, #tpu.memory_space<vmem>>, vector<1x2x64xf32>,
    %c0_143 = arith.constant 0 : index
    %c0_144 = arith.constant 0 : index
    %399 = vector.load %arg3[%c0_143, %c0_144] : memref<64x192xf32, #tpu.memory_space<vmem>>, vector<64x192xf32>
    %cst_145 = arith.constant dense<0.000000e+00> : vector<2x192xf32>
    %400 = tpu.matmul %395, %399, %cst_145 {dimension_numbers = #tpu.dot_dimension_numbers<[1], [0], [0], [1], [0, 0, 1, 1], [], []>} : vector<2x64xf32>, vector<64x192xf32>, vector<2x192xf32> -> vector<2x192xf32>
    %401 = vector.extract_strided_slice %232 {offsets = [5, 0, 0], sizes = [1, 2, 192], strides = [1, 1, 1]} : vector<8x2x192xf32> to vector<1x2x192xf32>
    %402 = vector.shape_cast %401 : vector<1x2x192xf32> to vector<2x192xf32>
    %403 = vector.extract_strided_slice %402 {offsets = [0, 0], sizes = [2, 64], strides = [1, 1]} : vector<2x192xf32> to vector<2x64xf32>
    %404 = vector.extract_strided_slice %400 {offsets = [0, 0], sizes = [2, 64], strides = [1, 1]} : vector<2x192xf32> to vector<2x64xf32>
    %405 = arith.addf %403, %404 : vector<2x64xf32>
    %406 = arith.negf %405 : vector<2x64xf32>
    %407 = math.exp %406 : vector<2x64xf32>
    %cst_146 = arith.constant 1.000000e+00 : f32
    %408 = vector.broadcast %cst_146 : f32 to vector<2x64xf32>
    %409 = arith.addf %408, %407 : vector<2x64xf32>
    %410 = arith.divf %408, %409 : vector<2x64xf32>
    %411 = vector.extract_strided_slice %402 {offsets = [0, 64], sizes = [2, 64], strides = [1, 1]} : vector<2x192xf32> to vector<2x64xf32>
    %412 = vector.extract_strided_slice %400 {offsets = [0, 64], sizes = [2, 64], strides = [1, 1]} : vector<2x192xf32> to vector<2x64xf32>
    %413 = arith.addf %411, %412 : vector<2x64xf32>
    %414 = arith.negf %413 : vector<2x64xf32>
    %415 = math.exp %414 : vector<2x64xf32>
    %cst_147 = arith.constant 1.000000e+00 : f32
    %416 = vector.broadcast %cst_147 : f32 to vector<2x64xf32>
    %417 = arith.addf %416, %415 : vector<2x64xf32>
    %418 = arith.divf %416, %417 : vector<2x64xf32>
    %419 = vector.extract_strided_slice %402 {offsets = [0, 128], sizes = [2, 64], strides = [1, 1]} : vector<2x192xf32> to vector<2x64xf32>
    %420 = vector.extract_strided_slice %400 {offsets = [0, 128], sizes = [2, 64], strides = [1, 1]} : vector<2x192xf32> to vector<2x64xf32>
    %421 = arith.mulf %410, %420 : vector<2x64xf32>
    %422 = arith.addf %419, %421 : vector<2x64xf32>
    %423 = math.tanh %422 : vector<2x64xf32>
    %cst_148 = arith.constant 1.000000e+00 : f32
    %424 = vector.broadcast %cst_148 : f32 to vector<2x64xf32>
    %425 = arith.subf %424, %418 : vector<2x64xf32>
    %426 = arith.mulf %425, %423 : vector<2x64xf32>
    %427 = arith.mulf %418, %395 : vector<2x64xf32>
    %428 = arith.addf %426, %427 : vector<2x64xf32>
    %c5_149 = arith.constant 5 : index
    %c0_150 = arith.constant 0 : index
    %c0_151 = arith.constant 0 : index
    %429 = vector.load %arg22[%c5_149, %c0_150, %c0_151] : memref<8x2x64xf32, #tpu.memory_space<vmem>>, vector<1x2x64xf32>
    %430 = vector.shape_cast %429 : vector<1x2x64xf32> to vector<2x64xf32>
    %431 = vector.shape_cast %428 : vector<2x64xf32> to vector<1x2x64xf32>
    tpu.vector_store %arg22[%c5_149, %c0_150, %c0_151], %431 {strides = array<i32>} : memref<8x2x64xf32, #tpu.memory_space<vmem>>, vector<1x2x64xf32>,
    %c0_152 = arith.constant 0 : index
    %c0_153 = arith.constant 0 : index
    %432 = vector.load %arg3[%c0_152, %c0_153] : memref<64x192xf32, #tpu.memory_space<vmem>>, vector<64x192xf32>
    %cst_154 = arith.constant dense<0.000000e+00> : vector<2x192xf32>
    %433 = tpu.matmul %428, %432, %cst_154 {dimension_numbers = #tpu.dot_dimension_numbers<[1], [0], [0], [1], [0, 0, 1, 1], [], []>} : vector<2x64xf32>, vector<64x192xf32>, vector<2x192xf32> -> vector<2x192xf32>
    %434 = vector.extract_strided_slice %232 {offsets = [6, 0, 0], sizes = [1, 2, 192], strides = [1, 1, 1]} : vector<8x2x192xf32> to vector<1x2x192xf32>
    %435 = vector.shape_cast %434 : vector<1x2x192xf32> to vector<2x192xf32>
    %436 = vector.extract_strided_slice %435 {offsets = [0, 0], sizes = [2, 64], strides = [1, 1]} : vector<2x192xf32> to vector<2x64xf32>
    %437 = vector.extract_strided_slice %433 {offsets = [0, 0], sizes = [2, 64], strides = [1, 1]} : vector<2x192xf32> to vector<2x64xf32>
    %438 = arith.addf %436, %437 : vector<2x64xf32>
    %439 = arith.negf %438 : vector<2x64xf32>
    %440 = math.exp %439 : vector<2x64xf32>
    %cst_155 = arith.constant 1.000000e+00 : f32
    %441 = vector.broadcast %cst_155 : f32 to vector<2x64xf32>
    %442 = arith.addf %441, %440 : vector<2x64xf32>
    %443 = arith.divf %441, %442 : vector<2x64xf32>
    %444 = vector.extract_strided_slice %435 {offsets = [0, 64], sizes = [2, 64], strides = [1, 1]} : vector<2x192xf32> to vector<2x64xf32>
    %445 = vector.extract_strided_slice %433 {offsets = [0, 64], sizes = [2, 64], strides = [1, 1]} : vector<2x192xf32> to vector<2x64xf32>
    %446 = arith.addf %444, %445 : vector<2x64xf32>
    %447 = arith.negf %446 : vector<2x64xf32>
    %448 = math.exp %447 : vector<2x64xf32>
    %cst_156 = arith.constant 1.000000e+00 : f32
    %449 = vector.broadcast %cst_156 : f32 to vector<2x64xf32>
    %450 = arith.addf %449, %448 : vector<2x64xf32>
    %451 = arith.divf %449, %450 : vector<2x64xf32>
    %452 = vector.extract_strided_slice %435 {offsets = [0, 128], sizes = [2, 64], strides = [1, 1]} : vector<2x192xf32> to vector<2x64xf32>
    %453 = vector.extract_strided_slice %433 {offsets = [0, 128], sizes = [2, 64], strides = [1, 1]} : vector<2x192xf32> to vector<2x64xf32>
    %454 = arith.mulf %443, %453 : vector<2x64xf32>
    %455 = arith.addf %452, %454 : vector<2x64xf32>
    %456 = math.tanh %455 : vector<2x64xf32>
    %cst_157 = arith.constant 1.000000e+00 : f32
    %457 = vector.broadcast %cst_157 : f32 to vector<2x64xf32>
    %458 = arith.subf %457, %451 : vector<2x64xf32>
    %459 = arith.mulf %458, %456 : vector<2x64xf32>
    %460 = arith.mulf %451, %428 : vector<2x64xf32>
    %461 = arith.addf %459, %460 : vector<2x64xf32>
    %c6_158 = arith.constant 6 : index
    %c0_159 = arith.constant 0 : index
    %c0_160 = arith.constant 0 : index
    %462 = vector.load %arg22[%c6_158, %c0_159, %c0_160] : memref<8x2x64xf32, #tpu.memory_space<vmem>>, vector<1x2x64xf32>
    %463 = vector.shape_cast %462 : vector<1x2x64xf32> to vector<2x64xf32>
    %464 = vector.shape_cast %461 : vector<2x64xf32> to vector<1x2x64xf32>
    tpu.vector_store %arg22[%c6_158, %c0_159, %c0_160], %464 {strides = array<i32>} : memref<8x2x64xf32, #tpu.memory_space<vmem>>, vector<1x2x64xf32>,
    %c0_161 = arith.constant 0 : index
    %c0_162 = arith.constant 0 : index
    %465 = vector.load %arg3[%c0_161, %c0_162] : memref<64x192xf32, #tpu.memory_space<vmem>>, vector<64x192xf32>
    %cst_163 = arith.constant dense<0.000000e+00> : vector<2x192xf32>
    %466 = tpu.matmul %461, %465, %cst_163 {dimension_numbers = #tpu.dot_dimension_numbers<[1], [0], [0], [1], [0, 0, 1, 1], [], []>} : vector<2x64xf32>, vector<64x192xf32>, vector<2x192xf32> -> vector<2x192xf32>
    %467 = vector.extract_strided_slice %232 {offsets = [7, 0, 0], sizes = [1, 2, 192], strides = [1, 1, 1]} : vector<8x2x192xf32> to vector<1x2x192xf32>
    %468 = vector.shape_cast %467 : vector<1x2x192xf32> to vector<2x192xf32>
    %469 = vector.extract_strided_slice %468 {offsets = [0, 0], sizes = [2, 64], strides = [1, 1]} : vector<2x192xf32> to vector<2x64xf32>
    %470 = vector.extract_strided_slice %466 {offsets = [0, 0], sizes = [2, 64], strides = [1, 1]} : vector<2x192xf32> to vector<2x64xf32>
    %471 = arith.addf %469, %470 : vector<2x64xf32>
    %472 = arith.negf %471 : vector<2x64xf32>
    %473 = math.exp %472 : vector<2x64xf32>
    %cst_164 = arith.constant 1.000000e+00 : f32
    %474 = vector.broadcast %cst_164 : f32 to vector<2x64xf32>
    %475 = arith.addf %474, %473 : vector<2x64xf32>
    %476 = arith.divf %474, %475 : vector<2x64xf32>
    %477 = vector.extract_strided_slice %468 {offsets = [0, 64], sizes = [2, 64], strides = [1, 1]} : vector<2x192xf32> to vector<2x64xf32>
    %478 = vector.extract_strided_slice %466 {offsets = [0, 64], sizes = [2, 64], strides = [1, 1]} : vector<2x192xf32> to vector<2x64xf32>
    %479 = arith.addf %477, %478 : vector<2x64xf32>
    %480 = arith.negf %479 : vector<2x64xf32>
    %481 = math.exp %480 : vector<2x64xf32>
    %cst_165 = arith.constant 1.000000e+00 : f32
    %482 = vector.broadcast %cst_165 : f32 to vector<2x64xf32>
    %483 = arith.addf %482, %481 : vector<2x64xf32>
    %484 = arith.divf %482, %483 : vector<2x64xf32>
    %485 = vector.extract_strided_slice %468 {offsets = [0, 128], sizes = [2, 64], strides = [1, 1]} : vector<2x192xf32> to vector<2x64xf32>
    %486 = vector.extract_strided_slice %466 {offsets = [0, 128], sizes = [2, 64], strides = [1, 1]} : vector<2x192xf32> to vector<2x64xf32>
    %487 = arith.mulf %476, %486 : vector<2x64xf32>
    %488 = arith.addf %485, %487 : vector<2x64xf32>
    %489 = math.tanh %488 : vector<2x64xf32>
    %cst_166 = arith.constant 1.000000e+00 : f32
    %490 = vector.broadcast %cst_166 : f32 to vector<2x64xf32>
    %491 = arith.subf %490, %484 : vector<2x64xf32>
    %492 = arith.mulf %491, %489 : vector<2x64xf32>
    %493 = arith.mulf %484, %461 : vector<2x64xf32>
    %494 = arith.addf %492, %493 : vector<2x64xf32>
    %c7_167 = arith.constant 7 : index
    %c0_168 = arith.constant 0 : index
    %c0_169 = arith.constant 0 : index
    %495 = vector.load %arg22[%c7_167, %c0_168, %c0_169] : memref<8x2x64xf32, #tpu.memory_space<vmem>>, vector<1x2x64xf32>
    %496 = vector.shape_cast %495 : vector<1x2x64xf32> to vector<2x64xf32>
    %497 = vector.shape_cast %494 : vector<2x64xf32> to vector<1x2x64xf32>
    tpu.vector_store %arg22[%c7_167, %c0_168, %c0_169], %497 {strides = array<i32>} : memref<8x2x64xf32, #tpu.memory_space<vmem>>, vector<1x2x64xf32>,
    %c0_170 = arith.constant 0 : index
    %c0_171 = arith.constant 0 : index
    %c0_172 = arith.constant 0 : index
    %498 = vector.load %arg22[%c0_170, %c0_171, %c0_172] : memref<8x2x64xf32, #tpu.memory_space<vmem>>, vector<8x2x64xf32>
    %c0_173 = arith.constant 0 : index
    %499 = memref.load %arg0[%c0_173] : memref<3xf32, #tpu.memory_space<smem>>
    %c1_174 = arith.constant 1 : index
    %500 = memref.load %arg0[%c1_174] : memref<3xf32, #tpu.memory_space<smem>>
    %c2_175 = arith.constant 2 : index
    %501 = memref.load %arg0[%c2_175] : memref<3xf32, #tpu.memory_space<smem>>
    %502 = vector.broadcast %499 : f32 to vector<8x2x64xf32>
    %503 = arith.mulf %502, %222 : vector<8x2x64xf32>
    %504 = vector.broadcast %500 : f32 to vector<8x2x64xf32>
    %505 = arith.mulf %504, %223 : vector<8x2x64xf32>
    %506 = arith.addf %503, %505 : vector<8x2x64xf32>
    %507 = vector.broadcast %501 : f32 to vector<8x2x64xf32>
    %508 = arith.mulf %507, %498 : vector<8x2x64xf32>
    %509 = arith.addf %506, %508 : vector<8x2x64xf32>
    %510 = vector.shape_cast %509 : vector<8x2x64xf32> to vector<16x64xf32>
    %c0_176 = arith.constant 0 : index
    %c0_177 = arith.constant 0 : index
    %511 = vector.load %arg17[%c0_176, %c0_177] : memref<64x32xf32, #tpu.memory_space<vmem>>, vector<64x32xf32>
    %cst_178 = arith.constant dense<0.000000e+00> : vector<16x32xf32>
    %512 = tpu.matmul %510, %511, %cst_178 {dimension_numbers = #tpu.dot_dimension_numbers<[1], [0], [0], [1], [0, 0, 1, 1], [], []>} : vector<16x64xf32>, vector<64x32xf32>, vector<16x32xf32> -> vector<16x32xf32>
    %c0_179 = arith.constant 0 : index
    %c0_180 = arith.constant 0 : index
    %513 = vector.load %arg18[%c0_179, %c0_180] : memref<1x32xf32, #tpu.memory_space<vmem>>, vector<1x32xf32>
    %514 = vector.broadcast %513 : vector<1x32xf32> to vector<16x32xf32>
    %515 = arith.addf %512, %514 : vector<16x32xf32>
    %c0_181 = arith.constant 0 : index
    %c0_182 = arith.constant 0 : index
    %516 = vector.load %arg19[%c0_181, %c0_182] : memref<16x32xf32, #tpu.memory_space<vmem>>, vector<16x32xf32>
    tpu.vector_store %arg19[%c0_181, %c0_182], %515 {strides = array<i32>} : memref<16x32xf32, #tpu.memory_space<vmem>>, vector<16x32xf32>,
    return
  }
}

</mosaic_0001>

<llo_original>
// kernel: tpu_custom_call.1
$region0: #{tpu_custom_call.1}
  #allocation0 [shape = 'u32[]', space=smem, size = 0x4, offset = 0x4, fixed_abs, tag = 'smem constant byte address 0x4 - core index']
  #allocation1 [shape = 'u32[144,128]{1,0:T(1,128)}', space=vmem, size = 0x12000, scoped, tag = 'internal scratch']
  #allocation2 [shape = 'f32[8,4,16]{2,1,0:T(4,128)}', space=vmem, size = 0x4000, scoped, tag = 'scratch operand']
  #allocation3 [shape = 'f32[8,4,16]{2,1,0:T(4,128)}', space=vmem, size = 0x4000, scoped, tag = 'scratch operand']
  #allocation4 [shape = 'f32[8,2,64]{2,1,0:T(2,128)}', space=vmem, size = 0x2000, scoped, tag = 'scratch operand']
  %s0 = inlined_call_operand.vmem [shape: f32[3], index: 0, kind: input, shape index: {}]
  %s1 = inlined_call_operand.vmem [shape: f32[8,4,64], index: 1, kind: input, shape index: {}]
  %s2 = inlined_call_operand.vmem [shape: f32[64,192], index: 2, kind: input, shape index: {}]
  %s3 = inlined_call_operand.vmem [shape: f32[64,192], index: 3, kind: input, shape index: {}]
  %s4 = inlined_call_operand.vmem [shape: f32[1,192], index: 4, kind: input, shape index: {}]
  %s5 = inlined_call_operand.vmem [shape: f32[64,16], index: 5, kind: input, shape index: {}]
  %s6 = inlined_call_operand.hbm [shape: f32[16,64], index: 6, kind: input, shape index: {}]
  %s7 = inlined_call_operand.vmem [shape: f32[1,16], index: 7, kind: input, shape index: {}]
  %s8 = inlined_call_operand.vmem [shape: f32[1,64], index: 8, kind: input, shape index: {}]
  %s9 = inlined_call_operand.vmem [shape: f32[1,64], index: 9, kind: input, shape index: {}]
  %s10 = inlined_call_operand.vmem [shape: f32[1,64], index: 10, kind: input, shape index: {}]
  %s11 = inlined_call_operand.vmem [shape: f32[64,256], index: 11, kind: input, shape index: {}]
  %s12 = inlined_call_operand.vmem [shape: f32[1,256], index: 12, kind: input, shape index: {}]
  %s13 = inlined_call_operand.vmem [shape: f32[256,64], index: 13, kind: input, shape index: {}]
  %s14 = inlined_call_operand.hbm [shape: f32[1,64], index: 14, kind: input, shape index: {}]
  %s15 = inlined_call_operand.hbm [shape: f32[1,64], index: 15, kind: input, shape index: {}]
  %s16 = inlined_call_operand.vmem [shape: f32[1,64], index: 16, kind: input, shape index: {}]
  %s17 = inlined_call_operand.vmem [shape: f32[64,32], index: 17, kind: input, shape index: {}]
  %s18 = inlined_call_operand.vmem [shape: f32[1,32], index: 18, kind: input, shape index: {}]
  %s19 = inlined_call_operand.hbm [shape: f32[16,32], index: 19, kind: output, shape index: {}]
  %s20 = sld [smem:[#allocation0]]
  $region102: #{tpu_custom_call.1} parent=0
    _
  %s22 = ssub.s32 1, %s20
  %s23 = scalar_select 0, %s22, %s20
  $region1: #{tpu_custom_call.1} parent=0
    #allocation5 [shape = 'u8[512]{0}', space=smem, size = 0x200, scoped, tag = 'input window, operand 0, single buffered']
    #allocation6 [shape = 's32[1]{0}', space=sflag, size = 0x4, scoped, tag = 'scoped memory for tpu_custom_call.1']
    #allocation7 [shape = 's32[1]{0}', space=sflag, size = 0x4, scoped, tag = 'scoped memory for tpu_custom_call.1']
    #allocation8 [shape = 's32[1]{0}', space=sflag, size = 0x4, scoped, tag = 'scoped memory for tpu_custom_call.1']
    #allocation9 [shape = 'u8[8192]{0}', space=vmem, size = 0x2000, scoped, tag = 'input window, operand 6, single buffered']
    #allocation10 [shape = 'u8[512]{0}', space=vmem, size = 0x400, scoped, tag = 'input window, operand 14, single buffered']
    #allocation11 [shape = 's32[1]{0}', space=sflag, size = 0x4, scoped, tag = 'scoped memory for tpu_custom_call.1']
    #allocation12 [shape = 'u8[512]{0}', space=vmem, size = 0x400, scoped, tag = 'input window, operand 15, single buffered']
    #allocation13 [shape = 'u8[8192]{0}', space=vmem, size = 0x2000, scoped, tag = 'output window, operand 0, single buffered']
    %24 = vsyncpa [#allocation8], 0
    %25 = vsyncpa [#allocation6], 0
    %26 = vsyncpa [#allocation11], 0
    %27 = vsyncpa [#allocation7], 0
    // Predicated region
    $region2: #{tpu_custom_call.1} parent=1 // pred_check
      _
    $region3: #{tpu_custom_call.1} parent=1 // pred_check_branch
      %29 = sbr.rel (0) target = $region5
    $region4: #{tpu_custom_call.1} parent=1 // pred_region
      %s31 = ssub.s32 16, 16
      %32 = vsyncadd [#allocation8], %s31
      %s34 = sshll.u32 %s0, 4
      %s35 = int_to_ptr.vmem [resolvable:$true] %s34
      %37 = dma.vmem_to_smem %s35, 16, [#allocation5], [#allocation8]
    $region5: #{tpu_custom_call.1} parent=1 // pred_fallthru
      _
    // Predicated region
    $region6: #{tpu_custom_call.1} parent=1 // pred_check
      _
    $region7: #{tpu_custom_call.1} parent=1 // pred_check_branch
      %39 = sbr.rel (0) target = $region9
    $region8: #{tpu_custom_call.1} parent=1 // pred_region
      _
    $region9: #{tpu_custom_call.1} parent=1 // pred_fallthru
      _
    // Predicated region
    $region10: #{tpu_custom_call.1} parent=1 // pred_check
      _
    $region11: #{tpu_custom_call.1} parent=1 // pred_check_branch
      %41 = sbr.rel (0) target = $region13
    $region12: #{tpu_custom_call.1} parent=1 // pred_region
      _
    $region13: #{tpu_custom_call.1} parent=1 // pred_fallthru
      _
    // Predicated region
    $region14: #{tpu_custom_call.1} parent=1 // pred_check
      _
    $region15: #{tpu_custom_call.1} parent=1 // pred_check_branch
      %43 = sbr.rel (0) target = $region17
    $region16: #{tpu_custom_call.1} parent=1 // pred_region
      _
    $region17: #{tpu_custom_call.1} parent=1 // pred_fallthru
      _
    // Predicated region
    $region18: #{tpu_custom_call.1} parent=1 // pred_check
      _
    $region19: #{tpu_custom_call.1} parent=1 // pred_check_branch
      %45 = sbr.rel (0) target = $region21
    $region20: #{tpu_custom_call.1} parent=1 // pred_region
      _
    $region21: #{tpu_custom_call.1} parent=1 // pred_fallthru
      _
    // Predicated region
    $region22: #{tpu_custom_call.1} parent=1 // pred_check
      _
    $region23: #{tpu_custom_call.1} parent=1 // pred_check_branch
      %47 = sbr.rel (0) target = $region25
    $region24: #{tpu_custom_call.1} parent=1 // pred_region
      _
    $region25: #{tpu_custom_call.1} parent=1 // pred_fallthru
      _
    // Predicated region
    $region26: #{tpu_custom_call.1} parent=1 // pred_check
      _
    $region27: #{tpu_custom_call.1} parent=1 // pred_check_branch
      %49 = sbr.rel (0) target = $region29
    $region28: #{tpu_custom_call.1} parent=1 // pred_region
      %s51 = ssub.s32 256, 256
      %52 = vsyncadd [#allocation6], %s51
      %s53 = sshll.u32 [#allocation9], 4
      %s54 = int_to_ptr.vmem [resolvable:$true] %s53
      %59 = dma.hbm_to_vmem [thread:$0]  %s6, 256, %s54, [#allocation6], 128, 128, 8
    $region29: #{tpu_custom_call.1} parent=1 // pred_fallthru
      _
    // Predicated region
    $region30: #{tpu_custom_call.1} parent=1 // pred_check
      _
    $region31: #{tpu_custom_call.1} parent=1 // pred_check_branch
      %61 = sbr.rel (0) target = $region33
    $region32: #{tpu_custom_call.1} parent=1 // pred_region
      _
    $region33: #{tpu_custom_call.1} parent=1 // pred_fallthru
      _
    // Predicated region
    $region34: #{tpu_custom_call.1} parent=1 // pred_check
      _
    $region35: #{tpu_custom_call.1} parent=1 // pred_check_branch
      %63 = sbr.rel (0) target = $region37
    $region36: #{tpu_custom_call.1} parent=1 // pred_region
      _
    $region37: #{tpu_custom_call.1} parent=1 // pred_fallthru
      _
    // Predicated region
    $region38: #{tpu_custom_call.1} parent=1 // pred_check
      _
    $region39: #{tpu_custom_call.1} parent=1 // pred_check_branch
      %65 = sbr.rel (0) target = $region41
    $region40: #{tpu_custom_call.1} parent=1 // pred_region
      _
    $region41: #{tpu_custom_call.1} parent=1 // pred_fallthru
      _
    // Predicated region
    $region42: #{tpu_custom_call.1} parent=1 // pred_check
      _
    $region43: #{tpu_custom_call.1} parent=1 // pred_check_branch
      %67 = sbr.rel (0) target = $region45
    $region44: #{tpu_custom_call.1} parent=1 // pred_region
      _
    $region45: #{tpu_custom_call.1} parent=1 // pred_fallthru
      _
    // Predicated region
    $region46: #{tpu_custom_call.1} parent=1 // pred_check
      _
    $region47: #{tpu_custom_call.1} parent=1 // pred_check_branch
      %69 = sbr.rel (0) target = $region49
    $region48: #{tpu_custom_call.1} parent=1 // pred_region
      _
    $region49: #{tpu_custom_call.1} parent=1 // pred_fallthru
      _
    // Predicated region
    $region50: #{tpu_custom_call.1} parent=1 // pred_check
      _
    $region51: #{tpu_custom_call.1} parent=1 // pred_check_branch
      %71 = sbr.rel (0) target = $region53
    $region52: #{tpu_custom_call.1} parent=1 // pred_region
      _
    $region53: #{tpu_custom_call.1} parent=1 // pred_fallthru
      _
    // Predicated region
    $region54: #{tpu_custom_call.1} parent=1 // pred_check
      _
    $region55: #{tpu_custom_call.1} parent=1 // pred_check_branch
      %73 = sbr.rel (0) target = $region57
    $region56: #{tpu_custom_call.1} parent=1 // pred_region
      _
    $region57: #{tpu_custom_call.1} parent=1 // pred_fallthru
      _
    // Predicated region
    $region58: #{tpu_custom_call.1} parent=1 // pred_check
      _
    $region59: #{tpu_custom_call.1} parent=1 // pred_check_branch
      %75 = sbr.rel (0) target = $region61
    $region60: #{tpu_custom_call.1} parent=1 // pred_region
      %s77 = ssub.s32 16, 16
      %78 = vsyncadd [#allocation11], %s77
      %s80 = sshll.u32 [#allocation10], 4
      %s81 = int_to_ptr.vmem [resolvable:$true] %s80
      %83 = dma.hbm_to_vmem [thread:$0]  %s14, 16, %s81, [#allocation11]
    $region61: #{tpu_custom_call.1} parent=1 // pred_fallthru
      _
    // Predicated region
    $region62: #{tpu_custom_call.1} parent=1 // pred_check
      _
    $region63: #{tpu_custom_call.1} parent=1 // pred_check_branch
      %85 = sbr.rel (0) target = $region65
    $region64: #{tpu_custom_call.1} parent=1 // pred_region
      %s87 = ssub.s32 16, 16
      %88 = vsyncadd [#allocation11], %s87
      %s90 = sshll.u32 [#allocation12], 4
      %s91 = int_to_ptr.vmem [resolvable:$true] %s90
      %93 = dma.hbm_to_vmem [thread:$0]  %s15, 16, %s91, [#allocation11]
    $region65: #{tpu_custom_call.1} parent=1 // pred_fallthru
      _
    // Predicated region
    $region66: #{tpu_custom_call.1} parent=1 // pred_check
      _
    $region67: #{tpu_custom_call.1} parent=1 // pred_check_branch
      %95 = sbr.rel (0) target = $region69
    $region68: #{tpu_custom_call.1} parent=1 // pred_region
      _
    $region69: #{tpu_custom_call.1} parent=1 // pred_fallthru
      _
    // Predicated region
    $region70: #{tpu_custom_call.1} parent=1 // pred_check
      _
    $region71: #{tpu_custom_call.1} parent=1 // pred_check_branch
      %97 = sbr.rel (0) target = $region73
    $region72: #{tpu_custom_call.1} parent=1 // pred_region
      _
    $region73: #{tpu_custom_call.1} parent=1 // pred_fallthru
      _
    // Predicated region
    $region74: #{tpu_custom_call.1} parent=1 // pred_check
      _
    $region75: #{tpu_custom_call.1} parent=1 // pred_check_branch
      %99 = sbr.rel (0) target = $region77
    $region76: #{tpu_custom_call.1} parent=1 // pred_region
      _
    $region77: #{tpu_custom_call.1} parent=1 // pred_fallthru
      _
    // Predicated region
    $region78: #{tpu_custom_call.1} parent=1 // pred_check
      _
    $region79: #{tpu_custom_call.1} parent=1 // pred_check_branch
      %101 = sbr.rel (0) target = $region81
    $region80: #{tpu_custom_call.1} parent=1 // pred_region
      %102 = dma.done [#allocation8], 16
    $region81: #{tpu_custom_call.1} parent=1 // pred_fallthru
      _
    // Predicated region
    $region82: #{tpu_custom_call.1} parent=1 // pred_check
      _
    $region83: #{tpu_custom_call.1} parent=1 // pred_check_branch
      %104 = sbr.rel (0) target = $region85
    $region84: #{tpu_custom_call.1} parent=1 // pred_region
      %105 = dma.done [#allocation6], 256
    $region85: #{tpu_custom_call.1} parent=1 // pred_fallthru
      _
    // Predicated region
    $region86: #{tpu_custom_call.1} parent=1 // pred_check
      _
    $region87: #{tpu_custom_call.1} parent=1 // pred_check_branch
      %107 = sbr.rel (0) target = $region89
    $region88: #{tpu_custom_call.1} parent=1 // pred_region
      %108 = dma.done [#allocation11], 16
    $region89: #{tpu_custom_call.1} parent=1 // pred_fallthru
      _
    // Predicated region
    $region90: #{tpu_custom_call.1} parent=1 // pred_check
      _
    $region91: #{tpu_custom_call.1} parent=1 // pred_check_branch
      %110 = sbr.rel (0) target = $region93
    $region92: #{tpu_custom_call.1} parent=1 // pred_region
      %111 = dma.done [#allocation11], 16
    $region93: #{tpu_custom_call.1} parent=1 // pred_fallthru
      _
    %112 = sfence
    %v113 = vld [vmem:[%s1] sm:$0xf]
    %v114 = vld [vmem:[%s1 + $0x4] sm:$0xf]
    %v115 = vld [vmem:[%s1 + $0x8] sm:$0xf]
    %v116 = vld [vmem:[%s1 + $0xc] sm:$0xf]
    %v117 = vld [vmem:[%s1 + $0x10] sm:$0xf]
    %v118 = vld [vmem:[%s1 + $0x14] sm:$0xf]
    %v119 = vld [vmem:[%s1 + $0x18] sm:$0xf]
    %v120 = vld [vmem:[%s1 + $0x1c] sm:$0xf]
    %v121 = vld [vmem:[%s5] sm:$0xff]
    %v122 = vld [vmem:[%s5 + $0x8] sm:$0xff]
    %v123 = vld [vmem:[%s5 + $0x10] sm:$0xff]
    %v124 = vld [vmem:[%s5 + $0x18] sm:$0xff]
    %v125 = vld [vmem:[%s5 + $0x20] sm:$0xff]
    %v126 = vld [vmem:[%s5 + $0x28] sm:$0xff]
    %v127 = vld [vmem:[%s5 + $0x30] sm:$0xff]
    %v128 = vld [vmem:[%s5 + $0x38] sm:$0xff]
    %v137 = vcombine.low %v113, %v114
    %v138 = vcombine.low %v115, %v116
    %v139 = vcombine.low %v117, %v118
    %v140 = vcombine.low %v119, %v120
    %vm141 = vcmask 523264
    %v142 = vsel %vm141, %v137, 0
    %v144 = vsel %vm141, %v138, 0
    %v146 = vsel %vm141, %v139, 0
    %v148 = vsel %vm141, %v140, 0
    %150 = vmatprep.subr.mxu0 0.0
    %151 = vmatpush1.msra.mxu0 0.0
    %152 = vmatprep.subr.mxu0 0.0
    %153 = vmatpush1.msra.mxu0 0.0
    %154 = vmatprep.subr.mxu0 0.0
    %155 = vmatpush1.msra.mxu0 0.0
    %156 = vmatprep.subr.mxu0 0.0
    %157 = vmatpush1.msra.mxu0 0.0
    %158 = vmatprep.subr.mxu0 0.0
    %159 = vmatpush1.msra.mxu0 0.0
    %160 = vmatprep.subr.mxu0 0.0
    %161 = vmatpush1.msra.mxu0 0.0
    %162 = vmatprep.subr.mxu0 0.0
    %163 = vmatpush1.msra.mxu0 0.0
    %164 = vmatprep.subr.mxu0 0.0
    %165 = vmatpush1.msra.mxu0 0.0
    %166 = vmatprep.subr.mxu0 0.0
    %167 = vmatpush1.msra.mxu0 %v128
    %168 = vmatprep.subr.mxu0 0.0
    %169 = vmatpush1.msra.mxu0 %v127
    %170 = vmatprep.subr.mxu0 0.0
    %171 = vmatpush1.msra.mxu0 %v126
    %172 = vmatprep.subr.mxu0 0.0
    %173 = vmatpush1.msra.mxu0 %v125
    %174 = vmatprep.subr.mxu0 0.0
    %175 = vmatpush1.msra.mxu0 %v124
    %176 = vmatprep.subr.mxu0 0.0
    %177 = vmatpush1.msra.mxu0 %v123
    %178 = vmatprep.subr.mxu0 0.0
    %179 = vmatpush1.msra.mxu0 %v122
    %180 = vmatprep.subr.mxu0 0.0
    %181 = vmatpush1.msra.mxu0 %v121
    %182 = vmatprep.subr.mxu0 0.0
    %183 = vmatpush2.msra.mxu0 0.0
    %184 = vmatprep.subr.mxu0 0.0
    %185 = vmatpush2.msra.mxu0 0.0
    %186 = vmatprep.subr.mxu0 0.0
    %187 = vmatpush2.msra.mxu0 0.0
    %188 = vmatprep.subr.mxu0 0.0
    %189 = vmatpush2.msra.mxu0 0.0
    %190 = vmatprep.subr.mxu0 0.0
    %191 = vmatpush2.msra.mxu0 0.0
    %192 = vmatprep.subr.mxu0 0.0
    %193 = vmatpush2.msra.mxu0 0.0
    %194 = vmatprep.subr.mxu0 0.0
    %195 = vmatpush2.msra.mxu0 0.0
    %196 = vmatprep.subr.mxu0 0.0
    %197 = vmatpush2.msra.mxu0 0.0
    %198 = vmatprep.subr.mxu0 0.0
    %199 = vmatpush2.msra.mxu0 0.0
    %200 = vmatprep.subr.mxu0 0.0
    %201 = vmatpush2.msra.mxu0 0.0
    %202 = vmatprep.subr.mxu0 0.0
    %203 = vmatpush2.msra.mxu0 0.0
    %204 = vmatprep.subr.mxu0 0.0
    %205 = vmatpush2.msra.mxu0 0.0
    %206 = vmatprep.subr.mxu0 0.0
    %207 = vmatpush2.msra.mxu0 0.0
    %208 = vmatprep.subr.mxu0 0.0
    %209 = vmatpush2.msra.mxu0 0.0
    %210 = vmatprep.subr.mxu0 0.0
    %211 = vmatpush2.msra.mxu0 0.0
    %212 = vmatprep.subr.mxu0 0.0
    %213 = vmatpush2.msra.mxu0 0.0
    %214 = vmatprep.mubr.f32.mxu0 0.0
    %215 = vmatmul.mubr.f32.gmra.mxu0 %v142
    %v216 = vpop.f32.mrf.mxu0
    %v217 = vadd.f32 0.0, %v216
    %v218 = vpop.f32.mrf.mxu0
    %219 = vmatprep.mubr.f32.mxu0 0.0
    %220 = vmatmul.mubr.f32.gmra.mxu0 %v144
    %v221 = vpop.f32.mrf.mxu0
    %v222 = vadd.f32 0.0, %v221
    %v223 = vpop.f32.mrf.mxu0
    %224 = vmatprep.mubr.f32.mxu0 0.0
    %225 = vmatmul.mubr.f32.gmra.mxu0 %v146
    %v226 = vpop.f32.mrf.mxu0
    %v227 = vadd.f32 0.0, %v226
    %v228 = vpop.f32.mrf.mxu0
    %229 = vmatprep.mubr.f32.mxu0 0.0
    %230 = vmatmul.mubr.f32.gmra.mxu0 %v148
    %v231 = vpop.f32.mrf.mxu0
    %v232 = vadd.f32 0.0, %v231
    %v233 = vpop.f32.mrf.mxu0
    %234 = vdwg.mxu0
    %v239 = vcombine.high %v217, %v217
    %v240 = vcombine.high %v222, %v222
    %v241 = vcombine.high %v227, %v227
    %v242 = vcombine.high %v232, %v232
    %v247 = vld [vmem:[%s8] sm:$0x1]
    %v249 = vlaneseq
    %v250 = vshrl.u32 %v249, 7
    %v251 = vsub.s32 0, %v250
    %v252 = vrot.slane %v247, %v251
    %v254 = vmul.f32 %v252, %v113
    %v255 = vmul.f32 %v252, %v114
    %v256 = vmul.f32 %v252, %v115
    %v257 = vmul.f32 %v252, %v116
    %v258 = vmul.f32 %v252, %v117
    %v259 = vmul.f32 %v252, %v118
    %v260 = vmul.f32 %v252, %v119
    %v261 = vmul.f32 %v252, %v120
    %v262 = vld [vmem:[%s7] sm:$0x1]
    %v264 = vlaneseq
    %v265 = vshrl.u32 %v264, 7
    %v266 = vsub.s32 0, %v265
    %v267 = vrot.slane %v262, %v266
    %v269 = vmul.f32 %v267, 0.0
    %v270 = vadd.f32 %v269, %v217
    %vm271 = vcmask 125952
    %272 = vst.msk [vmem:[#allocation2] sm:$0xf] %vm271, %v270
    %v273 = vmul.f32 %v267, %v270
    %v274 = vadd.f32 %v273, %v239
    %s275 = scalar_lea.vmem [#allocation2], 4
    %276 = vst.msk [vmem:[%s275] sm:$0xf] %vm271, %v274
    %v277 = vmul.f32 %v267, %v274
    %v278 = vadd.f32 %v277, %v222
    %s279 = scalar_lea.vmem [#allocation2], 8
    %280 = vst.msk [vmem:[%s279] sm:$0xf] %vm271, %v278
    %v281 = vmul.f32 %v267, %v278
    %v282 = vadd.f32 %v281, %v240
    %s283 = scalar_lea.vmem [#allocation2], 12
    %284 = vst.msk [vmem:[%s283] sm:$0xf] %vm271, %v282
    %v285 = vmul.f32 %v267, %v282
    %v286 = vadd.f32 %v285, %v227
    %s287 = scalar_lea.vmem [#allocation2], 16
    %288 = vst.msk [vmem:[%s287] sm:$0xf] %vm271, %v286
    %v289 = vmul.f32 %v267, %v286
    %v290 = vadd.f32 %v289, %v241
    %s291 = scalar_lea.vmem [#allocation2], 20
    %292 = vst.msk [vmem:[%s291] sm:$0xf] %vm271, %v290
    %v293 = vmul.f32 %v267, %v290
    %v294 = vadd.f32 %v293, %v232
    %s295 = scalar_lea.vmem [#allocation2], 24
    %296 = vst.msk [vmem:[%s295] sm:$0xf] %vm271, %v294
    %v297 = vmul.f32 %v267, %v294
    %v298 = vadd.f32 %v297, %v242
    %s299 = scalar_lea.vmem [#allocation2], 28
    %300 = vst.msk [vmem:[%s299] sm:$0xf] %vm271, %v298
    %v301 = vadd.f32 %v269, %v242
    %s302 = scalar_lea.vmem [#allocation3], 28
    %303 = vst.msk [vmem:[%s302] sm:$0xf] %vm271, %v301
    %v304 = vmul.f32 %v267, %v301
    %v305 = vadd.f32 %v304, %v232
    %s306 = scalar_lea.vmem [#allocation3], 24
    %307 = vst.msk [vmem:[%s306] sm:$0xf] %vm271, %v305
    %v308 = vmul.f32 %v267, %v305
    %v309 = vadd.f32 %v308, %v241
    %s310 = scalar_lea.vmem [#allocation3], 20
    %311 = vst.msk [vmem:[%s310] sm:$0xf] %vm271, %v309
    %v312 = vmul.f32 %v267, %v309
    %v313 = vadd.f32 %v312, %v227
    %s314 = scalar_lea.vmem [#allocation3], 16
    %315 = vst.msk [vmem:[%s314] sm:$0xf] %vm271, %v313
    %v316 = vmul.f32 %v267, %v313
    %v317 = vadd.f32 %v316, %v240
    %s318 = scalar_lea.vmem [#allocation3], 12
    %319 = vst.msk [vmem:[%s318] sm:$0xf] %vm271, %v317
    %v320 = vmul.f32 %v267, %v317
    %v321 = vadd.f32 %v320, %v222
    %s322 = scalar_lea.vmem [#allocation3], 8
    %323 = vst.msk [vmem:[%s322] sm:$0xf] %vm271, %v321
    %v324 = vmul.f32 %v267, %v321
    %v325 = vadd.f32 %v324, %v239
    %s326 = scalar_lea.vmem [#allocation3], 4
    %327 = vst.msk [vmem:[%s326] sm:$0xf] %vm271, %v325
    %v328 = vmul.f32 %v267, %v325
    %v329 = vadd.f32 %v328, %v217
    %330 = vst.msk [vmem:[#allocation3] sm:$0xf] %vm271, %v329
    %v331 = vld [vmem:[#allocation2] sm:$0xf]
    %v332 = vld [vmem:[#allocation2 + $0x4] sm:$0xf]
    %v333 = vld [vmem:[#allocation2 + $0x8] sm:$0xf]
    %v334 = vld [vmem:[#allocation2 + $0xc] sm:$0xf]
    %v335 = vld [vmem:[#allocation2 + $0x10] sm:$0xf]
    %v336 = vld [vmem:[#allocation2 + $0x14] sm:$0xf]
    %v337 = vld [vmem:[#allocation2 + $0x18] sm:$0xf]
    %v338 = vld [vmem:[#allocation2 + $0x1c] sm:$0xf]
    %v339 = vld [vmem:[#allocation3] sm:$0xf]
    %v340 = vld [vmem:[#allocation3 + $0x4] sm:$0xf]
    %v341 = vld [vmem:[#allocation3 + $0x8] sm:$0xf]
    %v342 = vld [vmem:[#allocation3 + $0xc] sm:$0xf]
    %v343 = vld [vmem:[#allocation3 + $0x10] sm:$0xf]
    %v344 = vld [vmem:[#allocation3 + $0x14] sm:$0xf]
    %v345 = vld [vmem:[#allocation3 + $0x18] sm:$0xf]
    %v346 = vld [vmem:[#allocation3 + $0x1c] sm:$0xf]
    %v347 = vadd.f32 %v331, %v339
    %v348 = vadd.f32 %v332, %v340
    %v349 = vadd.f32 %v333, %v341
    %v350 = vadd.f32 %v334, %v342
    %v351 = vadd.f32 %v335, %v343
    %v352 = vadd.f32 %v336, %v344
    %v353 = vadd.f32 %v337, %v345
    %v354 = vadd.f32 %v338, %v346
    %v355 = vld [vmem:[#allocation9] sm:$0xff]
    %v356 = vld [vmem:[#allocation9 + $0x8] sm:$0xff]
    %v365 = vcombine.low %v347, %v348
    %v366 = vcombine.low %v349, %v350
    %v367 = vcombine.low %v351, %v352
    %v368 = vcombine.low %v353, %v354
    %vm369 = vcmask 130048
    %v370 = vsel %vm369, %v365, 0
    %v372 = vsel %vm369, %v366, 0
    %v374 = vsel %vm369, %v367, 0
    %v376 = vsel %vm369, %v368, 0
    %378 = vmatprep.subr.mxu0 0.0
    %379 = vmatpush1.msra.mxu0 0.0
    %380 = vmatprep.subr.mxu0 0.0
    %381 = vmatpush1.msra.mxu0 0.0
    %382 = vmatprep.subr.mxu0 0.0
    %383 = vmatpush1.msra.mxu0 0.0
    %384 = vmatprep.subr.mxu0 0.0
    %385 = vmatpush1.msra.mxu0 0.0
    %386 = vmatprep.subr.mxu0 0.0
    %387 = vmatpush1.msra.mxu0 0.0
    %388 = vmatprep.subr.mxu0 0.0
    %389 = vmatpush1.msra.mxu0 0.0
    %390 = vmatprep.subr.mxu0 0.0
    %391 = vmatpush1.msra.mxu0 0.0
    %392 = vmatprep.subr.mxu0 0.0
    %393 = vmatpush1.msra.mxu0 0.0
    %394 = vmatprep.subr.mxu0 0.0
    %395 = vmatpush1.msra.mxu0 0.0
    %396 = vmatprep.subr.mxu0 0.0
    %397 = vmatpush1.msra.mxu0 0.0
    %398 = vmatprep.subr.mxu0 0.0
    %399 = vmatpush1.msra.mxu0 0.0
    %400 = vmatprep.subr.mxu0 0.0
    %401 = vmatpush1.msra.mxu0 0.0
    %402 = vmatprep.subr.mxu0 0.0
    %403 = vmatpush1.msra.mxu0 0.0
    %404 = vmatprep.subr.mxu0 0.0
    %405 = vmatpush1.msra.mxu0 0.0
    %406 = vmatprep.subr.mxu0 0.0
    %407 = vmatpush1.msra.mxu0 %v356
    %408 = vmatprep.subr.mxu0 0.0
    %409 = vmatpush1.msra.mxu0 %v355
    %410 = vmatprep.subr.mxu0 0.0
    %411 = vmatpush2.msra.mxu0 0.0
    %412 = vmatprep.subr.mxu0 0.0
    %413 = vmatpush2.msra.mxu0 0.0
    %414 = vmatprep.subr.mxu0 0.0
    %415 = vmatpush2.msra.mxu0 0.0
    %416 = vmatprep.subr.mxu0 0.0
    %417 = vmatpush2.msra.mxu0 0.0
    %418 = vmatprep.subr.mxu0 0.0
    %419 = vmatpush2.msra.mxu0 0.0
    %420 = vmatprep.subr.mxu0 0.0
    %421 = vmatpush2.msra.mxu0 0.0
    %422 = vmatprep.subr.mxu0 0.0
    %423 = vmatpush2.msra.mxu0 0.0
    %424 = vmatprep.subr.mxu0 0.0
    %425 = vmatpush2.msra.mxu0 0.0
    %426 = vmatprep.subr.mxu0 0.0
    %427 = vmatpush2.msra.mxu0 0.0
    %428 = vmatprep.subr.mxu0 0.0
    %429 = vmatpush2.msra.mxu0 0.0
    %430 = vmatprep.subr.mxu0 0.0
    %431 = vmatpush2.msra.mxu0 0.0
    %432 = vmatprep.subr.mxu0 0.0
    %433 = vmatpush2.msra.mxu0 0.0
    %434 = vmatprep.subr.mxu0 0.0
    %435 = vmatpush2.msra.mxu0 0.0
    %436 = vmatprep.subr.mxu0 0.0
    %437 = vmatpush2.msra.mxu0 0.0
    %438 = vmatprep.subr.mxu0 0.0
    %439 = vmatpush2.msra.mxu0 0.0
    %440 = vmatprep.subr.mxu0 0.0
    %441 = vmatpush2.msra.mxu0 0.0
    %442 = vmatprep.mubr.f32.mxu0 0.0
    %443 = vmatmul.mubr.f32.gmra.mxu0 %v370
    %v444 = vpop.f32.mrf.mxu0
    %v445 = vadd.f32 0.0, %v444
    %v446 = vpop.f32.mrf.mxu0
    %447 = vmatprep.mubr.f32.mxu0 0.0
    %448 = vmatmul.mubr.f32.gmra.mxu0 %v372
    %v449 = vpop.f32.mrf.mxu0
    %v450 = vadd.f32 0.0, %v449
    %v451 = vpop.f32.mrf.mxu0
    %452 = vmatprep.mubr.f32.mxu0 0.0
    %453 = vmatmul.mubr.f32.gmra.mxu0 %v374
    %v454 = vpop.f32.mrf.mxu0
    %v455 = vadd.f32 0.0, %v454
    %v456 = vpop.f32.mrf.mxu0
    %457 = vmatprep.mubr.f32.mxu0 0.0
    %458 = vmatmul.mubr.f32.gmra.mxu0 %v376
    %v459 = vpop.f32.mrf.mxu0
    %v460 = vadd.f32 0.0, %v459
    %v461 = vpop.f32.mrf.mxu0
    %462 = vdwg.mxu0
    %v467 = vcombine.high %v445, %v445
    %v468 = vcombine.high %v450, %v450
    %v469 = vcombine.high %v455, %v455
    %v470 = vcombine.high %v460, %v460
    %v475 = vadd.f32 %v445, %v254
    %v476 = vadd.f32 %v467, %v255
    %v477 = vadd.f32 %v450, %v256
    %v478 = vadd.f32 %v468, %v257
    %v479 = vadd.f32 %v455, %v258
    %v480 = vadd.f32 %v469, %v259
    %v481 = vadd.f32 %v460, %v260
    %v482 = vadd.f32 %v470, %v261
    %v483 = vld [vmem:[%s9] sm:$0x1]
    %v484 = vld [vmem:[%s10] sm:$0x1]
    %v493 = vcombine.low %v475, %v476
    %v494 = vcombine.low %v477, %v478
    %v495 = vcombine.low %v479, %v480
    %v496 = vcombine.low %v481, %v482
    %v501 = vsel %vm141, %v493, 0.0
    %502 = vadd.xlane.f32.xlu0 %v501
    %v503 = vpop.xlane.xlu0 %502
    %v504 = vsel %vm141, %v494, 0.0
    %505 = vadd.xlane.f32.xlu0 %v504
    %v506 = vpop.xlane.xlu0 %505
    %v507 = vsel %vm141, %v495, 0.0
    %508 = vadd.xlane.f32.xlu0 %v507
    %v509 = vpop.xlane.xlu0 %508
    %v510 = vsel %vm141, %v496, 0.0
    %511 = vadd.xlane.f32.xlu0 %v510
    %v512 = vpop.xlane.xlu0 %511
    %v513 = vrcp.pop 64.0
    %v514 = vmul.f32 %v503, %v513
    %v515 = vmul.f32 %v506, %v513
    %v516 = vmul.f32 %v509, %v513
    %v517 = vmul.f32 %v512, %v513
    %v523 = vunpack.c.l.s4 839922192
    %v524 = vunpack.c.0.s8 %v523
    %v525 = vlaneseq
    %v526 = vshrl.u32 %v525, 7
    %v527 = vsub.s32 %v524, %v526
    %v528 = vrot.slane %v514, %v527
    %v530 = vunpack.c.l.s4 1985246804
    %v531 = vunpack.c.0.s8 %v530
    %v532 = vlaneseq
    %v533 = vshrl.u32 %v532, 7
    %v534 = vsub.s32 %v531, %v533
    %v535 = vrot.slane %v514, %v534
    %v537 = vunpack.c.l.s4 839922192
    %v538 = vunpack.c.0.s8 %v537
    %v539 = vlaneseq
    %v540 = vshrl.u32 %v539, 7
    %v541 = vsub.s32 %v538, %v540
    %v542 = vrot.slane %v515, %v541
    %v544 = vunpack.c.l.s4 1985246804
    %v545 = vunpack.c.0.s8 %v544
    %v546 = vlaneseq
    %v547 = vshrl.u32 %v546, 7
    %v548 = vsub.s32 %v545, %v547
    %v549 = vrot.slane %v515, %v548
    %v551 = vunpack.c.l.s4 839922192
    %v552 = vunpack.c.0.s8 %v551
    %v553 = vlaneseq
    %v554 = vshrl.u32 %v553, 7
    %v555 = vsub.s32 %v552, %v554
    %v556 = vrot.slane %v516, %v555
    %v558 = vunpack.c.l.s4 1985246804
    %v559 = vunpack.c.0.s8 %v558
    %v560 = vlaneseq
    %v561 = vshrl.u32 %v560, 7
    %v562 = vsub.s32 %v559, %v561
    %v563 = vrot.slane %v516, %v562
    %v565 = vunpack.c.l.s4 839922192
    %v566 = vunpack.c.0.s8 %v565
    %v567 = vlaneseq
    %v568 = vshrl.u32 %v567, 7
    %v569 = vsub.s32 %v566, %v568
    %v570 = vrot.slane %v517, %v569
    %v572 = vunpack.c.l.s4 1985246804
    %v573 = vunpack.c.0.s8 %v572
    %v574 = vlaneseq
    %v575 = vshrl.u32 %v574, 7
    %v576 = vsub.s32 %v573, %v575
    %v577 = vrot.slane %v517, %v576
    %v586 = vsub.f32 %v475, %v528
    %v587 = vsub.f32 %v476, %v535
    %v588 = vsub.f32 %v477, %v542
    %v589 = vsub.f32 %v478, %v549
    %v590 = vsub.f32 %v479, %v556
    %v591 = vsub.f32 %v480, %v563
    %v592 = vsub.f32 %v481, %v570
    %v593 = vsub.f32 %v482, %v577
    %v594 = vmul.f32 %v586, %v586
    %v595 = vmul.f32 %v587, %v587
    %v596 = vmul.f32 %v588, %v588
    %v597 = vmul.f32 %v589, %v589
    %v598 = vmul.f32 %v590, %v590
    %v599 = vmul.f32 %v591, %v591
    %v600 = vmul.f32 %v592, %v592
    %v601 = vmul.f32 %v593, %v593
    %v610 = vcombine.low %v594, %v595
    %v611 = vcombine.low %v596, %v597
    %v612 = vcombine.low %v598, %v599
    %v613 = vcombine.low %v600, %v601
    %v618 = vsel %vm141, %v610, 0.0
    %619 = vadd.xlane.f32.xlu0 %v618
    %v620 = vpop.xlane.xlu0 %619
    %v621 = vsel %vm141, %v611, 0.0
    %622 = vadd.xlane.f32.xlu0 %v621
    %v623 = vpop.xlane.xlu0 %622
    %v624 = vsel %vm141, %v612, 0.0
    %625 = vadd.xlane.f32.xlu0 %v624
    %v626 = vpop.xlane.xlu0 %625
    %v627 = vsel %vm141, %v613, 0.0
    %628 = vadd.xlane.f32.xlu0 %v627
    %v629 = vpop.xlane.xlu0 %628
    %v630 = vmul.f32 %v620, %v513
    %v631 = vmul.f32 %v623, %v513
    %v632 = vmul.f32 %v626, %v513
    %v633 = vmul.f32 %v629, %v513
    %v634 = vadd.f32 %v630, 1e-12
    %v635 = vadd.f32 %v631, 1e-12
    %v636 = vadd.f32 %v632, 1e-12
    %v637 = vadd.f32 %v633, 1e-12
    %v638 = vrsqrt.pop %v634
    %v639 = vrsqrt.pop %v635
    %v640 = vrsqrt.pop %v636
    %v641 = vrsqrt.pop %v637
    %v647 = vunpack.c.l.s4 839922192
    %v648 = vunpack.c.0.s8 %v647
    %v649 = vlaneseq
    %v650 = vshrl.u32 %v649, 7
    %v651 = vsub.s32 %v648, %v650
    %v652 = vrot.slane %v638, %v651
    %v654 = vunpack.c.l.s4 1985246804
    %v655 = vunpack.c.0.s8 %v654
    %v656 = vlaneseq
    %v657 = vshrl.u32 %v656, 7
    %v658 = vsub.s32 %v655, %v657
    %v659 = vrot.slane %v638, %v658
    %v661 = vunpack.c.l.s4 839922192
    %v662 = vunpack.c.0.s8 %v661
    %v663 = vlaneseq
    %v664 = vshrl.u32 %v663, 7
    %v665 = vsub.s32 %v662, %v664
    %v666 = vrot.slane %v639, %v665
    %v668 = vunpack.c.l.s4 1985246804
    %v669 = vunpack.c.0.s8 %v668
    %v670 = vlaneseq
    %v671 = vshrl.u32 %v670, 7
    %v672 = vsub.s32 %v669, %v671
    %v673 = vrot.slane %v639, %v672
    %v675 = vunpack.c.l.s4 839922192
    %v676 = vunpack.c.0.s8 %v675
    %v677 = vlaneseq
    %v678 = vshrl.u32 %v677, 7
    %v679 = vsub.s32 %v676, %v678
    %v680 = vrot.slane %v640, %v679
    %v682 = vunpack.c.l.s4 1985246804
    %v683 = vunpack.c.0.s8 %v682
    %v684 = vlaneseq
    %v685 = vshrl.u32 %v684, 7
    %v686 = vsub.s32 %v683, %v685
    %v687 = vrot.slane %v640, %v686
    %v689 = vunpack.c.l.s4 839922192
    %v690 = vunpack.c.0.s8 %v689
    %v691 = vlaneseq
    %v692 = vshrl.u32 %v691, 7
    %v693 = vsub.s32 %v690, %v692
    %v694 = vrot.slane %v641, %v693
    %v696 = vunpack.c.l.s4 1985246804
    %v697 = vunpack.c.0.s8 %v696
    %v698 = vlaneseq
    %v699 = vshrl.u32 %v698, 7
    %v700 = vsub.s32 %v697, %v699
    %v701 = vrot.slane %v641, %v700
    %v710 = vmul.f32 %v586, %v652
    %v711 = vmul.f32 %v587, %v659
    %v712 = vmul.f32 %v588, %v666
    %v713 = vmul.f32 %v589, %v673
    %v714 = vmul.f32 %v590, %v680
    %v715 = vmul.f32 %v591, %v687
    %v716 = vmul.f32 %v592, %v694
    %v717 = vmul.f32 %v593, %v701
    %v719 = vlaneseq
    %v720 = vshrl.u32 %v719, 7
    %v721 = vsub.s32 0, %v720
    %v722 = vrot.slane %v483, %v721
    %v724 = vcombine.high %v722, %v722
    %v726 = vmul.f32 %v710, %v722
    %v727 = vmul.f32 %v711, %v724
    %v728 = vmul.f32 %v712, %v722
    %v729 = vmul.f32 %v713, %v724
    %v730 = vmul.f32 %v714, %v722
    %v731 = vmul.f32 %v715, %v724
    %v732 = vmul.f32 %v716, %v722
    %v733 = vmul.f32 %v717, %v724
    %v735 = vlaneseq
    %v736 = vshrl.u32 %v735, 7
    %v737 = vsub.s32 0, %v736
    %v738 = vrot.slane %v484, %v737
    %v740 = vcombine.high %v738, %v738
    %v742 = vadd.f32 %v726, %v738
    %v743 = vadd.f32 %v727, %v740
    %v744 = vadd.f32 %v728, %v738
    %v745 = vadd.f32 %v729, %v740
    %v746 = vadd.f32 %v730, %v738
    %v747 = vadd.f32 %v731, %v740
    %v748 = vadd.f32 %v732, %v738
    %v749 = vadd.f32 %v733, %v740
    %v750 = vld [vmem:[%s11] sm:$0xff]
    %v751 = vld [vmem:[%s11 + $0x8] sm:$0xff]
    %v752 = vld [vmem:[%s11 + $0x10] sm:$0xff]
    %v753 = vld [vmem:[%s11 + $0x18] sm:$0xff]
    %v754 = vld [vmem:[%s11 + $0x20] sm:$0xff]
    %v755 = vld [vmem:[%s11 + $0x28] sm:$0xff]
    %v756 = vld [vmem:[%s11 + $0x30] sm:$0xff]
    %v757 = vld [vmem:[%s11 + $0x38] sm:$0xff]
    %v758 = vld [vmem:[%s11 + $0x40] sm:$0xff]
    %v759 = vld [vmem:[%s11 + $0x48] sm:$0xff]
    %v760 = vld [vmem:[%s11 + $0x50] sm:$0xff]
    %v761 = vld [vmem:[%s11 + $0x58] sm:$0xff]
    %v762 = vld [vmem:[%s11 + $0x60] sm:$0xff]
    %v763 = vld [vmem:[%s11 + $0x68] sm:$0xff]
    %v764 = vld [vmem:[%s11 + $0x70] sm:$0xff]
    %v765 = vld [vmem:[%s11 + $0x78] sm:$0xff]
    %v766 = vld [vmem:[%s12] sm:$0x3]
    %v768 = vlaneseq
    %v769 = vshrl.u32 %v768, 7
    %v770 = vsub.s32 0, %v769
    %v771 = vrot.slane %v766, %v770
    %v772 = vlaneseq
    %v773 = vshrl.u32 %v772, 7
    %v774 = vsub.s32 1, %v773
    %v775 = vrot.slane %v766, %v774
    %v786 = vcombine.low %v742, %v743
    %v787 = vcombine.low %v744, %v745
    %v788 = vcombine.low %v746, %v747
    %v789 = vcombine.low %v748, %v749
    %v790 = vsel %vm141, %v786, 0
    %v792 = vsel %vm141, %v787, 0
    %v794 = vsel %vm141, %v788, 0
    %v796 = vsel %vm141, %v789, 0
    %798 = vmatprep.subr.mxu0 0.0
    %799 = vmatpush1.msra.mxu0 0.0
    %800 = vmatprep.subr.mxu0 0.0
    %801 = vmatpush1.msra.mxu0 0.0
    %802 = vmatprep.subr.mxu0 0.0
    %803 = vmatpush1.msra.mxu0 0.0
    %804 = vmatprep.subr.mxu0 0.0
    %805 = vmatpush1.msra.mxu0 0.0
    %806 = vmatprep.subr.mxu0 0.0
    %807 = vmatpush1.msra.mxu0 0.0
    %808 = vmatprep.subr.mxu0 0.0
    %809 = vmatpush1.msra.mxu0 0.0
    %810 = vmatprep.subr.mxu0 0.0
    %811 = vmatpush1.msra.mxu0 0.0
    %812 = vmatprep.subr.mxu0 0.0
    %813 = vmatpush1.msra.mxu0 0.0
    %814 = vmatprep.subr.mxu0 %v765
    %815 = vmatpush1.msra.mxu0 %v764
    %816 = vmatprep.subr.mxu0 %v763
    %817 = vmatpush1.msra.mxu0 %v762
    %818 = vmatprep.subr.mxu0 %v761
    %819 = vmatpush1.msra.mxu0 %v760
    %820 = vmatprep.subr.mxu0 %v759
    %821 = vmatpush1.msra.mxu0 %v758
    %822 = vmatprep.subr.mxu0 %v757
    %823 = vmatpush1.msra.mxu0 %v756
    %824 = vmatprep.subr.mxu0 %v755
    %825 = vmatpush1.msra.mxu0 %v754
    %826 = vmatprep.subr.mxu0 %v753
    %827 = vmatpush1.msra.mxu0 %v752
    %828 = vmatprep.subr.mxu0 %v751
    %829 = vmatpush1.msra.mxu0 %v750
    %830 = vmatprep.subr.mxu0 0.0
    %831 = vmatpush2.msra.mxu0 0.0
    %832 = vmatprep.subr.mxu0 0.0
    %833 = vmatpush2.msra.mxu0 0.0
    %834 = vmatprep.subr.mxu0 0.0
    %835 = vmatpush2.msra.mxu0 0.0
    %836 = vmatprep.subr.mxu0 0.0
    %837 = vmatpush2.msra.mxu0 0.0
    %838 = vmatprep.subr.mxu0 0.0
    %839 = vmatpush2.msra.mxu0 0.0
    %840 = vmatprep.subr.mxu0 0.0
    %841 = vmatpush2.msra.mxu0 0.0
    %842 = vmatprep.subr.mxu0 0.0
    %843 = vmatpush2.msra.mxu0 0.0
    %844 = vmatprep.subr.mxu0 0.0
    %845 = vmatpush2.msra.mxu0 0.0
    %846 = vmatprep.subr.mxu0 0.0
    %847 = vmatpush2.msra.mxu0 0.0
    %848 = vmatprep.subr.mxu0 0.0
    %849 = vmatpush2.msra.mxu0 0.0
    %850 = vmatprep.subr.mxu0 0.0
    %851 = vmatpush2.msra.mxu0 0.0
    %852 = vmatprep.subr.mxu0 0.0
    %853 = vmatpush2.msra.mxu0 0.0
    %854 = vmatprep.subr.mxu0 0.0
    %855 = vmatpush2.msra.mxu0 0.0
    %856 = vmatprep.subr.mxu0 0.0
    %857 = vmatpush2.msra.mxu0 0.0
    %858 = vmatprep.subr.mxu0 0.0
    %859 = vmatpush2.msra.mxu0 0.0
    %860 = vmatprep.subr.mxu0 0.0
    %861 = vmatpush2.msra.mxu0 0.0
    %862 = vmatprep.mubr.f32.mxu0 0.0
    %863 = vmatmul.mubr.f32.gmra.mxu0 %v790
    %v864 = vpop.f32.mrf.mxu0
    %v865 = vadd.f32 %v771, %v864
    %v866 = vpop.f32.mrf.mxu0
    %v867 = vadd.f32 %v775, %v866
    %868 = vmatprep.mubr.f32.mxu0 0.0
    %869 = vmatmul.mubr.f32.gmra.mxu0 %v792
    %v870 = vpop.f32.mrf.mxu0
    %v871 = vadd.f32 %v771, %v870
    %v872 = vpop.f32.mrf.mxu0
    %v873 = vadd.f32 %v775, %v872
    %874 = vmatprep.mubr.f32.mxu0 0.0
    %875 = vmatmul.mubr.f32.gmra.mxu0 %v794
    %v876 = vpop.f32.mrf.mxu0
    %v877 = vadd.f32 %v771, %v876
    %v878 = vpop.f32.mrf.mxu0
    %v879 = vadd.f32 %v775, %v878
    %880 = vmatprep.mubr.f32.mxu0 0.0
    %881 = vmatmul.mubr.f32.gmra.mxu0 %v796
    %v882 = vpop.f32.mrf.mxu0
    %v883 = vadd.f32 %v771, %v882
    %v884 = vpop.f32.mrf.mxu0
    %v885 = vadd.f32 %v775, %v884
    %886 = vdwg.mxu0
    %v887 = vmul.f32 %v865, %v865
    %v888 = vmul.f32 %v867, %v867
    %v889 = vmul.f32 %v871, %v871
    %v890 = vmul.f32 %v873, %v873
    %v891 = vmul.f32 %v877, %v877
    %v892 = vmul.f32 %v879, %v879
    %v893 = vmul.f32 %v883, %v883
    %v894 = vmul.f32 %v885, %v885
    %v895 = vmul.f32 %v865, %v887
    %v896 = vmul.f32 %v867, %v888
    %v897 = vmul.f32 %v871, %v889
    %v898 = vmul.f32 %v873, %v890
    %v899 = vmul.f32 %v877, %v891
    %v900 = vmul.f32 %v879, %v892
    %v901 = vmul.f32 %v883, %v893
    %v902 = vmul.f32 %v885, %v894
    %v903 = vmul.f32 %v895, 0.044715
    %v904 = vmul.f32 %v896, 0.044715
    %v905 = vmul.f32 %v897, 0.044715
    %v906 = vmul.f32 %v898, 0.044715
    %v907 = vmul.f32 %v899, 0.044715
    %v908 = vmul.f32 %v900, 0.044715
    %v909 = vmul.f32 %v901, 0.044715
    %v910 = vmul.f32 %v902, 0.044715
    %v911 = vadd.f32 %v865, %v903
    %v912 = vadd.f32 %v867, %v904
    %v913 = vadd.f32 %v871, %v905
    %v914 = vadd.f32 %v873, %v906
    %v915 = vadd.f32 %v877, %v907
    %v916 = vadd.f32 %v879, %v908
    %v917 = vadd.f32 %v883, %v909
    %v918 = vadd.f32 %v885, %v910
    %v919 = vmul.f32 %v911, 0.7978846
    %v920 = vmul.f32 %v912, 0.7978846
    %v921 = vmul.f32 %v913, 0.7978846
    %v922 = vmul.f32 %v914, 0.7978846
    %v923 = vmul.f32 %v915, 0.7978846
    %v924 = vmul.f32 %v916, 0.7978846
    %v925 = vmul.f32 %v917, 0.7978846
    %v926 = vmul.f32 %v918, 0.7978846
    %v927 = vtanh.pop %v919
    %v928 = vtanh.pop %v920
    %v929 = vtanh.pop %v921
    %v930 = vtanh.pop %v922
    %v931 = vtanh.pop %v923
    %v932 = vtanh.pop %v924
    %v933 = vtanh.pop %v925
    %v934 = vtanh.pop %v926
    %v935 = vadd.f32 %v927, 1.0
    %v936 = vadd.f32 %v928, 1.0
    %v937 = vadd.f32 %v929, 1.0
    %v938 = vadd.f32 %v930, 1.0
    %v939 = vadd.f32 %v931, 1.0
    %v940 = vadd.f32 %v932, 1.0
    %v941 = vadd.f32 %v933, 1.0
    %v942 = vadd.f32 %v934, 1.0
    %v943 = vmul.f32 %v935, 0.5
    %v944 = vmul.f32 %v936, 0.5
    %v945 = vmul.f32 %v937, 0.5
    %v946 = vmul.f32 %v938, 0.5
    %v947 = vmul.f32 %v939, 0.5
    %v948 = vmul.f32 %v940, 0.5
    %v949 = vmul.f32 %v941, 0.5
    %v950 = vmul.f32 %v942, 0.5
    %v951 = vmul.f32 %v865, %v943
    %v952 = vmul.f32 %v867, %v944
    %v953 = vmul.f32 %v871, %v945
    %v954 = vmul.f32 %v873, %v946
    %v955 = vmul.f32 %v877, %v947
    %v956 = vmul.f32 %v879, %v948
    %v957 = vmul.f32 %v883, %v949
    %v958 = vmul.f32 %v885, %v950
    %v959 = vld [vmem:[%s13] sm:$0xff]
    %v960 = vld [vmem:[%s13 + $0x8] sm:$0xff]
    %v961 = vld [vmem:[%s13 + $0x10] sm:$0xff]
    %v962 = vld [vmem:[%s13 + $0x18] sm:$0xff]
    %v963 = vld [vmem:[%s13 + $0x20] sm:$0xff]
    %v964 = vld [vmem:[%s13 + $0x28] sm:$0xff]
    %v965 = vld [vmem:[%s13 + $0x30] sm:$0xff]
    %v966 = vld [vmem:[%s13 + $0x38] sm:$0xff]
    %v967 = vld [vmem:[%s13 + $0x40] sm:$0xff]
    %v968 = vld [vmem:[%s13 + $0x48] sm:$0xff]
    %v969 = vld [vmem:[%s13 + $0x50] sm:$0xff]
    %v970 = vld [vmem:[%s13 + $0x58] sm:$0xff]
    %v971 = vld [vmem:[%s13 + $0x60] sm:$0xff]
    %v972 = vld [vmem:[%s13 + $0x68] sm:$0xff]
    %v973 = vld [vmem:[%s13 + $0x70] sm:$0xff]
    %v974 = vld [vmem:[%s13 + $0x78] sm:$0xff]
    %v975 = vld [vmem:[%s13 + $0x80] sm:$0xff]
    %v976 = vld [vmem:[%s13 + $0x88] sm:$0xff]
    %v977 = vld [vmem:[%s13 + $0x90] sm:$0xff]
    %v978 = vld [vmem:[%s13 + $0x98] sm:$0xff]
    %v979 = vld [vmem:[%s13 + $0xa0] sm:$0xff]
    %v980 = vld [vmem:[%s13 + $0xa8] sm:$0xff]
    %v981 = vld [vmem:[%s13 + $0xb0] sm:$0xff]
    %v982 = vld [vmem:[%s13 + $0xb8] sm:$0xff]
    %v983 = vld [vmem:[%s13 + $0xc0] sm:$0xff]
    %v984 = vld [vmem:[%s13 + $0xc8] sm:$0xff]
    %v985 = vld [vmem:[%s13 + $0xd0] sm:$0xff]
    %v986 = vld [vmem:[%s13 + $0xd8] sm:$0xff]
    %v987 = vld [vmem:[%s13 + $0xe0] sm:$0xff]
    %v988 = vld [vmem:[%s13 + $0xe8] sm:$0xff]
    %v989 = vld [vmem:[%s13 + $0xf0] sm:$0xff]
    %v990 = vld [vmem:[%s13 + $0xf8] sm:$0xff]
    %v991 = vld [vmem:[#allocation10] sm:$0x1]
    %v993 = vlaneseq
    %v994 = vshrl.u32 %v993, 7
    %v995 = vsub.s32 0, %v994
    %v996 = vrot.slane %v991, %v995
    %998 = vmatprep.subr.mxu0 0.0
    %999 = vmatpush1.msra.mxu0 %v974
    %1000 = vmatprep.subr.mxu0 0.0
    %1001 = vmatpush1.msra.mxu0 %v973
    %1002 = vmatprep.subr.mxu0 0.0
    %1003 = vmatpush1.msra.mxu0 %v972
    %1004 = vmatprep.subr.mxu0 0.0
    %1005 = vmatpush1.msra.mxu0 %v971
    %1006 = vmatprep.subr.mxu0 0.0
    %1007 = vmatpush1.msra.mxu0 %v970
    %1008 = vmatprep.subr.mxu0 0.0
    %1009 = vmatpush1.msra.mxu0 %v969
    %1010 = vmatprep.subr.mxu0 0.0
    %1011 = vmatpush1.msra.mxu0 %v968
    %1012 = vmatprep.subr.mxu0 0.0
    %1013 = vmatpush1.msra.mxu0 %v967
    %1014 = vmatprep.subr.mxu0 0.0
    %1015 = vmatpush1.msra.mxu0 %v966
    %1016 = vmatprep.subr.mxu0 0.0
    %1017 = vmatpush1.msra.mxu0 %v965
    %1018 = vmatprep.subr.mxu0 0.0
    %1019 = vmatpush1.msra.mxu0 %v964
    %1020 = vmatprep.subr.mxu0 0.0
    %1021 = vmatpush1.msra.mxu0 %v963
    %1022 = vmatprep.subr.mxu0 0.0
    %1023 = vmatpush1.msra.mxu0 %v962
    %1024 = vmatprep.subr.mxu0 0.0
    %1025 = vmatpush1.msra.mxu0 %v961
    %1026 = vmatprep.subr.mxu0 0.0
    %1027 = vmatpush1.msra.mxu0 %v960
    %1028 = vmatprep.subr.mxu0 0.0
    %1029 = vmatpush1.msra.mxu0 %v959
    %1030 = vmatprep.subr.mxu0 0.0
    %1031 = vmatpush2.msra.mxu0 %v990
    %1032 = vmatprep.subr.mxu0 0.0
    %1033 = vmatpush2.msra.mxu0 %v989
    %1034 = vmatprep.subr.mxu0 0.0
    %1035 = vmatpush2.msra.mxu0 %v988
    %1036 = vmatprep.subr.mxu0 0.0
    %1037 = vmatpush2.msra.mxu0 %v987
    %1038 = vmatprep.subr.mxu0 0.0
    %1039 = vmatpush2.msra.mxu0 %v986
    %1040 = vmatprep.subr.mxu0 0.0
    %1041 = vmatpush2.msra.mxu0 %v985
    %1042 = vmatprep.subr.mxu0 0.0
    %1043 = vmatpush2.msra.mxu0 %v984
    %1044 = vmatprep.subr.mxu0 0.0
    %1045 = vmatpush2.msra.mxu0 %v983
    %1046 = vmatprep.subr.mxu0 0.0
    %1047 = vmatpush2.msra.mxu0 %v982
    %1048 = vmatprep.subr.mxu0 0.0
    %1049 = vmatpush2.msra.mxu0 %v981
    %1050 = vmatprep.subr.mxu0 0.0
    %1051 = vmatpush2.msra.mxu0 %v980
    %1052 = vmatprep.subr.mxu0 0.0
    %1053 = vmatpush2.msra.mxu0 %v979
    %1054 = vmatprep.subr.mxu0 0.0
    %1055 = vmatpush2.msra.mxu0 %v978
    %1056 = vmatprep.subr.mxu0 0.0
    %1057 = vmatpush2.msra.mxu0 %v977
    %1058 = vmatprep.subr.mxu0 0.0
    %1059 = vmatpush2.msra.mxu0 %v976
    %1060 = vmatprep.subr.mxu0 0.0
    %1061 = vmatpush2.msra.mxu0 %v975
    %1062 = vmatprep.mubr.f32.mxu0 %v952
    %1063 = vmatmul.mubr.f32.gmra.mxu0 %v951
    %v1064 = vpop.f32.mrf.mxu0
    %v1065 = vadd.f32 %v996, %v1064
    %v1066 = vpop.f32.mrf.mxu0
    %1067 = vmatprep.mubr.f32.mxu0 %v954
    %1068 = vmatmul.mubr.f32.gmra.mxu0 %v953
    %v1069 = vpop.f32.mrf.mxu0
    %v1070 = vadd.f32 %v996, %v1069
    %v1071 = vpop.f32.mrf.mxu0
    %1072 = vmatprep.mubr.f32.mxu0 %v956
    %1073 = vmatmul.mubr.f32.gmra.mxu0 %v955
    %v1074 = vpop.f32.mrf.mxu0
    %v1075 = vadd.f32 %v996, %v1074
    %v1076 = vpop.f32.mrf.mxu0
    %1077 = vmatprep.mubr.f32.mxu0 %v958
    %1078 = vmatmul.mubr.f32.gmra.mxu0 %v957
    %v1079 = vpop.f32.mrf.mxu0
    %v1080 = vadd.f32 %v996, %v1079
    %v1081 = vpop.f32.mrf.mxu0
    %1082 = vdwg.mxu0
    %v1087 = vadd.f32 %v1065, %v786
    %v1088 = vadd.f32 %v1070, %v787
    %v1089 = vadd.f32 %v1075, %v788
    %v1090 = vadd.f32 %v1080, %v789
    %v1091 = vld [vmem:[#allocation12] sm:$0x1]
    %v1092 = vld [vmem:[%s16] sm:$0x1]
    %v1093 = vsel %vm141, %v1087, 0.0
    %1094 = vadd.xlane.f32.xlu0 %v1093
    %v1095 = vpop.xlane.xlu0 %1094
    %v1096 = vsel %vm141, %v1088, 0.0
    %1097 = vadd.xlane.f32.xlu0 %v1096
    %v1098 = vpop.xlane.xlu0 %1097
    %v1099 = vsel %vm141, %v1089, 0.0
    %1100 = vadd.xlane.f32.xlu0 %v1099
    %v1101 = vpop.xlane.xlu0 %1100
    %v1102 = vsel %vm141, %v1090, 0.0
    %1103 = vadd.xlane.f32.xlu0 %v1102
    %v1104 = vpop.xlane.xlu0 %1103
    %v1105 = vmul.f32 %v1095, %v513
    %v1106 = vmul.f32 %v1098, %v513
    %v1107 = vmul.f32 %v1101, %v513
    %v1108 = vmul.f32 %v1104, %v513
    %v1109 = vsub.f32 %v1087, %v1105
    %v1110 = vsub.f32 %v1088, %v1106
    %v1111 = vsub.f32 %v1089, %v1107
    %v1112 = vsub.f32 %v1090, %v1108
    %v1113 = vmul.f32 %v1109, %v1109
    %v1114 = vmul.f32 %v1110, %v1110
    %v1115 = vmul.f32 %v1111, %v1111
    %v1116 = vmul.f32 %v1112, %v1112
    %v1117 = vsel %vm141, %v1113, 0.0
    %1118 = vadd.xlane.f32.xlu0 %v1117
    %v1119 = vpop.xlane.xlu0 %1118
    %v1120 = vsel %vm141, %v1114, 0.0
    %1121 = vadd.xlane.f32.xlu0 %v1120
    %v1122 = vpop.xlane.xlu0 %1121
    %v1123 = vsel %vm141, %v1115, 0.0
    %1124 = vadd.xlane.f32.xlu0 %v1123
    %v1125 = vpop.xlane.xlu0 %1124
    %v1126 = vsel %vm141, %v1116, 0.0
    %1127 = vadd.xlane.f32.xlu0 %v1126
    %v1128 = vpop.xlane.xlu0 %1127
    %v1129 = vmul.f32 %v1119, %v513
    %v1130 = vmul.f32 %v1122, %v513
    %v1131 = vmul.f32 %v1125, %v513
    %v1132 = vmul.f32 %v1128, %v513
    %v1133 = vadd.f32 %v1129, 1e-12
    %v1134 = vadd.f32 %v1130, 1e-12
    %v1135 = vadd.f32 %v1131, 1e-12
    %v1136 = vadd.f32 %v1132, 1e-12
    %v1137 = vrsqrt.pop %v1133
    %v1138 = vrsqrt.pop %v1134
    %v1139 = vrsqrt.pop %v1135
    %v1140 = vrsqrt.pop %v1136
    %v1141 = vmul.f32 %v1109, %v1137
    %v1142 = vmul.f32 %v1110, %v1138
    %v1143 = vmul.f32 %v1111, %v1139
    %v1144 = vmul.f32 %v1112, %v1140
    %v1146 = vlaneseq
    %v1147 = vshrl.u32 %v1146, 7
    %v1148 = vsub.s32 0, %v1147
    %v1149 = vrot.slane %v1091, %v1148
    %v1151 = vmul.f32 %v1141, %v1149
    %v1152 = vmul.f32 %v1142, %v1149
    %v1153 = vmul.f32 %v1143, %v1149
    %v1154 = vmul.f32 %v1144, %v1149
    %v1156 = vlaneseq
    %v1157 = vshrl.u32 %v1156, 7
    %v1158 = vsub.s32 0, %v1157
    %v1159 = vrot.slane %v1092, %v1158
    %v1161 = vadd.f32 %v1151, %v1159
    %v1162 = vadd.f32 %v1152, %v1159
    %v1163 = vadd.f32 %v1153, %v1159
    %v1164 = vadd.f32 %v1154, %v1159
    %v1169 = vcombine.high %v1161, %v1161
    %v1170 = vcombine.high %v1162, %v1162
    %v1171 = vcombine.high %v1163, %v1163
    %v1172 = vcombine.high %v1164, %v1164
    %v1177 = vld [vmem:[%s2] sm:$0xff]
    %v1178 = vld [vmem:[%s2 + $0x8] sm:$0xff]
    %v1179 = vld [vmem:[%s2 + $0x10] sm:$0xff]
    %v1180 = vld [vmem:[%s2 + $0x18] sm:$0xff]
    %v1181 = vld [vmem:[%s2 + $0x20] sm:$0xff]
    %v1182 = vld [vmem:[%s2 + $0x28] sm:$0xff]
    %v1183 = vld [vmem:[%s2 + $0x30] sm:$0xff]
    %v1184 = vld [vmem:[%s2 + $0x38] sm:$0xff]
    %v1185 = vld [vmem:[%s2 + $0x40] sm:$0xff]
    %v1186 = vld [vmem:[%s2 + $0x48] sm:$0xff]
    %v1187 = vld [vmem:[%s2 + $0x50] sm:$0xff]
    %v1188 = vld [vmem:[%s2 + $0x58] sm:$0xff]
    %v1189 = vld [vmem:[%s2 + $0x60] sm:$0xff]
    %v1190 = vld [vmem:[%s2 + $0x68] sm:$0xff]
    %v1191 = vld [vmem:[%s2 + $0x70] sm:$0xff]
    %v1192 = vld [vmem:[%s2 + $0x78] sm:$0xff]
    %v1194 = vunpack.c.l.s4 1983009808
    %v1195 = vunpack.c.0.s8 %v1194
    %v1196 = vlaneseq
    %v1197 = vshrl.u32 %v1196, 7
    %v1198 = vsub.s32 %v1195, %v1197
    %v1199 = vrot.slane %v137, %v1198
    %v1201 = vunpack.c.l.s4 1983009808
    %v1202 = vunpack.c.0.s8 %v1201
    %v1203 = vlaneseq
    %v1204 = vshrl.u32 %v1203, 7
    %v1205 = vsub.s32 %v1202, %v1204
    %v1206 = vrot.slane %v138, %v1205
    %v1207 = vcombine.low %v1199, %v1206
    %v1209 = vunpack.c.l.s4 1983009808
    %v1210 = vunpack.c.0.s8 %v1209
    %v1211 = vlaneseq
    %v1212 = vshrl.u32 %v1211, 7
    %v1213 = vsub.s32 %v1210, %v1212
    %v1214 = vrot.slane %v139, %v1213
    %v1216 = vunpack.c.l.s4 1983009808
    %v1217 = vunpack.c.0.s8 %v1216
    %v1218 = vlaneseq
    %v1219 = vshrl.u32 %v1218, 7
    %v1220 = vsub.s32 %v1217, %v1219
    %v1221 = vrot.slane %v140, %v1220
    %v1222 = vcombine.low %v1214, %v1221
    %v1223 = vsel %vm141, %v1207, 0
    %v1225 = vsel %vm141, %v1222, 0
    %1227 = vmatprep.subr.mxu0 0.0
    %1228 = vmatpush1.msra.mxu0 0.0
    %1229 = vmatprep.subr.mxu0 0.0
    %1230 = vmatpush1.msra.mxu0 0.0
    %1231 = vmatprep.subr.mxu0 0.0
    %1232 = vmatpush1.msra.mxu0 0.0
    %1233 = vmatprep.subr.mxu0 0.0
    %1234 = vmatpush1.msra.mxu0 0.0
    %1235 = vmatprep.subr.mxu0 0.0
    %1236 = vmatpush1.msra.mxu0 0.0
    %1237 = vmatprep.subr.mxu0 0.0
    %1238 = vmatpush1.msra.mxu0 0.0
    %1239 = vmatprep.subr.mxu0 0.0
    %1240 = vmatpush1.msra.mxu0 0.0
    %1241 = vmatprep.subr.mxu0 0.0
    %1242 = vmatpush1.msra.mxu0 0.0
    %1243 = vmatprep.subr.mxu0 %v1192
    %1244 = vmatpush1.msra.mxu0 %v1191
    %1245 = vmatprep.subr.mxu0 %v1190
    %1246 = vmatpush1.msra.mxu0 %v1189
    %1247 = vmatprep.subr.mxu0 %v1188
    %1248 = vmatpush1.msra.mxu0 %v1187
    %1249 = vmatprep.subr.mxu0 %v1186
    %1250 = vmatpush1.msra.mxu0 %v1185
    %1251 = vmatprep.subr.mxu0 %v1184
    %1252 = vmatpush1.msra.mxu0 %v1183
    %1253 = vmatprep.subr.mxu0 %v1182
    %1254 = vmatpush1.msra.mxu0 %v1181
    %1255 = vmatprep.subr.mxu0 %v1180
    %1256 = vmatpush1.msra.mxu0 %v1179
    %1257 = vmatprep.subr.mxu0 %v1178
    %1258 = vmatpush1.msra.mxu0 %v1177
    %1259 = vmatprep.subr.mxu0 0.0
    %1260 = vmatpush2.msra.mxu0 0.0
    %1261 = vmatprep.subr.mxu0 0.0
    %1262 = vmatpush2.msra.mxu0 0.0
    %1263 = vmatprep.subr.mxu0 0.0
    %1264 = vmatpush2.msra.mxu0 0.0
    %1265 = vmatprep.subr.mxu0 0.0
    %1266 = vmatpush2.msra.mxu0 0.0
    %1267 = vmatprep.subr.mxu0 0.0
    %1268 = vmatpush2.msra.mxu0 0.0
    %1269 = vmatprep.subr.mxu0 0.0
    %1270 = vmatpush2.msra.mxu0 0.0
    %1271 = vmatprep.subr.mxu0 0.0
    %1272 = vmatpush2.msra.mxu0 0.0
    %1273 = vmatprep.subr.mxu0 0.0
    %1274 = vmatpush2.msra.mxu0 0.0
    %1275 = vmatprep.subr.mxu0 0.0
    %1276 = vmatpush2.msra.mxu0 0.0
    %1277 = vmatprep.subr.mxu0 0.0
    %1278 = vmatpush2.msra.mxu0 0.0
    %1279 = vmatprep.subr.mxu0 0.0
    %1280 = vmatpush2.msra.mxu0 0.0
    %1281 = vmatprep.subr.mxu0 0.0
    %1282 = vmatpush2.msra.mxu0 0.0
    %1283 = vmatprep.subr.mxu0 0.0
    %1284 = vmatpush2.msra.mxu0 0.0
    %1285 = vmatprep.subr.mxu0 0.0
    %1286 = vmatpush2.msra.mxu0 0.0
    %1287 = vmatprep.subr.mxu0 0.0
    %1288 = vmatpush2.msra.mxu0 0.0
    %1289 = vmatprep.subr.mxu0 0.0
    %1290 = vmatpush2.msra.mxu0 0.0
    %1291 = vmatprep.mubr.f32.mxu0 0.0
    %1292 = vmatmul.mubr.f32.gmra.mxu0 %v1223
    %v1293 = vpop.f32.mrf.mxu0
    %v1294 = vadd.f32 0.0, %v1293
    %v1295 = vpop.f32.mrf.mxu0
    %v1296 = vadd.f32 0.0, %v1295
    %1297 = vmatprep.mubr.f32.mxu0 0.0
    %1298 = vmatmul.mubr.f32.gmra.mxu0 %v1225
    %v1299 = vpop.f32.mrf.mxu0
    %v1300 = vadd.f32 0.0, %v1299
    %v1301 = vpop.f32.mrf.mxu0
    %v1302 = vadd.f32 0.0, %v1301
    %1303 = vdwg.mxu0
    %v1308 = vcombine.low %v1294, %v1296
    %v1309 = vcombine.high %v1294, %v1296
    %v1311 = vunpack.c.l.s4 1983009808
    %v1312 = vunpack.c.0.s8 %v1311
    %v1313 = vlaneseq
    %v1314 = vshrl.u32 %v1313, 7
    %v1315 = vsub.s32 %v1312, %v1314
    %v1316 = vrot.slane %v1308, %v1315
    %v1318 = vunpack.c.l.s4 1983009808
    %v1319 = vunpack.c.0.s8 %v1318
    %v1320 = vlaneseq
    %v1321 = vshrl.u32 %v1320, 7
    %v1322 = vsub.s32 %v1319, %v1321
    %v1323 = vrot.slane %v1309, %v1322
    %v1324 = vcombine.high %v1316, %v1316
    %v1325 = vcombine.high %v1323, %v1323
    %v1326 = vcombine.low %v1300, %v1302
    %v1327 = vcombine.high %v1300, %v1302
    %v1329 = vunpack.c.l.s4 1983009808
    %v1330 = vunpack.c.0.s8 %v1329
    %v1331 = vlaneseq
    %v1332 = vshrl.u32 %v1331, 7
    %v1333 = vsub.s32 %v1330, %v1332
    %v1334 = vrot.slane %v1326, %v1333
    %v1336 = vunpack.c.l.s4 1983009808
    %v1337 = vunpack.c.0.s8 %v1336
    %v1338 = vlaneseq
    %v1339 = vshrl.u32 %v1338, 7
    %v1340 = vsub.s32 %v1337, %v1339
    %v1341 = vrot.slane %v1327, %v1340
    %v1342 = vcombine.high %v1334, %v1334
    %v1343 = vcombine.high %v1341, %v1341
    %v1352 = vld [vmem:[%s4] sm:$0x3]
    %v1354 = vlaneseq
    %v1355 = vshrl.u32 %v1354, 7
    %v1356 = vsub.s32 0, %v1355
    %v1357 = vrot.slane %v1352, %v1356
    %v1358 = vlaneseq
    %v1359 = vshrl.u32 %v1358, 7
    %v1360 = vsub.s32 1, %v1359
    %v1361 = vrot.slane %v1352, %v1360
    %v1362 = vcombine.low %v1357, %v1361
    %v1364 = vunpack.c.l.s4 1983009808
    %v1365 = vunpack.c.0.s8 %v1364
    %v1366 = vlaneseq
    %v1367 = vshrl.u32 %v1366, 7
    %v1368 = vsub.s32 %v1365, %v1367
    %v1369 = vrot.slane %v1362, %v1368
    %v1371 = vadd.f32 %v1316, %v1369
    %v1372 = vadd.f32 %v1324, %v1369
    %v1373 = vadd.f32 %v1323, %v1369
    %v1374 = vadd.f32 %v1325, %v1369
    %v1375 = vadd.f32 %v1334, %v1369
    %v1376 = vadd.f32 %v1342, %v1369
    %v1377 = vadd.f32 %v1341, %v1369
    %v1378 = vadd.f32 %v1343, %v1369
    %v1379 = vld [vmem:[%s3] sm:$0xff]
    %v1380 = vld [vmem:[%s3 + $0x8] sm:$0xff]
    %v1381 = vld [vmem:[%s3 + $0x10] sm:$0xff]
    %v1382 = vld [vmem:[%s3 + $0x18] sm:$0xff]
    %v1383 = vld [vmem:[%s3 + $0x20] sm:$0xff]
    %v1384 = vld [vmem:[%s3 + $0x28] sm:$0xff]
    %v1385 = vld [vmem:[%s3 + $0x30] sm:$0xff]
    %v1386 = vld [vmem:[%s3 + $0x38] sm:$0xff]
    %v1387 = vld [vmem:[%s3 + $0x40] sm:$0xff]
    %v1388 = vld [vmem:[%s3 + $0x48] sm:$0xff]
    %v1389 = vld [vmem:[%s3 + $0x50] sm:$0xff]
    %v1390 = vld [vmem:[%s3 + $0x58] sm:$0xff]
    %v1391 = vld [vmem:[%s3 + $0x60] sm:$0xff]
    %v1392 = vld [vmem:[%s3 + $0x68] sm:$0xff]
    %v1393 = vld [vmem:[%s3 + $0x70] sm:$0xff]
    %v1394 = vld [vmem:[%s3 + $0x78] sm:$0xff]
    %v1396 = vsel %vm141, 0.0, 0
    %1398 = vmatprep.subr.mxu0 0.0
    %1399 = vmatpush1.msra.mxu0 0.0
    %1400 = vmatprep.subr.mxu0 0.0
    %1401 = vmatpush1.msra.mxu0 0.0
    %1402 = vmatprep.subr.mxu0 0.0
    %1403 = vmatpush1.msra.mxu0 0.0
    %1404 = vmatprep.subr.mxu0 0.0
    %1405 = vmatpush1.msra.mxu0 0.0
    %1406 = vmatprep.subr.mxu0 0.0
    %1407 = vmatpush1.msra.mxu0 0.0
    %1408 = vmatprep.subr.mxu0 0.0
    %1409 = vmatpush1.msra.mxu0 0.0
    %1410 = vmatprep.subr.mxu0 0.0
    %1411 = vmatpush1.msra.mxu0 0.0
    %1412 = vmatprep.subr.mxu0 0.0
    %1413 = vmatpush1.msra.mxu0 0.0
    %1414 = vmatprep.subr.mxu0 %v1394
    %1415 = vmatpush1.msra.mxu0 %v1393
    %1416 = vmatprep.subr.mxu0 %v1392
    %1417 = vmatpush1.msra.mxu0 %v1391
    %1418 = vmatprep.subr.mxu0 %v1390
    %1419 = vmatpush1.msra.mxu0 %v1389
    %1420 = vmatprep.subr.mxu0 %v1388
    %1421 = vmatpush1.msra.mxu0 %v1387
    %1422 = vmatprep.subr.mxu0 %v1386
    %1423 = vmatpush1.msra.mxu0 %v1385
    %1424 = vmatprep.subr.mxu0 %v1384
    %1425 = vmatpush1.msra.mxu0 %v1383
    %1426 = vmatprep.subr.mxu0 %v1382
    %1427 = vmatpush1.msra.mxu0 %v1381
    %1428 = vmatprep.subr.mxu0 %v1380
    %1429 = vmatpush1.msra.mxu0 %v1379
    %1430 = vmatprep.subr.mxu0 0.0
    %1431 = vmatpush2.msra.mxu0 0.0
    %1432 = vmatprep.subr.mxu0 0.0
    %1433 = vmatpush2.msra.mxu0 0.0
    %1434 = vmatprep.subr.mxu0 0.0
    %1435 = vmatpush2.msra.mxu0 0.0
    %1436 = vmatprep.subr.mxu0 0.0
    %1437 = vmatpush2.msra.mxu0 0.0
    %1438 = vmatprep.subr.mxu0 0.0
    %1439 = vmatpush2.msra.mxu0 0.0
    %1440 = vmatprep.subr.mxu0 0.0
    %1441 = vmatpush2.msra.mxu0 0.0
    %1442 = vmatprep.subr.mxu0 0.0
    %1443 = vmatpush2.msra.mxu0 0.0
    %1444 = vmatprep.subr.mxu0 0.0
    %1445 = vmatpush2.msra.mxu0 0.0
    %1446 = vmatprep.subr.mxu0 0.0
    %1447 = vmatpush2.msra.mxu0 0.0
    %1448 = vmatprep.subr.mxu0 0.0
    %1449 = vmatpush2.msra.mxu0 0.0
    %1450 = vmatprep.subr.mxu0 0.0
    %1451 = vmatpush2.msra.mxu0 0.0
    %1452 = vmatprep.subr.mxu0 0.0
    %1453 = vmatpush2.msra.mxu0 0.0
    %1454 = vmatprep.subr.mxu0 0.0
    %1455 = vmatpush2.msra.mxu0 0.0
    %1456 = vmatprep.subr.mxu0 0.0
    %1457 = vmatpush2.msra.mxu0 0.0
    %1458 = vmatprep.subr.mxu0 0.0
    %1459 = vmatpush2.msra.mxu0 0.0
    %1460 = vmatprep.subr.mxu0 0.0
    %1461 = vmatpush2.msra.mxu0 0.0
    %1462 = vmatprep.mubr.f32.mxu0 0.0
    %1463 = vmatmul.mubr.f32.gmra.mxu0 %v1396
    %v1464 = vpop.f32.mrf.mxu0
    %v1465 = vadd.f32 0.0, %v1464
    %v1466 = vpop.f32.mrf.mxu0
    %v1467 = vadd.f32 0.0, %v1466
    %1468 = vdwg.mxu0
    %v1469 = vadd.f32 %v1371, %v1465
    %v1470 = vxor.u32 %v1469, 2147483648
    %v1471 = vmul.f32 %v1470, 1.442695
    %v1472 = vpow.pop %v1471
    %v1473 = vadd.f32 %v1472, 1.0
    %v1474 = vrcp.pop %v1473
    %v1475 = vmul.f32 1.0, %v1474
    %v1476 = vmul.f32 %v1475, %v1467
    %v1478 = vrot.slane %v1371, 2
    %v1480 = vadd.f32 %v1478, %v1476
    %v1481 = vtanh.pop %v1480
    %v1482 = vsub.f32 1.0, %v1475
    %1484 = vrot.lane.b32.xlu0 %v1481, 64
    %v1485 = vpop.permute.xlu0 %1484
    %v1487 = vmul.f32 %v1482, %v1485
    %v1488 = vmul.f32 %v1475, 0.0
    %v1489 = vadd.f32 %v1487, %v1488
    %v1492 = vunpack.c.l.s4 1983009808
    %v1493 = vunpack.c.0.s8 %v1492
    %v1494 = vlaneseq
    %v1495 = vshrl.u32 %v1494, 7
    %v1496 = vsub.s32 %v1493, %v1495
    %v1497 = vrot.slane %v1489, %v1496
    %1498 = vrot.lane.b32.xlu0 %v1497, 64
    %v1499 = vpop.permute.xlu0 %1498
    %vm1501 = vcmask 517120
    %1502 = vst.msk [vmem:[#allocation4] sm:$0x3] %vm1501, %v1499
    %v1503 = vld [vmem:[%s3] sm:$0xff]
    %v1504 = vld [vmem:[%s3 + $0x8] sm:$0xff]
    %v1505 = vld [vmem:[%s3 + $0x10] sm:$0xff]
    %v1506 = vld [vmem:[%s3 + $0x18] sm:$0xff]
    %v1507 = vld [vmem:[%s3 + $0x20] sm:$0xff]
    %v1508 = vld [vmem:[%s3 + $0x28] sm:$0xff]
    %v1509 = vld [vmem:[%s3 + $0x30] sm:$0xff]
    %v1510 = vld [vmem:[%s3 + $0x38] sm:$0xff]
    %v1511 = vld [vmem:[%s3 + $0x40] sm:$0xff]
    %v1512 = vld [vmem:[%s3 + $0x48] sm:$0xff]
    %v1513 = vld [vmem:[%s3 + $0x50] sm:$0xff]
    %v1514 = vld [vmem:[%s3 + $0x58] sm:$0xff]
    %v1515 = vld [vmem:[%s3 + $0x60] sm:$0xff]
    %v1516 = vld [vmem:[%s3 + $0x68] sm:$0xff]
    %v1517 = vld [vmem:[%s3 + $0x70] sm:$0xff]
    %v1518 = vld [vmem:[%s3 + $0x78] sm:$0xff]
    %v1519 = vsel %vm141, %v1499, 0
    %1521 = vmatprep.subr.mxu0 0.0
    %1522 = vmatpush1.msra.mxu0 0.0
    %1523 = vmatprep.subr.mxu0 0.0
    %1524 = vmatpush1.msra.mxu0 0.0
    %1525 = vmatprep.subr.mxu0 0.0
    %1526 = vmatpush1.msra.mxu0 0.0
    %1527 = vmatprep.subr.mxu0 0.0
    %1528 = vmatpush1.msra.mxu0 0.0
    %1529 = vmatprep.subr.mxu0 0.0
    %1530 = vmatpush1.msra.mxu0 0.0
    %1531 = vmatprep.subr.mxu0 0.0
    %1532 = vmatpush1.msra.mxu0 0.0
    %1533 = vmatprep.subr.mxu0 0.0
    %1534 = vmatpush1.msra.mxu0 0.0
    %1535 = vmatprep.subr.mxu0 0.0
    %1536 = vmatpush1.msra.mxu0 0.0
    %1537 = vmatprep.subr.mxu0 %v1518
    %1538 = vmatpush1.msra.mxu0 %v1517
    %1539 = vmatprep.subr.mxu0 %v1516
    %1540 = vmatpush1.msra.mxu0 %v1515
    %1541 = vmatprep.subr.mxu0 %v1514
    %1542 = vmatpush1.msra.mxu0 %v1513
    %1543 = vmatprep.subr.mxu0 %v1512
    %1544 = vmatpush1.msra.mxu0 %v1511
    %1545 = vmatprep.subr.mxu0 %v1510
    %1546 = vmatpush1.msra.mxu0 %v1509
    %1547 = vmatprep.subr.mxu0 %v1508
    %1548 = vmatpush1.msra.mxu0 %v1507
    %1549 = vmatprep.subr.mxu0 %v1506
    %1550 = vmatpush1.msra.mxu0 %v1505
    %1551 = vmatprep.subr.mxu0 %v1504
    %1552 = vmatpush1.msra.mxu0 %v1503
    %1553 = vmatprep.subr.mxu0 0.0
    %1554 = vmatpush2.msra.mxu0 0.0
    %1555 = vmatprep.subr.mxu0 0.0
    %1556 = vmatpush2.msra.mxu0 0.0
    %1557 = vmatprep.subr.mxu0 0.0
    %1558 = vmatpush2.msra.mxu0 0.0
    %1559 = vmatprep.subr.mxu0 0.0
    %1560 = vmatpush2.msra.mxu0 0.0
    %1561 = vmatprep.subr.mxu0 0.0
    %1562 = vmatpush2.msra.mxu0 0.0
    %1563 = vmatprep.subr.mxu0 0.0
    %1564 = vmatpush2.msra.mxu0 0.0
    %1565 = vmatprep.subr.mxu0 0.0
    %1566 = vmatpush2.msra.mxu0 0.0
    %1567 = vmatprep.subr.mxu0 0.0
    %1568 = vmatpush2.msra.mxu0 0.0
    %1569 = vmatprep.subr.mxu0 0.0
    %1570 = vmatpush2.msra.mxu0 0.0
    %1571 = vmatprep.subr.mxu0 0.0
    %1572 = vmatpush2.msra.mxu0 0.0
    %1573 = vmatprep.subr.mxu0 0.0
    %1574 = vmatpush2.msra.mxu0 0.0
    %1575 = vmatprep.subr.mxu0 0.0
    %1576 = vmatpush2.msra.mxu0 0.0
    %1577 = vmatprep.subr.mxu0 0.0
    %1578 = vmatpush2.msra.mxu0 0.0
    %1579 = vmatprep.subr.mxu0 0.0
    %1580 = vmatpush2.msra.mxu0 0.0
    %1581 = vmatprep.subr.mxu0 0.0
    %1582 = vmatpush2.msra.mxu0 0.0
    %1583 = vmatprep.subr.mxu0 0.0
    %1584 = vmatpush2.msra.mxu0 0.0
    %1585 = vmatprep.mubr.f32.mxu0 0.0
    %1586 = vmatmul.mubr.f32.gmra.mxu0 %v1519
    %v1587 = vpop.f32.mrf.mxu0
    %v1588 = vadd.f32 0.0, %v1587
    %v1589 = vpop.f32.mrf.mxu0
    %v1590 = vadd.f32 0.0, %v1589
    %1591 = vdwg.mxu0
    %v1592 = vadd.f32 %v1372, %v1588
    %v1593 = vxor.u32 %v1592, 2147483648
    %v1594 = vmul.f32 %v1593, 1.442695
    %v1595 = vpow.pop %v1594
    %v1596 = vadd.f32 %v1595, 1.0
    %v1597 = vrcp.pop %v1596
    %v1598 = vmul.f32 1.0, %v1597
    %v1599 = vmul.f32 %v1598, %v1590
    %v1601 = vrot.slane %v1372, 2
    %v1603 = vadd.f32 %v1601, %v1599
    %v1604 = vtanh.pop %v1603
    %v1605 = vsub.f32 1.0, %v1598
    %1607 = vrot.lane.b32.xlu0 %v1604, 64
    %v1608 = vpop.permute.xlu0 %1607
    %v1610 = vmul.f32 %v1605, %v1608
    %v1611 = vmul.f32 %v1598, %v1489
    %v1612 = vadd.f32 %v1610, %v1611
    %v1615 = vunpack.c.l.s4 1983009808
    %v1616 = vunpack.c.0.s8 %v1615
    %v1617 = vlaneseq
    %v1618 = vshrl.u32 %v1617, 7
    %v1619 = vsub.s32 %v1616, %v1618
    %v1620 = vrot.slane %v1612, %v1619
    %1621 = vrot.lane.b32.xlu0 %v1620, 64
    %v1622 = vpop.permute.xlu0 %1621
    %s1624 = scalar_lea.vmem [#allocation4], 2
    %1625 = vst.msk [vmem:[%s1624] sm:$0x3] %vm1501, %v1622
    %v1626 = vld [vmem:[%s3] sm:$0xff]
    %v1627 = vld [vmem:[%s3 + $0x8] sm:$0xff]
    %v1628 = vld [vmem:[%s3 + $0x10] sm:$0xff]
    %v1629 = vld [vmem:[%s3 + $0x18] sm:$0xff]
    %v1630 = vld [vmem:[%s3 + $0x20] sm:$0xff]
    %v1631 = vld [vmem:[%s3 + $0x28] sm:$0xff]
    %v1632 = vld [vmem:[%s3 + $0x30] sm:$0xff]
    %v1633 = vld [vmem:[%s3 + $0x38] sm:$0xff]
    %v1634 = vld [vmem:[%s3 + $0x40] sm:$0xff]
    %v1635 = vld [vmem:[%s3 + $0x48] sm:$0xff]
    %v1636 = vld [vmem:[%s3 + $0x50] sm:$0xff]
    %v1637 = vld [vmem:[%s3 + $0x58] sm:$0xff]
    %v1638 = vld [vmem:[%s3 + $0x60] sm:$0xff]
    %v1639 = vld [vmem:[%s3 + $0x68] sm:$0xff]
    %v1640 = vld [vmem:[%s3 + $0x70] sm:$0xff]
    %v1641 = vld [vmem:[%s3 + $0x78] sm:$0xff]
    %v1642 = vsel %vm141, %v1622, 0
    %1644 = vmatprep.subr.mxu0 0.0
    %1645 = vmatpush1.msra.mxu0 0.0
    %1646 = vmatprep.subr.mxu0 0.0
    %1647 = vmatpush1.msra.mxu0 0.0
    %1648 = vmatprep.subr.mxu0 0.0
    %1649 = vmatpush1.msra.mxu0 0.0
    %1650 = vmatprep.subr.mxu0 0.0
    %1651 = vmatpush1.msra.mxu0 0.0
    %1652 = vmatprep.subr.mxu0 0.0
    %1653 = vmatpush1.msra.mxu0 0.0
    %1654 = vmatprep.subr.mxu0 0.0
    %1655 = vmatpush1.msra.mxu0 0.0
    %1656 = vmatprep.subr.mxu0 0.0
    %1657 = vmatpush1.msra.mxu0 0.0
    %1658 = vmatprep.subr.mxu0 0.0
    %1659 = vmatpush1.msra.mxu0 0.0
    %1660 = vmatprep.subr.mxu0 %v1641
    %1661 = vmatpush1.msra.mxu0 %v1640
    %1662 = vmatprep.subr.mxu0 %v1639
    %1663 = vmatpush1.msra.mxu0 %v1638
    %1664 = vmatprep.subr.mxu0 %v1637
    %1665 = vmatpush1.msra.mxu0 %v1636
    %1666 = vmatprep.subr.mxu0 %v1635
    %1667 = vmatpush1.msra.mxu0 %v1634
    %1668 = vmatprep.subr.mxu0 %v1633
    %1669 = vmatpush1.msra.mxu0 %v1632
    %1670 = vmatprep.subr.mxu0 %v1631
    %1671 = vmatpush1.msra.mxu0 %v1630
    %1672 = vmatprep.subr.mxu0 %v1629
    %1673 = vmatpush1.msra.mxu0 %v1628
    %1674 = vmatprep.subr.mxu0 %v1627
    %1675 = vmatpush1.msra.mxu0 %v1626
    %1676 = vmatprep.subr.mxu0 0.0
    %1677 = vmatpush2.msra.mxu0 0.0
    %1678 = vmatprep.subr.mxu0 0.0
    %1679 = vmatpush2.msra.mxu0 0.0
    %1680 = vmatprep.subr.mxu0 0.0
    %1681 = vmatpush2.msra.mxu0 0.0
    %1682 = vmatprep.subr.mxu0 0.0
    %1683 = vmatpush2.msra.mxu0 0.0
    %1684 = vmatprep.subr.mxu0 0.0
    %1685 = vmatpush2.msra.mxu0 0.0
    %1686 = vmatprep.subr.mxu0 0.0
    %1687 = vmatpush2.msra.mxu0 0.0
    %1688 = vmatprep.subr.mxu0 0.0
    %1689 = vmatpush2.msra.mxu0 0.0
    %1690 = vmatprep.subr.mxu0 0.0
    %1691 = vmatpush2.msra.mxu0 0.0
    %1692 = vmatprep.subr.mxu0 0.0
    %1693 = vmatpush2.msra.mxu0 0.0
    %1694 = vmatprep.subr.mxu0 0.0
    %1695 = vmatpush2.msra.mxu0 0.0
    %1696 = vmatprep.subr.mxu0 0.0
    %1697 = vmatpush2.msra.mxu0 0.0
    %1698 = vmatprep.subr.mxu0 0.0
    %1699 = vmatpush2.msra.mxu0 0.0
    %1700 = vmatprep.subr.mxu0 0.0
    %1701 = vmatpush2.msra.mxu0 0.0
    %1702 = vmatprep.subr.mxu0 0.0
    %1703 = vmatpush2.msra.mxu0 0.0
    %1704 = vmatprep.subr.mxu0 0.0
    %1705 = vmatpush2.msra.mxu0 0.0
    %1706 = vmatprep.subr.mxu0 0.0
    %1707 = vmatpush2.msra.mxu0 0.0
    %1708 = vmatprep.mubr.f32.mxu0 0.0
    %1709 = vmatmul.mubr.f32.gmra.mxu0 %v1642
    %v1710 = vpop.f32.mrf.mxu0
    %v1711 = vadd.f32 0.0, %v1710
    %v1712 = vpop.f32.mrf.mxu0
    %v1713 = vadd.f32 0.0, %v1712
    %1714 = vdwg.mxu0
    %v1715 = vadd.f32 %v1373, %v1711
    %v1716 = vxor.u32 %v1715, 2147483648
    %v1717 = vmul.f32 %v1716, 1.442695
    %v1718 = vpow.pop %v1717
    %v1719 = vadd.f32 %v1718, 1.0
    %v1720 = vrcp.pop %v1719
    %v1721 = vmul.f32 1.0, %v1720
    %v1722 = vmul.f32 %v1721, %v1713
    %v1724 = vrot.slane %v1373, 2
    %v1726 = vadd.f32 %v1724, %v1722
    %v1727 = vtanh.pop %v1726
    %v1728 = vsub.f32 1.0, %v1721
    %1730 = vrot.lane.b32.xlu0 %v1727, 64
    %v1731 = vpop.permute.xlu0 %1730
    %v1733 = vmul.f32 %v1728, %v1731
    %v1734 = vmul.f32 %v1721, %v1612
    %v1735 = vadd.f32 %v1733, %v1734
    %v1738 = vunpack.c.l.s4 1983009808
    %v1739 = vunpack.c.0.s8 %v1738
    %v1740 = vlaneseq
    %v1741 = vshrl.u32 %v1740, 7
    %v1742 = vsub.s32 %v1739, %v1741
    %v1743 = vrot.slane %v1735, %v1742
    %1744 = vrot.lane.b32.xlu0 %v1743, 64
    %v1745 = vpop.permute.xlu0 %1744
    %s1747 = scalar_lea.vmem [#allocation4], 4
    %1748 = vst.msk [vmem:[%s1747] sm:$0x3] %vm1501, %v1745
    %v1749 = vld [vmem:[%s3] sm:$0xff]
    %v1750 = vld [vmem:[%s3 + $0x8] sm:$0xff]
    %v1751 = vld [vmem:[%s3 + $0x10] sm:$0xff]
    %v1752 = vld [vmem:[%s3 + $0x18] sm:$0xff]
    %v1753 = vld [vmem:[%s3 + $0x20] sm:$0xff]
    %v1754 = vld [vmem:[%s3 + $0x28] sm:$0xff]
    %v1755 = vld [vmem:[%s3 + $0x30] sm:$0xff]
    %v1756 = vld [vmem:[%s3 + $0x38] sm:$0xff]
    %v1757 = vld [vmem:[%s3 + $0x40] sm:$0xff]
    %v1758 = vld [vmem:[%s3 + $0x48] sm:$0xff]
    %v1759 = vld [vmem:[%s3 + $0x50] sm:$0xff]
    %v1760 = vld [vmem:[%s3 + $0x58] sm:$0xff]
    %v1761 = vld [vmem:[%s3 + $0x60] sm:$0xff]
    %v1762 = vld [vmem:[%s3 + $0x68] sm:$0xff]
    %v1763 = vld [vmem:[%s3 + $0x70] sm:$0xff]
    %v1764 = vld [vmem:[%s3 + $0x78] sm:$0xff]
    %v1765 = vsel %vm141, %v1745, 0
    %1767 = vmatprep.subr.mxu0 0.0
    %1768 = vmatpush1.msra.mxu0 0.0
    %1769 = vmatprep.subr.mxu0 0.0
    %1770 = vmatpush1.msra.mxu0 0.0
    %1771 = vmatprep.subr.mxu0 0.0
    %1772 = vmatpush1.msra.mxu0 0.0
    %1773 = vmatprep.subr.mxu0 0.0
    %1774 = vmatpush1.msra.mxu0 0.0
    %1775 = vmatprep.subr.mxu0 0.0
    %1776 = vmatpush1.msra.mxu0 0.0
    %1777 = vmatprep.subr.mxu0 0.0
    %1778 = vmatpush1.msra.mxu0 0.0
    %1779 = vmatprep.subr.mxu0 0.0
    %1780 = vmatpush1.msra.mxu0 0.0
    %1781 = vmatprep.subr.mxu0 0.0
    %1782 = vmatpush1.msra.mxu0 0.0
    %1783 = vmatprep.subr.mxu0 %v1764
    %1784 = vmatpush1.msra.mxu0 %v1763
    %1785 = vmatprep.subr.mxu0 %v1762
    %1786 = vmatpush1.msra.mxu0 %v1761
    %1787 = vmatprep.subr.mxu0 %v1760
    %1788 = vmatpush1.msra.mxu0 %v1759
    %1789 = vmatprep.subr.mxu0 %v1758
    %1790 = vmatpush1.msra.mxu0 %v1757
    %1791 = vmatprep.subr.mxu0 %v1756
    %1792 = vmatpush1.msra.mxu0 %v1755
    %1793 = vmatprep.subr.mxu0 %v1754
    %1794 = vmatpush1.msra.mxu0 %v1753
    %1795 = vmatprep.subr.mxu0 %v1752
    %1796 = vmatpush1.msra.mxu0 %v1751
    %1797 = vmatprep.subr.mxu0 %v1750
    %1798 = vmatpush1.msra.mxu0 %v1749
    %1799 = vmatprep.subr.mxu0 0.0
    %1800 = vmatpush2.msra.mxu0 0.0
    %1801 = vmatprep.subr.mxu0 0.0
    %1802 = vmatpush2.msra.mxu0 0.0
    %1803 = vmatprep.subr.mxu0 0.0
    %1804 = vmatpush2.msra.mxu0 0.0
    %1805 = vmatprep.subr.mxu0 0.0
    %1806 = vmatpush2.msra.mxu0 0.0
    %1807 = vmatprep.subr.mxu0 0.0
    %1808 = vmatpush2.msra.mxu0 0.0
    %1809 = vmatprep.subr.mxu0 0.0
    %1810 = vmatpush2.msra.mxu0 0.0
    %1811 = vmatprep.subr.mxu0 0.0
    %1812 = vmatpush2.msra.mxu0 0.0
    %1813 = vmatprep.subr.mxu0 0.0
    %1814 = vmatpush2.msra.mxu0 0.0
    %1815 = vmatprep.subr.mxu0 0.0
    %1816 = vmatpush2.msra.mxu0 0.0
    %1817 = vmatprep.subr.mxu0 0.0
    %1818 = vmatpush2.msra.mxu0 0.0
    %1819 = vmatprep.subr.mxu0 0.0
    %1820 = vmatpush2.msra.mxu0 0.0
    %1821 = vmatprep.subr.mxu0 0.0
    %1822 = vmatpush2.msra.mxu0 0.0
    %1823 = vmatprep.subr.mxu0 0.0
    %1824 = vmatpush2.msra.mxu0 0.0
    %1825 = vmatprep.subr.mxu0 0.0
    %1826 = vmatpush2.msra.mxu0 0.0
    %1827 = vmatprep.subr.mxu0 0.0
    %1828 = vmatpush2.msra.mxu0 0.0
    %1829 = vmatprep.subr.mxu0 0.0
    %1830 = vmatpush2.msra.mxu0 0.0
    %1831 = vmatprep.mubr.f32.mxu0 0.0
    %1832 = vmatmul.mubr.f32.gmra.mxu0 %v1765
    %v1833 = vpop.f32.mrf.mxu0
    %v1834 = vadd.f32 0.0, %v1833
    %v1835 = vpop.f32.mrf.mxu0
    %v1836 = vadd.f32 0.0, %v1835
    %1837 = vdwg.mxu0
    %v1838 = vadd.f32 %v1374, %v1834
    %v1839 = vxor.u32 %v1838, 2147483648
    %v1840 = vmul.f32 %v1839, 1.442695
    %v1841 = vpow.pop %v1840
    %v1842 = vadd.f32 %v1841, 1.0
    %v1843 = vrcp.pop %v1842
    %v1844 = vmul.f32 1.0, %v1843
    %v1845 = vmul.f32 %v1844, %v1836
    %v1847 = vrot.slane %v1374, 2
    %v1849 = vadd.f32 %v1847, %v1845
    %v1850 = vtanh.pop %v1849
    %v1851 = vsub.f32 1.0, %v1844
    %1853 = vrot.lane.b32.xlu0 %v1850, 64
    %v1854 = vpop.permute.xlu0 %1853
    %v1856 = vmul.f32 %v1851, %v1854
    %v1857 = vmul.f32 %v1844, %v1735
    %v1858 = vadd.f32 %v1856, %v1857
    %v1861 = vunpack.c.l.s4 1983009808
    %v1862 = vunpack.c.0.s8 %v1861
    %v1863 = vlaneseq
    %v1864 = vshrl.u32 %v1863, 7
    %v1865 = vsub.s32 %v1862, %v1864
    %v1866 = vrot.slane %v1858, %v1865
    %1867 = vrot.lane.b32.xlu0 %v1866, 64
    %v1868 = vpop.permute.xlu0 %1867
    %s1870 = scalar_lea.vmem [#allocation4], 6
    %1871 = vst.msk [vmem:[%s1870] sm:$0x3] %vm1501, %v1868
    %v1872 = vld [vmem:[%s3] sm:$0xff]
    %v1873 = vld [vmem:[%s3 + $0x8] sm:$0xff]
    %v1874 = vld [vmem:[%s3 + $0x10] sm:$0xff]
    %v1875 = vld [vmem:[%s3 + $0x18] sm:$0xff]
    %v1876 = vld [vmem:[%s3 + $0x20] sm:$0xff]
    %v1877 = vld [vmem:[%s3 + $0x28] sm:$0xff]
    %v1878 = vld [vmem:[%s3 + $0x30] sm:$0xff]
    %v1879 = vld [vmem:[%s3 + $0x38] sm:$0xff]
    %v1880 = vld [vmem:[%s3 + $0x40] sm:$0xff]
    %v1881 = vld [vmem:[%s3 + $0x48] sm:$0xff]
    %v1882 = vld [vmem:[%s3 + $0x50] sm:$0xff]
    %v1883 = vld [vmem:[%s3 + $0x58] sm:$0xff]
    %v1884 = vld [vmem:[%s3 + $0x60] sm:$0xff]
    %v1885 = vld [vmem:[%s3 + $0x68] sm:$0xff]
    %v1886 = vld [vmem:[%s3 + $0x70] sm:$0xff]
    %v1887 = vld [vmem:[%s3 + $0x78] sm:$0xff]
    %v1888 = vsel %vm141, %v1868, 0
    %1890 = vmatprep.subr.mxu0 0.0
    %1891 = vmatpush1.msra.mxu0 0.0
    %1892 = vmatprep.subr.mxu0 0.0
    %1893 = vmatpush1.msra.mxu0 0.0
    %1894 = vmatprep.subr.mxu0 0.0
    %1895 = vmatpush1.msra.mxu0 0.0
    %1896 = vmatprep.subr.mxu0 0.0
    %1897 = vmatpush1.msra.mxu0 0.0
    %1898 = vmatprep.subr.mxu0 0.0
    %1899 = vmatpush1.msra.mxu0 0.0
    %1900 = vmatprep.subr.mxu0 0.0
    %1901 = vmatpush1.msra.mxu0 0.0
    %1902 = vmatprep.subr.mxu0 0.0
    %1903 = vmatpush1.msra.mxu0 0.0
    %1904 = vmatprep.subr.mxu0 0.0
    %1905 = vmatpush1.msra.mxu0 0.0
    %1906 = vmatprep.subr.mxu0 %v1887
    %1907 = vmatpush1.msra.mxu0 %v1886
    %1908 = vmatprep.subr.mxu0 %v1885
    %1909 = vmatpush1.msra.mxu0 %v1884
    %1910 = vmatprep.subr.mxu0 %v1883
    %1911 = vmatpush1.msra.mxu0 %v1882
    %1912 = vmatprep.subr.mxu0 %v1881
    %1913 = vmatpush1.msra.mxu0 %v1880
    %1914 = vmatprep.subr.mxu0 %v1879
    %1915 = vmatpush1.msra.mxu0 %v1878
    %1916 = vmatprep.subr.mxu0 %v1877
    %1917 = vmatpush1.msra.mxu0 %v1876
    %1918 = vmatprep.subr.mxu0 %v1875
    %1919 = vmatpush1.msra.mxu0 %v1874
    %1920 = vmatprep.subr.mxu0 %v1873
    %1921 = vmatpush1.msra.mxu0 %v1872
    %1922 = vmatprep.subr.mxu0 0.0
    %1923 = vmatpush2.msra.mxu0 0.0
    %1924 = vmatprep.subr.mxu0 0.0
    %1925 = vmatpush2.msra.mxu0 0.0
    %1926 = vmatprep.subr.mxu0 0.0
    %1927 = vmatpush2.msra.mxu0 0.0
    %1928 = vmatprep.subr.mxu0 0.0
    %1929 = vmatpush2.msra.mxu0 0.0
    %1930 = vmatprep.subr.mxu0 0.0
    %1931 = vmatpush2.msra.mxu0 0.0
    %1932 = vmatprep.subr.mxu0 0.0
    %1933 = vmatpush2.msra.mxu0 0.0
    %1934 = vmatprep.subr.mxu0 0.0
    %1935 = vmatpush2.msra.mxu0 0.0
    %1936 = vmatprep.subr.mxu0 0.0
    %1937 = vmatpush2.msra.mxu0 0.0
    %1938 = vmatprep.subr.mxu0 0.0
    %1939 = vmatpush2.msra.mxu0 0.0
    %1940 = vmatprep.subr.mxu0 0.0
    %1941 = vmatpush2.msra.mxu0 0.0
    %1942 = vmatprep.subr.mxu0 0.0
    %1943 = vmatpush2.msra.mxu0 0.0
    %1944 = vmatprep.subr.mxu0 0.0
    %1945 = vmatpush2.msra.mxu0 0.0
    %1946 = vmatprep.subr.mxu0 0.0
    %1947 = vmatpush2.msra.mxu0 0.0
    %1948 = vmatprep.subr.mxu0 0.0
    %1949 = vmatpush2.msra.mxu0 0.0
    %1950 = vmatprep.subr.mxu0 0.0
    %1951 = vmatpush2.msra.mxu0 0.0
    %1952 = vmatprep.subr.mxu0 0.0
    %1953 = vmatpush2.msra.mxu0 0.0
    %1954 = vmatprep.mubr.f32.mxu0 0.0
    %1955 = vmatmul.mubr.f32.gmra.mxu0 %v1888
    %v1956 = vpop.f32.mrf.mxu0
    %v1957 = vadd.f32 0.0, %v1956
    %v1958 = vpop.f32.mrf.mxu0
    %v1959 = vadd.f32 0.0, %v1958
    %1960 = vdwg.mxu0
    %v1961 = vadd.f32 %v1375, %v1957
    %v1962 = vxor.u32 %v1961, 2147483648
    %v1963 = vmul.f32 %v1962, 1.442695
    %v1964 = vpow.pop %v1963
    %v1965 = vadd.f32 %v1964, 1.0
    %v1966 = vrcp.pop %v1965
    %v1967 = vmul.f32 1.0, %v1966
    %v1968 = vmul.f32 %v1967, %v1959
    %v1970 = vrot.slane %v1375, 2
    %v1972 = vadd.f32 %v1970, %v1968
    %v1973 = vtanh.pop %v1972
    %v1974 = vsub.f32 1.0, %v1967
    %1976 = vrot.lane.b32.xlu0 %v1973, 64
    %v1977 = vpop.permute.xlu0 %1976
    %v1979 = vmul.f32 %v1974, %v1977
    %v1980 = vmul.f32 %v1967, %v1858
    %v1981 = vadd.f32 %v1979, %v1980
    %v1984 = vunpack.c.l.s4 1983009808
    %v1985 = vunpack.c.0.s8 %v1984
    %v1986 = vlaneseq
    %v1987 = vshrl.u32 %v1986, 7
    %v1988 = vsub.s32 %v1985, %v1987
    %v1989 = vrot.slane %v1981, %v1988
    %1990 = vrot.lane.b32.xlu0 %v1989, 64
    %v1991 = vpop.permute.xlu0 %1990
    %s1993 = scalar_lea.vmem [#allocation4], 8
    %1994 = vst.msk [vmem:[%s1993] sm:$0x3] %vm1501, %v1991
    %v1995 = vld [vmem:[%s3] sm:$0xff]
    %v1996 = vld [vmem:[%s3 + $0x8] sm:$0xff]
    %v1997 = vld [vmem:[%s3 + $0x10] sm:$0xff]
    %v1998 = vld [vmem:[%s3 + $0x18] sm:$0xff]
    %v1999 = vld [vmem:[%s3 + $0x20] sm:$0xff]
    %v2000 = vld [vmem:[%s3 + $0x28] sm:$0xff]
    %v2001 = vld [vmem:[%s3 + $0x30] sm:$0xff]
    %v2002 = vld [vmem:[%s3 + $0x38] sm:$0xff]
    %v2003 = vld [vmem:[%s3 + $0x40] sm:$0xff]
    %v2004 = vld [vmem:[%s3 + $0x48] sm:$0xff]
    %v2005 = vld [vmem:[%s3 + $0x50] sm:$0xff]
    %v2006 = vld [vmem:[%s3 + $0x58] sm:$0xff]
    %v2007 = vld [vmem:[%s3 + $0x60] sm:$0xff]
    %v2008 = vld [vmem:[%s3 + $0x68] sm:$0xff]
    %v2009 = vld [vmem:[%s3 + $0x70] sm:$0xff]
    %v2010 = vld [vmem:[%s3 + $0x78] sm:$0xff]
    %v2011 = vsel %vm141, %v1991, 0
    %2013 = vmatprep.subr.mxu0 0.0
    %2014 = vmatpush1.msra.mxu0 0.0
    %2015 = vmatprep.subr.mxu0 0.0
    %2016 = vmatpush1.msra.mxu0 0.0
    %2017 = vmatprep.subr.mxu0 0.0
    %2018 = vmatpush1.msra.mxu0 0.0
    %2019 = vmatprep.subr.mxu0 0.0
    %2020 = vmatpush1.msra.mxu0 0.0
    %2021 = vmatprep.subr.mxu0 0.0
    %2022 = vmatpush1.msra.mxu0 0.0
    %2023 = vmatprep.subr.mxu0 0.0
    %2024 = vmatpush1.msra.mxu0 0.0
    %2025 = vmatprep.subr.mxu0 0.0
    %2026 = vmatpush1.msra.mxu0 0.0
    %2027 = vmatprep.subr.mxu0 0.0
    %2028 = vmatpush1.msra.mxu0 0.0
    %2029 = vmatprep.subr.mxu0 %v2010
    %2030 = vmatpush1.msra.mxu0 %v2009
    %2031 = vmatprep.subr.mxu0 %v2008
    %2032 = vmatpush1.msra.mxu0 %v2007
    %2033 = vmatprep.subr.mxu0 %v2006
    %2034 = vmatpush1.msra.mxu0 %v2005
    %2035 = vmatprep.subr.mxu0 %v2004
    %2036 = vmatpush1.msra.mxu0 %v2003
    %2037 = vmatprep.subr.mxu0 %v2002
    %2038 = vmatpush1.msra.mxu0 %v2001
    %2039 = vmatprep.subr.mxu0 %v2000
    %2040 = vmatpush1.msra.mxu0 %v1999
    %2041 = vmatprep.subr.mxu0 %v1998
    %2042 = vmatpush1.msra.mxu0 %v1997
    %2043 = vmatprep.subr.mxu0 %v1996
    %2044 = vmatpush1.msra.mxu0 %v1995
    %2045 = vmatprep.subr.mxu0 0.0
    %2046 = vmatpush2.msra.mxu0 0.0
    %2047 = vmatprep.subr.mxu0 0.0
    %2048 = vmatpush2.msra.mxu0 0.0
    %2049 = vmatprep.subr.mxu0 0.0
    %2050 = vmatpush2.msra.mxu0 0.0
    %2051 = vmatprep.subr.mxu0 0.0
    %2052 = vmatpush2.msra.mxu0 0.0
    %2053 = vmatprep.subr.mxu0 0.0
    %2054 = vmatpush2.msra.mxu0 0.0
    %2055 = vmatprep.subr.mxu0 0.0
    %2056 = vmatpush2.msra.mxu0 0.0
    %2057 = vmatprep.subr.mxu0 0.0
    %2058 = vmatpush2.msra.mxu0 0.0
    %2059 = vmatprep.subr.mxu0 0.0
    %2060 = vmatpush2.msra.mxu0 0.0
    %2061 = vmatprep.subr.mxu0 0.0
    %2062 = vmatpush2.msra.mxu0 0.0
    %2063 = vmatprep.subr.mxu0 0.0
    %2064 = vmatpush2.msra.mxu0 0.0
    %2065 = vmatprep.subr.mxu0 0.0
    %2066 = vmatpush2.msra.mxu0 0.0
    %2067 = vmatprep.subr.mxu0 0.0
    %2068 = vmatpush2.msra.mxu0 0.0
    %2069 = vmatprep.subr.mxu0 0.0
    %2070 = vmatpush2.msra.mxu0 0.0
    %2071 = vmatprep.subr.mxu0 0.0
    %2072 = vmatpush2.msra.mxu0 0.0
    %2073 = vmatprep.subr.mxu0 0.0
    %2074 = vmatpush2.msra.mxu0 0.0
    %2075 = vmatprep.subr.mxu0 0.0
    %2076 = vmatpush2.msra.mxu0 0.0
    %2077 = vmatprep.mubr.f32.mxu0 0.0
    %2078 = vmatmul.mubr.f32.gmra.mxu0 %v2011
    %v2079 = vpop.f32.mrf.mxu0
    %v2080 = vadd.f32 0.0, %v2079
    %v2081 = vpop.f32.mrf.mxu0
    %v2082 = vadd.f32 0.0, %v2081
    %2083 = vdwg.mxu0
    %v2084 = vadd.f32 %v1376, %v2080
    %v2085 = vxor.u32 %v2084, 2147483648
    %v2086 = vmul.f32 %v2085, 1.442695
    %v2087 = vpow.pop %v2086
    %v2088 = vadd.f32 %v2087, 1.0
    %v2089 = vrcp.pop %v2088
    %v2090 = vmul.f32 1.0, %v2089
    %v2091 = vmul.f32 %v2090, %v2082
    %v2093 = vrot.slane %v1376, 2
    %v2095 = vadd.f32 %v2093, %v2091
    %v2096 = vtanh.pop %v2095
    %v2097 = vsub.f32 1.0, %v2090
    %2099 = vrot.lane.b32.xlu0 %v2096, 64
    %v2100 = vpop.permute.xlu0 %2099
    %v2102 = vmul.f32 %v2097, %v2100
    %v2103 = vmul.f32 %v2090, %v1981
    %v2104 = vadd.f32 %v2102, %v2103
    %v2107 = vunpack.c.l.s4 1983009808
    %v2108 = vunpack.c.0.s8 %v2107
    %v2109 = vlaneseq
    %v2110 = vshrl.u32 %v2109, 7
    %v2111 = vsub.s32 %v2108, %v2110
    %v2112 = vrot.slane %v2104, %v2111
    %2113 = vrot.lane.b32.xlu0 %v2112, 64
    %v2114 = vpop.permute.xlu0 %2113
    %s2116 = scalar_lea.vmem [#allocation4], 10
    %2117 = vst.msk [vmem:[%s2116] sm:$0x3] %vm1501, %v2114
    %v2118 = vld [vmem:[%s3] sm:$0xff]
    %v2119 = vld [vmem:[%s3 + $0x8] sm:$0xff]
    %v2120 = vld [vmem:[%s3 + $0x10] sm:$0xff]
    %v2121 = vld [vmem:[%s3 + $0x18] sm:$0xff]
    %v2122 = vld [vmem:[%s3 + $0x20] sm:$0xff]
    %v2123 = vld [vmem:[%s3 + $0x28] sm:$0xff]
    %v2124 = vld [vmem:[%s3 + $0x30] sm:$0xff]
    %v2125 = vld [vmem:[%s3 + $0x38] sm:$0xff]
    %v2126 = vld [vmem:[%s3 + $0x40] sm:$0xff]
    %v2127 = vld [vmem:[%s3 + $0x48] sm:$0xff]
    %v2128 = vld [vmem:[%s3 + $0x50] sm:$0xff]
    %v2129 = vld [vmem:[%s3 + $0x58] sm:$0xff]
    %v2130 = vld [vmem:[%s3 + $0x60] sm:$0xff]
    %v2131 = vld [vmem:[%s3 + $0x68] sm:$0xff]
    %v2132 = vld [vmem:[%s3 + $0x70] sm:$0xff]
    %v2133 = vld [vmem:[%s3 + $0x78] sm:$0xff]
    %v2134 = vsel %vm141, %v2114, 0
    %2136 = vmatprep.subr.mxu0 0.0
    %2137 = vmatpush1.msra.mxu0 0.0
    %2138 = vmatprep.subr.mxu0 0.0
    %2139 = vmatpush1.msra.mxu0 0.0
    %2140 = vmatprep.subr.mxu0 0.0
    %2141 = vmatpush1.msra.mxu0 0.0
    %2142 = vmatprep.subr.mxu0 0.0
    %2143 = vmatpush1.msra.mxu0 0.0
    %2144 = vmatprep.subr.mxu0 0.0
    %2145 = vmatpush1.msra.mxu0 0.0
    %2146 = vmatprep.subr.mxu0 0.0
    %2147 = vmatpush1.msra.mxu0 0.0
    %2148 = vmatprep.subr.mxu0 0.0
    %2149 = vmatpush1.msra.mxu0 0.0
    %2150 = vmatprep.subr.mxu0 0.0
    %2151 = vmatpush1.msra.mxu0 0.0
    %2152 = vmatprep.subr.mxu0 %v2133
    %2153 = vmatpush1.msra.mxu0 %v2132
    %2154 = vmatprep.subr.mxu0 %v2131
    %2155 = vmatpush1.msra.mxu0 %v2130
    %2156 = vmatprep.subr.mxu0 %v2129
    %2157 = vmatpush1.msra.mxu0 %v2128
    %2158 = vmatprep.subr.mxu0 %v2127
    %2159 = vmatpush1.msra.mxu0 %v2126
    %2160 = vmatprep.subr.mxu0 %v2125
    %2161 = vmatpush1.msra.mxu0 %v2124
    %2162 = vmatprep.subr.mxu0 %v2123
    %2163 = vmatpush1.msra.mxu0 %v2122
    %2164 = vmatprep.subr.mxu0 %v2121
    %2165 = vmatpush1.msra.mxu0 %v2120
    %2166 = vmatprep.subr.mxu0 %v2119
    %2167 = vmatpush1.msra.mxu0 %v2118
    %2168 = vmatprep.subr.mxu0 0.0
    %2169 = vmatpush2.msra.mxu0 0.0
    %2170 = vmatprep.subr.mxu0 0.0
    %2171 = vmatpush2.msra.mxu0 0.0
    %2172 = vmatprep.subr.mxu0 0.0
    %2173 = vmatpush2.msra.mxu0 0.0
    %2174 = vmatprep.subr.mxu0 0.0
    %2175 = vmatpush2.msra.mxu0 0.0
    %2176 = vmatprep.subr.mxu0 0.0
    %2177 = vmatpush2.msra.mxu0 0.0
    %2178 = vmatprep.subr.mxu0 0.0
    %2179 = vmatpush2.msra.mxu0 0.0
    %2180 = vmatprep.subr.mxu0 0.0
    %2181 = vmatpush2.msra.mxu0 0.0
    %2182 = vmatprep.subr.mxu0 0.0
    %2183 = vmatpush2.msra.mxu0 0.0
    %2184 = vmatprep.subr.mxu0 0.0
    %2185 = vmatpush2.msra.mxu0 0.0
    %2186 = vmatprep.subr.mxu0 0.0
    %2187 = vmatpush2.msra.mxu0 0.0
    %2188 = vmatprep.subr.mxu0 0.0
    %2189 = vmatpush2.msra.mxu0 0.0
    %2190 = vmatprep.subr.mxu0 0.0
    %2191 = vmatpush2.msra.mxu0 0.0
    %2192 = vmatprep.subr.mxu0 0.0
    %2193 = vmatpush2.msra.mxu0 0.0
    %2194 = vmatprep.subr.mxu0 0.0
    %2195 = vmatpush2.msra.mxu0 0.0
    %2196 = vmatprep.subr.mxu0 0.0
    %2197 = vmatpush2.msra.mxu0 0.0
    %2198 = vmatprep.subr.mxu0 0.0
    %2199 = vmatpush2.msra.mxu0 0.0
    %2200 = vmatprep.mubr.f32.mxu0 0.0
    %2201 = vmatmul.mubr.f32.gmra.mxu0 %v2134
    %v2202 = vpop.f32.mrf.mxu0
    %v2203 = vadd.f32 0.0, %v2202
    %v2204 = vpop.f32.mrf.mxu0
    %v2205 = vadd.f32 0.0, %v2204
    %2206 = vdwg.mxu0
    %v2207 = vadd.f32 %v1377, %v2203
    %v2208 = vxor.u32 %v2207, 2147483648
    %v2209 = vmul.f32 %v2208, 1.442695
    %v2210 = vpow.pop %v2209
    %v2211 = vadd.f32 %v2210, 1.0
    %v2212 = vrcp.pop %v2211
    %v2213 = vmul.f32 1.0, %v2212
    %v2214 = vmul.f32 %v2213, %v2205
    %v2216 = vrot.slane %v1377, 2
    %v2218 = vadd.f32 %v2216, %v2214
    %v2219 = vtanh.pop %v2218
    %v2220 = vsub.f32 1.0, %v2213
    %2222 = vrot.lane.b32.xlu0 %v2219, 64
    %v2223 = vpop.permute.xlu0 %2222
    %v2225 = vmul.f32 %v2220, %v2223
    %v2226 = vmul.f32 %v2213, %v2104
    %v2227 = vadd.f32 %v2225, %v2226
    %v2230 = vunpack.c.l.s4 1983009808
    %v2231 = vunpack.c.0.s8 %v2230
    %v2232 = vlaneseq
    %v2233 = vshrl.u32 %v2232, 7
    %v2234 = vsub.s32 %v2231, %v2233
    %v2235 = vrot.slane %v2227, %v2234
    %2236 = vrot.lane.b32.xlu0 %v2235, 64
    %v2237 = vpop.permute.xlu0 %2236
    %s2239 = scalar_lea.vmem [#allocation4], 12
    %2240 = vst.msk [vmem:[%s2239] sm:$0x3] %vm1501, %v2237
    %v2241 = vld [vmem:[%s3] sm:$0xff]
    %v2242 = vld [vmem:[%s3 + $0x8] sm:$0xff]
    %v2243 = vld [vmem:[%s3 + $0x10] sm:$0xff]
    %v2244 = vld [vmem:[%s3 + $0x18] sm:$0xff]
    %v2245 = vld [vmem:[%s3 + $0x20] sm:$0xff]
    %v2246 = vld [vmem:[%s3 + $0x28] sm:$0xff]
    %v2247 = vld [vmem:[%s3 + $0x30] sm:$0xff]
    %v2248 = vld [vmem:[%s3 + $0x38] sm:$0xff]
    %v2249 = vld [vmem:[%s3 + $0x40] sm:$0xff]
    %v2250 = vld [vmem:[%s3 + $0x48] sm:$0xff]
    %v2251 = vld [vmem:[%s3 + $0x50] sm:$0xff]
    %v2252 = vld [vmem:[%s3 + $0x58] sm:$0xff]
    %v2253 = vld [vmem:[%s3 + $0x60] sm:$0xff]
    %v2254 = vld [vmem:[%s3 + $0x68] sm:$0xff]
    %v2255 = vld [vmem:[%s3 + $0x70] sm:$0xff]
    %v2256 = vld [vmem:[%s3 + $0x78] sm:$0xff]
    %v2257 = vsel %vm141, %v2237, 0
    %2259 = vmatprep.subr.mxu0 0.0
    %2260 = vmatpush1.msra.mxu0 0.0
    %2261 = vmatprep.subr.mxu0 0.0
    %2262 = vmatpush1.msra.mxu0 0.0
    %2263 = vmatprep.subr.mxu0 0.0
    %2264 = vmatpush1.msra.mxu0 0.0
    %2265 = vmatprep.subr.mxu0 0.0
    %2266 = vmatpush1.msra.mxu0 0.0
    %2267 = vmatprep.subr.mxu0 0.0
    %2268 = vmatpush1.msra.mxu0 0.0
    %2269 = vmatprep.subr.mxu0 0.0
    %2270 = vmatpush1.msra.mxu0 0.0
    %2271 = vmatprep.subr.mxu0 0.0
    %2272 = vmatpush1.msra.mxu0 0.0
    %2273 = vmatprep.subr.mxu0 0.0
    %2274 = vmatpush1.msra.mxu0 0.0
    %2275 = vmatprep.subr.mxu0 %v2256
    %2276 = vmatpush1.msra.mxu0 %v2255
    %2277 = vmatprep.subr.mxu0 %v2254
    %2278 = vmatpush1.msra.mxu0 %v2253
    %2279 = vmatprep.subr.mxu0 %v2252
    %2280 = vmatpush1.msra.mxu0 %v2251
    %2281 = vmatprep.subr.mxu0 %v2250
    %2282 = vmatpush1.msra.mxu0 %v2249
    %2283 = vmatprep.subr.mxu0 %v2248
    %2284 = vmatpush1.msra.mxu0 %v2247
    %2285 = vmatprep.subr.mxu0 %v2246
    %2286 = vmatpush1.msra.mxu0 %v2245
    %2287 = vmatprep.subr.mxu0 %v2244
    %2288 = vmatpush1.msra.mxu0 %v2243
    %2289 = vmatprep.subr.mxu0 %v2242
    %2290 = vmatpush1.msra.mxu0 %v2241
    %2291 = vmatprep.subr.mxu0 0.0
    %2292 = vmatpush2.msra.mxu0 0.0
    %2293 = vmatprep.subr.mxu0 0.0
    %2294 = vmatpush2.msra.mxu0 0.0
    %2295 = vmatprep.subr.mxu0 0.0
    %2296 = vmatpush2.msra.mxu0 0.0
    %2297 = vmatprep.subr.mxu0 0.0
    %2298 = vmatpush2.msra.mxu0 0.0
    %2299 = vmatprep.subr.mxu0 0.0
    %2300 = vmatpush2.msra.mxu0 0.0
    %2301 = vmatprep.subr.mxu0 0.0
    %2302 = vmatpush2.msra.mxu0 0.0
    %2303 = vmatprep.subr.mxu0 0.0
    %2304 = vmatpush2.msra.mxu0 0.0
    %2305 = vmatprep.subr.mxu0 0.0
    %2306 = vmatpush2.msra.mxu0 0.0
    %2307 = vmatprep.subr.mxu0 0.0
    %2308 = vmatpush2.msra.mxu0 0.0
    %2309 = vmatprep.subr.mxu0 0.0
    %2310 = vmatpush2.msra.mxu0 0.0
    %2311 = vmatprep.subr.mxu0 0.0
    %2312 = vmatpush2.msra.mxu0 0.0
    %2313 = vmatprep.subr.mxu0 0.0
    %2314 = vmatpush2.msra.mxu0 0.0
    %2315 = vmatprep.subr.mxu0 0.0
    %2316 = vmatpush2.msra.mxu0 0.0
    %2317 = vmatprep.subr.mxu0 0.0
    %2318 = vmatpush2.msra.mxu0 0.0
    %2319 = vmatprep.subr.mxu0 0.0
    %2320 = vmatpush2.msra.mxu0 0.0
    %2321 = vmatprep.subr.mxu0 0.0
    %2322 = vmatpush2.msra.mxu0 0.0
    %2323 = vmatprep.mubr.f32.mxu0 0.0
    %2324 = vmatmul.mubr.f32.gmra.mxu0 %v2257
    %v2325 = vpop.f32.mrf.mxu0
    %v2326 = vadd.f32 0.0, %v2325
    %v2327 = vpop.f32.mrf.mxu0
    %v2328 = vadd.f32 0.0, %v2327
    %2329 = vdwg.mxu0
    %v2330 = vadd.f32 %v1378, %v2326
    %v2331 = vxor.u32 %v2330, 2147483648
    %v2332 = vmul.f32 %v2331, 1.442695
    %v2333 = vpow.pop %v2332
    %v2334 = vadd.f32 %v2333, 1.0
    %v2335 = vrcp.pop %v2334
    %v2336 = vmul.f32 1.0, %v2335
    %v2337 = vmul.f32 %v2336, %v2328
    %v2339 = vrot.slane %v1378, 2
    %v2341 = vadd.f32 %v2339, %v2337
    %v2342 = vtanh.pop %v2341
    %v2343 = vsub.f32 1.0, %v2336
    %2345 = vrot.lane.b32.xlu0 %v2342, 64
    %v2346 = vpop.permute.xlu0 %2345
    %v2348 = vmul.f32 %v2343, %v2346
    %v2349 = vmul.f32 %v2336, %v2227
    %v2350 = vadd.f32 %v2348, %v2349
    %v2353 = vunpack.c.l.s4 1983009808
    %v2354 = vunpack.c.0.s8 %v2353
    %v2355 = vlaneseq
    %v2356 = vshrl.u32 %v2355, 7
    %v2357 = vsub.s32 %v2354, %v2356
    %v2358 = vrot.slane %v2350, %v2357
    %2359 = vrot.lane.b32.xlu0 %v2358, 64
    %v2360 = vpop.permute.xlu0 %2359
    %s2362 = scalar_lea.vmem [#allocation4], 14
    %2363 = vst.msk [vmem:[%s2362] sm:$0x3] %vm1501, %v2360
    %v2364 = vld [vmem:[#allocation4] sm:$0x3]
    %v2365 = vld [vmem:[#allocation4 + $0x2] sm:$0x3]
    %v2366 = vld [vmem:[#allocation4 + $0x4] sm:$0x3]
    %v2367 = vld [vmem:[#allocation4 + $0x6] sm:$0x3]
    %v2368 = vld [vmem:[#allocation4 + $0x8] sm:$0x3]
    %v2369 = vld [vmem:[#allocation4 + $0xa] sm:$0x3]
    %v2370 = vld [vmem:[#allocation4 + $0xc] sm:$0x3]
    %v2371 = vld [vmem:[#allocation4 + $0xe] sm:$0x3]
    %s2372 = sld [smem:[#allocation5]]
    %s2373 = sld [smem:[#allocation5 + $0x1]]
    %s2374 = sld [smem:[#allocation5 + $0x2]]
    %v2375 = vstv %s2372
    %v2376 = vmul.f32 %v2375, %v1161
    %v2377 = vmul.f32 %v2375, %v1169
    %v2378 = vmul.f32 %v2375, %v1162
    %v2379 = vmul.f32 %v2375, %v1170
    %v2380 = vmul.f32 %v2375, %v1163
    %v2381 = vmul.f32 %v2375, %v1171
    %v2382 = vmul.f32 %v2375, %v1164
    %v2383 = vmul.f32 %v2375, %v1172
    %v2384 = vstv %s2373
    %v2385 = vmul.f32 %v2384, %v1161
    %v2386 = vmul.f32 %v2384, %v1169
    %v2387 = vmul.f32 %v2384, %v1162
    %v2388 = vmul.f32 %v2384, %v1170
    %v2389 = vmul.f32 %v2384, %v1163
    %v2390 = vmul.f32 %v2384, %v1171
    %v2391 = vmul.f32 %v2384, %v1164
    %v2392 = vmul.f32 %v2384, %v1172
    %v2401 = vrot.slane %v2385, 6
    %v2402 = vrot.slane %v2401, 4
    %v2403 = vrot.slane %v2386, 6
    %v2404 = vrot.slane %v2403, 4
    %v2405 = vrot.slane %v2387, 6
    %v2406 = vrot.slane %v2405, 4
    %v2407 = vrot.slane %v2388, 6
    %v2408 = vrot.slane %v2407, 4
    %v2409 = vrot.slane %v2389, 6
    %v2410 = vrot.slane %v2409, 4
    %v2411 = vrot.slane %v2390, 6
    %v2412 = vrot.slane %v2411, 4
    %v2413 = vrot.slane %v2391, 6
    %v2414 = vrot.slane %v2413, 4
    %v2415 = vrot.slane %v2392, 6
    %v2416 = vrot.slane %v2415, 4
    %v2425 = vadd.f32 %v2376, %v2402
    %v2426 = vadd.f32 %v2377, %v2404
    %v2427 = vadd.f32 %v2378, %v2406
    %v2428 = vadd.f32 %v2379, %v2408
    %v2429 = vadd.f32 %v2380, %v2410
    %v2430 = vadd.f32 %v2381, %v2412
    %v2431 = vadd.f32 %v2382, %v2414
    %v2432 = vadd.f32 %v2383, %v2416
    %v2433 = vstv %s2374
    %v2434 = vmul.f32 %v2433, %v2364
    %v2435 = vmul.f32 %v2433, %v2365
    %v2436 = vmul.f32 %v2433, %v2366
    %v2437 = vmul.f32 %v2433, %v2367
    %v2438 = vmul.f32 %v2433, %v2368
    %v2439 = vmul.f32 %v2433, %v2369
    %v2440 = vmul.f32 %v2433, %v2370
    %v2441 = vmul.f32 %v2433, %v2371
    %v2442 = vadd.f32 %v2425, %v2434
    %v2443 = vadd.f32 %v2426, %v2435
    %v2444 = vadd.f32 %v2427, %v2436
    %v2445 = vadd.f32 %v2428, %v2437
    %v2446 = vadd.f32 %v2429, %v2438
    %v2447 = vadd.f32 %v2430, %v2439
    %v2448 = vadd.f32 %v2431, %v2440
    %v2449 = vadd.f32 %v2432, %v2441
    %v2450 = vld [vmem:[%s17] sm:$0xff]
    %v2451 = vld [vmem:[%s17 + $0x8] sm:$0xff]
    %v2452 = vld [vmem:[%s17 + $0x10] sm:$0xff]
    %v2453 = vld [vmem:[%s17 + $0x18] sm:$0xff]
    %v2454 = vld [vmem:[%s17 + $0x20] sm:$0xff]
    %v2455 = vld [vmem:[%s17 + $0x28] sm:$0xff]
    %v2456 = vld [vmem:[%s17 + $0x30] sm:$0xff]
    %v2457 = vld [vmem:[%s17 + $0x38] sm:$0xff]
    %v2458 = vld [vmem:[%s18] sm:$0x1]
    %v2460 = vlaneseq
    %v2461 = vshrl.u32 %v2460, 7
    %v2462 = vsub.s32 0, %v2461
    %v2463 = vrot.slane %v2458, %v2462
    %v2473 = vcombine.low %v2442, %v2443
    %v2474 = vcombine.low %v2444, %v2445
    %v2476 = vunpack.c.l.s4 1983009808
    %v2477 = vunpack.c.0.s8 %v2476
    %v2478 = vlaneseq
    %v2479 = vshrl.u32 %v2478, 7
    %v2480 = vsub.s32 %v2477, %v2479
    %v2481 = vrot.slane %v2473, %v2480
    %v2483 = vunpack.c.l.s4 1983009808
    %v2484 = vunpack.c.0.s8 %v2483
    %v2485 = vlaneseq
    %v2486 = vshrl.u32 %v2485, 7
    %v2487 = vsub.s32 %v2484, %v2486
    %v2488 = vrot.slane %v2474, %v2487
    %v2489 = vcombine.low %v2481, %v2488
    %v2490 = vcombine.low %v2446, %v2447
    %v2491 = vcombine.low %v2448, %v2449
    %v2493 = vunpack.c.l.s4 1983009808
    %v2494 = vunpack.c.0.s8 %v2493
    %v2495 = vlaneseq
    %v2496 = vshrl.u32 %v2495, 7
    %v2497 = vsub.s32 %v2494, %v2496
    %v2498 = vrot.slane %v2490, %v2497
    %v2500 = vunpack.c.l.s4 1983009808
    %v2501 = vunpack.c.0.s8 %v2500
    %v2502 = vlaneseq
    %v2503 = vshrl.u32 %v2502, 7
    %v2504 = vsub.s32 %v2501, %v2503
    %v2505 = vrot.slane %v2491, %v2504
    %v2506 = vcombine.low %v2498, %v2505
    %v2507 = vsel %vm141, %v2489, 0
    %v2509 = vsel %vm141, %v2506, 0
    %2511 = vmatprep.subr.mxu0 0.0
    %2512 = vmatpush1.msra.mxu0 0.0
    %2513 = vmatprep.subr.mxu0 0.0
    %2514 = vmatpush1.msra.mxu0 0.0
    %2515 = vmatprep.subr.mxu0 0.0
    %2516 = vmatpush1.msra.mxu0 0.0
    %2517 = vmatprep.subr.mxu0 0.0
    %2518 = vmatpush1.msra.mxu0 0.0
    %2519 = vmatprep.subr.mxu0 0.0
    %2520 = vmatpush1.msra.mxu0 0.0
    %2521 = vmatprep.subr.mxu0 0.0
    %2522 = vmatpush1.msra.mxu0 0.0
    %2523 = vmatprep.subr.mxu0 0.0
    %2524 = vmatpush1.msra.mxu0 0.0
    %2525 = vmatprep.subr.mxu0 0.0
    %2526 = vmatpush1.msra.mxu0 0.0
    %2527 = vmatprep.subr.mxu0 0.0
    %2528 = vmatpush1.msra.mxu0 %v2457
    %2529 = vmatprep.subr.mxu0 0.0
    %2530 = vmatpush1.msra.mxu0 %v2456
    %2531 = vmatprep.subr.mxu0 0.0
    %2532 = vmatpush1.msra.mxu0 %v2455
    %2533 = vmatprep.subr.mxu0 0.0
    %2534 = vmatpush1.msra.mxu0 %v2454
    %2535 = vmatprep.subr.mxu0 0.0
    %2536 = vmatpush1.msra.mxu0 %v2453
    %2537 = vmatprep.subr.mxu0 0.0
    %2538 = vmatpush1.msra.mxu0 %v2452
    %2539 = vmatprep.subr.mxu0 0.0
    %2540 = vmatpush1.msra.mxu0 %v2451
    %2541 = vmatprep.subr.mxu0 0.0
    %2542 = vmatpush1.msra.mxu0 %v2450
    %2543 = vmatprep.subr.mxu0 0.0
    %2544 = vmatpush2.msra.mxu0 0.0
    %2545 = vmatprep.subr.mxu0 0.0
    %2546 = vmatpush2.msra.mxu0 0.0
    %2547 = vmatprep.subr.mxu0 0.0
    %2548 = vmatpush2.msra.mxu0 0.0
    %2549 = vmatprep.subr.mxu0 0.0
    %2550 = vmatpush2.msra.mxu0 0.0
    %2551 = vmatprep.subr.mxu0 0.0
    %2552 = vmatpush2.msra.mxu0 0.0
    %2553 = vmatprep.subr.mxu0 0.0
    %2554 = vmatpush2.msra.mxu0 0.0
    %2555 = vmatprep.subr.mxu0 0.0
    %2556 = vmatpush2.msra.mxu0 0.0
    %2557 = vmatprep.subr.mxu0 0.0
    %2558 = vmatpush2.msra.mxu0 0.0
    %2559 = vmatprep.subr.mxu0 0.0
    %2560 = vmatpush2.msra.mxu0 0.0
    %2561 = vmatprep.subr.mxu0 0.0
    %2562 = vmatpush2.msra.mxu0 0.0
    %2563 = vmatprep.subr.mxu0 0.0
    %2564 = vmatpush2.msra.mxu0 0.0
    %2565 = vmatprep.subr.mxu0 0.0
    %2566 = vmatpush2.msra.mxu0 0.0
    %2567 = vmatprep.subr.mxu0 0.0
    %2568 = vmatpush2.msra.mxu0 0.0
    %2569 = vmatprep.subr.mxu0 0.0
    %2570 = vmatpush2.msra.mxu0 0.0
    %2571 = vmatprep.subr.mxu0 0.0
    %2572 = vmatpush2.msra.mxu0 0.0
    %2573 = vmatprep.subr.mxu0 0.0
    %2574 = vmatpush2.msra.mxu0 0.0
    %2575 = vmatprep.mubr.f32.mxu0 0.0
    %2576 = vmatmul.mubr.f32.gmra.mxu0 %v2507
    %v2577 = vpop.f32.mrf.mxu0
    %v2578 = vadd.f32 %v2463, %v2577
    %v2579 = vpop.f32.mrf.mxu0
    %2580 = vmatprep.mubr.f32.mxu0 0.0
    %2581 = vmatmul.mubr.f32.gmra.mxu0 %v2509
    %v2582 = vpop.f32.mrf.mxu0
    %v2583 = vadd.f32 %v2463, %v2582
    %v2584 = vpop.f32.mrf.mxu0
    %2585 = vdwg.mxu0
    %vm2586 = vcmask 261120
    %2587 = vst.msk [vmem:[#allocation13] sm:$0xff] %vm2586, %v2578
    %2588 = vst.msk [vmem:[#allocation13 + $0x8] sm:$0xff] %vm2586, %v2583
    // Predicated region
    $region94: #{tpu_custom_call.1} parent=1 // pred_check
      _
    $region95: #{tpu_custom_call.1} parent=1 // pred_check_branch
      %2590 = sbr.rel (0) target = $region97
    $region96: #{tpu_custom_call.1} parent=1 // pred_region
      %s2592 = ssub.s32 256, 256
      %2593 = vsyncadd [#allocation7], %s2592
      %s2594 = sshll.u32 [#allocation13], 4
      %s2595 = int_to_ptr.vmem [resolvable:$true] %s2594
      %2600 = dma.vmem_to_hbm [thread:$0]  %s2595, 256, %s19, [#allocation7], 128, 128, 8
    $region97: #{tpu_custom_call.1} parent=1 // pred_fallthru
      _
    // Predicated region
    $region98: #{tpu_custom_call.1} parent=1 // pred_check
      _
    $region99: #{tpu_custom_call.1} parent=1 // pred_check_branch
      %2602 = sbr.rel (0) target = $region101
    $region100: #{tpu_custom_call.1} parent=1 // pred_region
      %2603 = dma.done [#allocation7], 256
    $region101: #{tpu_custom_call.1} parent=1 // pred_fallthru
      _
    %2604 = vsyncpa [#allocation6], 1
    %2605 = vsyncpa [#allocation11], 1
    %2606 = vsyncpa [#allocation7], 1
    %2607 = vsyncpa [#allocation8], 1

</llo_original>
